<compile_context>
chip_gen: v7x
topology: tpu7x:2x2x1
jax: 0.10.0
libtpu: 0.0.40
codegen_flags: <defaults>
</compile_context>

<pallas_src>
import functools

import jax
import jax.numpy as jnp
import numpy as np
from jax.experimental import pallas as pl
from jax.experimental.pallas import tpu as pltpu

BN_EPS = 1e-5


def dw_kernel(x_ref, wdw_ref, s1_ref, t1_ref, wpw_ref, s2_ref, t2_ref, o_ref,
              *, stride):
    """One batch tile: depthwise 3x3 -> BN1 -> ReLU6 -> 1x1 conv -> BN2.

    x_ref:   (TB, s*s, PH, PW, C_in)   space-to-depth phases of the padded input
    wdw_ref: (9, C_in)                 depthwise taps, row index = kh*3 + kw
    s*_ref / t*_ref: (1, C)            folded BN scale / shift
    wpw_ref: (C_in, C_out)             pointwise weight (x @ W)
    o_ref:   (TB, H_out, W_out, C_out) NHWC output tile
    """
    tb, h_out, w_out, c_out = o_ref.shape
    c_in = wdw_ref.shape[1]
    s = stride

    wdw = wdw_ref[...].astype(jnp.float32)                       # (9, C_in)

    # ---- depthwise 3x3 conv: 9 VPU multiply-accumulates over contiguous taps
    acc = jnp.zeros((tb, h_out, w_out, c_in), jnp.float32)
    for kh in range(3):
        for kw in range(3):
            phase = (kh % s) * s + (kw % s)
            tap = x_ref[:, phase, pl.ds(kh // s, h_out), pl.ds(kw // s, w_out), :]
            acc = acc + tap.astype(jnp.float32) * wdw[kh * 3 + kw]

    # ---- BN1 (folded per-channel scale/shift) + ReLU6 -----------------------
    h = acc * s1_ref[...] + t1_ref[...]
    h = jnp.clip(h, 0.0, 6.0)

    # ---- pointwise 1x1 conv on the MXU: (TB*H*W, C_in) @ (C_in, C_out) ------
    h2 = jnp.dot(h.reshape(tb * h_out * w_out, c_in).astype(wpw_ref.dtype),
                 wpw_ref[...],
                 preferred_element_type=jnp.float32)

    # ---- BN2 (folded per-channel scale/shift) -------------------------------
    out = h2 * s2_ref[...] + t2_ref[...]
    o_ref[...] = out.reshape(tb, h_out, w_out, c_out).astype(o_ref.dtype)


def dw_forward(x, params, *, stride, block_b=8):
    """DW block forward. x: (B, C_in, H, W) NCHW. Returns (B, C_out, H_out, W_out)."""
    if stride not in (1, 2):
        raise ValueError(f"stride should be 1 or 2 instead of {stride}")
    B, c_in, H, W = x.shape
    w_dw = params["dw_weight"]                       # (C_in, 1, 3, 3), no bias
    w_pw = params["pw_weight"]                       # (C_out, C_in, 1, 1), no bias
    c_out = w_pw.shape[0]
    s = stride
    h_out = (H - 1) // s + 1
    w_out = (W - 1) // s + 1

    # -- layout plumbing (XLA): NCHW -> NHWC, spatial zero-pad(1), phase split -
    xh = jnp.transpose(x, (0, 2, 3, 1))              # (B, H, W, C_in)
    xp = jnp.pad(xh, ((0, 0), (1, 1), (1, 1), (0, 0)))
    ph = h_out + 2 // s
    pw = w_out + 2 // s
    phases = []
    for a in range(s):
        for b in range(s):
            p = xp[:, a::s, b::s, :][:, :ph, :pw, :]
            dh, dw_ = ph - p.shape[1], pw - p.shape[2]
            if dh or dw_:
                p = jnp.pad(p, ((0, 0), (0, dh), (0, dw_), (0, 0)))
            phases.append(p)
    xph = jnp.stack(phases, axis=1)                  # (B, s*s, ph, pw, C_in)

    # -- fold eval-mode BatchNorm2d into per-channel scale & shift ------------
    # TODO(synk): these are running-stat (inference) semantics, not batch stats.
    sc1 = params["bn1_gamma"] * jax.lax.rsqrt(params["bn1_var"] + BN_EPS)
    sh1 = params["bn1_beta"] - params["bn1_mean"] * sc1
    sc2 = params["bn2_gamma"] * jax.lax.rsqrt(params["bn2_var"] + BN_EPS)
    sh2 = params["bn2_beta"] - params["bn2_mean"] * sc2
    sc1, sh1 = sc1.reshape(1, c_in), sh1.reshape(1, c_in)
    sc2, sh2 = sc2.reshape(1, c_out), sh2.reshape(1, c_out)

    # -- weights in kernel layout ----------------------------------------------
    wdw9 = jnp.transpose(w_dw.reshape(c_in, 9), (1, 0))        # (9, C_in)
    wpwm = jnp.transpose(w_pw.reshape(c_out, c_in), (1, 0))    # (C_in, C_out)

    tb = max(1, min(block_b, B))
    grid = (pl.cdiv(B, tb),)     # ragged last block is handled by masked writes

    def const_spec(shape):
        return pl.BlockSpec(shape, lambda i: (0,) * len(shape))

    x_spec = pl.BlockSpec((tb, s * s, ph, pw, c_in), lambda i: (i, 0, 0, 0, 0))
    out_spec = pl.BlockSpec((tb, h_out, w_out, c_out), lambda i: (i, 0, 0, 0))

    # VMEM budget with headroom, capped below v7x's 64 MiB physical VMEM.
    itm = 4
    x_blk = tb * s * s * ph * pw * c_in * itm
    o_blk = tb * h_out * w_out * c_out * itm
    acc_blk = tb * h_out * w_out * c_in * itm
    w_tot = (9 * c_in + c_in * c_out + 2 * c_in + 2 * c_out) * itm
    need = 2 * (x_blk + o_blk) + 2 * w_tot + 2 * acc_blk + (4 << 20)
    vmem_limit = int(min(48 * (1 << 20), max(need, 16 * (1 << 20))))

    flops = (2 * B * h_out * w_out * (9 * c_in + c_in * c_out)
             + 4 * B * h_out * w_out * (c_in + c_out))
    bytes_accessed = int((xph.size + B * h_out * w_out * c_out) * itm + w_tot)

    out_nhwc = pl.pallas_call(
        functools.partial(dw_kernel, stride=s),
        out_shape=jax.ShapeDtypeStruct((B, h_out, w_out, c_out), x.dtype),
        grid=grid,
        in_specs=[x_spec,
                  const_spec((9, c_in)),
                  const_spec((1, c_in)), const_spec((1, c_in)),
                  const_spec((c_in, c_out)),
                  const_spec((1, c_out)), const_spec((1, c_out))],
        out_specs=out_spec,
        compiler_params=pltpu.CompilerParams(
            dimension_semantics=("parallel",),
            vmem_limit_bytes=vmem_limit),
        cost_estimate=pl.CostEstimate(flops=flops, transcendentals=0,
                                      bytes_accessed=bytes_accessed),
    )(xph, wdw9, sc1, sh1, wpwm, sc2, sh2)

    return jnp.transpose(out_nhwc, (0, 3, 1, 2))     # NHWC -> NCHW


# ----------------------------- reference + demo ------------------------------
def _bn_eval_nchw(y, g, b, m, v):
    g = g.reshape(1, -1, 1, 1); b = b.reshape(1, -1, 1, 1)
    m = m.reshape(1, -1, 1, 1); v = v.reshape(1, -1, 1, 1)
    return (y - m) * jax.lax.rsqrt(v + BN_EPS) * g + b


def dw_reference(x, params, *, stride):
    y = jax.lax.conv_general_dilated(
        x, params["dw_weight"], window_strides=(stride, stride),
        padding=((1, 1), (1, 1)), feature_group_count=x.shape[1],
        dimension_numbers=("NCHW", "OIHW", "NCHW"))
    y = _bn_eval_nchw(y, params["bn1_gamma"], params["bn1_beta"],
                      params["bn1_mean"], params["bn1_var"])
    y = jnp.clip(y, 0.0, 6.0)
    y = jax.lax.conv_general_dilated(
        y, params["pw_weight"], window_strides=(1, 1), padding="VALID",
        dimension_numbers=("NCHW", "OIHW", "NCHW"))
    y = _bn_eval_nchw(y, params["bn2_gamma"], params["bn2_beta"],
                      params["bn2_mean"], params["bn2_var"])
    return y


def init_params(key, c_in, c_out):
    ks = jax.random.split(key, 8)
    return {
        "dw_weight": 0.3 * jax.random.normal(ks[0], (c_in, 1, 3, 3), jnp.float32),
        "pw_weight": 0.1 * jax.random.normal(ks[1], (c_out, c_in, 1, 1), jnp.float32),
        "bn1_gamma": 1.0 + 0.1 * jax.random.normal(ks[2], (c_in,), jnp.float32),
        "bn1_beta": 0.1 * jax.random.normal(ks[3], (c_in,), jnp.float32),
        "bn1_mean": 0.1 * jax.random.normal(ks[4], (c_in,), jnp.float32),
        "bn1_var": 1.0 + 0.5 * jax.random.uniform(ks[5], (c_in,), jnp.float32),
        "bn2_gamma": 1.0 + 0.1 * jax.random.normal(ks[6], (c_out,), jnp.float32),
        "bn2_beta": 0.1 * jax.random.normal(ks[7], (c_out,), jnp.float32),
        "bn2_mean": jnp.zeros((c_out,), jnp.float32),
        "bn2_var": jnp.ones((c_out,), jnp.float32),
    }


if __name__ == "__main__":
    B, c_in, c_out, H, W = 4, 32, 64, 16, 16
    key = jax.random.PRNGKey(0)
    kx, kp = jax.random.split(key)
    x = jax.random.normal(kx, (B, c_in, H, W), dtype=jnp.float32)
    params = init_params(kp, c_in, c_out)

    for stride in (1, 2):
        out = jax.block_until_ready(dw_forward(x, params, stride=stride, block_b=2))
        h_o = (H - 1) // stride + 1
        w_o = (W - 1) // stride + 1
        assert out.shape == (B, c_out, h_o, w_o), out.shape
        ref = jax.block_until_ready(dw_reference(x, params, stride=stride))
        np.testing.assert_allclose(np.asarray(out), np.asarray(ref),
                                   rtol=2e-3, atol=2e-3)
    print("KERNEL_OK")
</pallas_src>

<mosaic_0001>
module attributes {stable_mosaic.version = 11 : i64} {
  func.func @dw_kernel(%arg0: i32, %arg1: memref<2x1x18x18x32xf32, #tpu.memory_space<vmem>>, %arg2: memref<9x32xf32, #tpu.memory_space<vmem>>, %arg3: memref<1x32xf32, #tpu.memory_space<vmem>>, %arg4: memref<1x32xf32, #tpu.memory_space<vmem>>, %arg5: memref<32x64xf32, #tpu.memory_space<vmem>>, %arg6: memref<1x64xf32, #tpu.memory_space<vmem>>, %arg7: memref<1x64xf32, #tpu.memory_space<vmem>>, %arg8: memref<2x16x16x64xf32, #tpu.memory_space<vmem>>) attributes {dimension_semantics = [#tpu.dimension_semantics<parallel>], iteration_bounds = array<i64: 2>, scalar_prefetch = 0 : i64, scratch_operands = 0 : i64, tpu.core_type = #tpu.core_type<tc>, window_params = [{transform_indices = @transform_0, window_bounds = array<i64: 2, 1, 18, 18, 32>}, {pipeline_mode = #tpu.pipeline_mode<synchronous>, transform_indices = @transform_1, window_bounds = array<i64: 9, 32>}, {pipeline_mode = #tpu.pipeline_mode<synchronous>, transform_indices = @transform_2, window_bounds = array<i64: 1, 32>}, {pipeline_mode = #tpu.pipeline_mode<synchronous>, transform_indices = @transform_3, window_bounds = array<i64: 1, 32>}, {pipeline_mode = #tpu.pipeline_mode<synchronous>, transform_indices = @transform_4, window_bounds = array<i64: 32, 64>}, {pipeline_mode = #tpu.pipeline_mode<synchronous>, transform_indices = @transform_5, window_bounds = array<i64: 1, 64>}, {pipeline_mode = #tpu.pipeline_mode<synchronous>, transform_indices = @transform_6, window_bounds = array<i64: 1, 64>}, {transform_indices = @transform_7, window_bounds = array<i64: 2, 16, 16, 64>}]} {
    %c0 = arith.constant 0 : index
    %c0_0 = arith.constant 0 : index
    %0 = vector.load %arg2[%c0, %c0_0] : memref<9x32xf32, #tpu.memory_space<vmem>>, vector<9x32xf32>
    %cst = arith.constant 0.000000e+00 : f32
    %1 = vector.broadcast %cst : f32 to vector<2x16x16x32xf32>
    %c0_1 = arith.constant 0 : index
    %c0_2 = arith.constant 0 : index
    %c0_3 = arith.constant 0 : index
    %c0_4 = arith.constant 0 : index
    %c0_5 = arith.constant 0 : index
    %2 = vector.load %arg1[%c0_1, %c0_2, %c0_3, %c0_4, %c0_5] : memref<2x1x18x18x32xf32, #tpu.memory_space<vmem>>, vector<2x1x16x16x32xf32>
    %3 = vector.shape_cast %2 : vector<2x1x16x16x32xf32> to vector<2x16x16x32xf32>
    %4 = vector.extract_strided_slice %0 {offsets = [0, 0], sizes = [1, 32], strides = [1, 1]} : vector<9x32xf32> to vector<1x32xf32>
    %5 = vector.shape_cast %4 : vector<1x32xf32> to vector<32xf32>
    %6 = vector.shape_cast %5 : vector<32xf32> to vector<1x1x1x32xf32>
    %7 = vector.broadcast %6 : vector<1x1x1x32xf32> to vector<2x16x16x32xf32>
    %8 = arith.mulf %3, %7 : vector<2x16x16x32xf32>
    %9 = arith.addf %1, %8 : vector<2x16x16x32xf32>
    %c0_6 = arith.constant 0 : index
    %c0_7 = arith.constant 0 : index
    %c0_8 = arith.constant 0 : index
    %c1 = arith.constant 1 : index
    %c0_9 = arith.constant 0 : index
    %10 = vector.load %arg1[%c0_6, %c0_7, %c0_8, %c1, %c0_9] : memref<2x1x18x18x32xf32, #tpu.memory_space<vmem>>, vector<2x1x16x16x32xf32>
    %11 = vector.shape_cast %10 : vector<2x1x16x16x32xf32> to vector<2x16x16x32xf32>
    %12 = vector.extract_strided_slice %0 {offsets = [1, 0], sizes = [1, 32], strides = [1, 1]} : vector<9x32xf32> to vector<1x32xf32>
    %13 = vector.shape_cast %12 : vector<1x32xf32> to vector<32xf32>
    %14 = vector.shape_cast %13 : vector<32xf32> to vector<1x1x1x32xf32>
    %15 = vector.broadcast %14 : vector<1x1x1x32xf32> to vector<2x16x16x32xf32>
    %16 = arith.mulf %11, %15 : vector<2x16x16x32xf32>
    %17 = arith.addf %9, %16 : vector<2x16x16x32xf32>
    %c0_10 = arith.constant 0 : index
    %c0_11 = arith.constant 0 : index
    %c0_12 = arith.constant 0 : index
    %c2 = arith.constant 2 : index
    %c0_13 = arith.constant 0 : index
    %18 = vector.load %arg1[%c0_10, %c0_11, %c0_12, %c2, %c0_13] : memref<2x1x18x18x32xf32, #tpu.memory_space<vmem>>, vector<2x1x16x16x32xf32>
    %19 = vector.shape_cast %18 : vector<2x1x16x16x32xf32> to vector<2x16x16x32xf32>
    %20 = vector.extract_strided_slice %0 {offsets = [2, 0], sizes = [1, 32], strides = [1, 1]} : vector<9x32xf32> to vector<1x32xf32>
    %21 = vector.shape_cast %20 : vector<1x32xf32> to vector<32xf32>
    %22 = vector.shape_cast %21 : vector<32xf32> to vector<1x1x1x32xf32>
    %23 = vector.broadcast %22 : vector<1x1x1x32xf32> to vector<2x16x16x32xf32>
    %24 = arith.mulf %19, %23 : vector<2x16x16x32xf32>
    %25 = arith.addf %17, %24 : vector<2x16x16x32xf32>
    %c0_14 = arith.constant 0 : index
    %c0_15 = arith.constant 0 : index
    %c1_16 = arith.constant 1 : index
    %c0_17 = arith.constant 0 : index
    %c0_18 = arith.constant 0 : index
    %26 = vector.load %arg1[%c0_14, %c0_15, %c1_16, %c0_17, %c0_18] : memref<2x1x18x18x32xf32, #tpu.memory_space<vmem>>, vector<2x1x16x16x32xf32>
    %27 = vector.shape_cast %26 : vector<2x1x16x16x32xf32> to vector<2x16x16x32xf32>
    %28 = vector.extract_strided_slice %0 {offsets = [3, 0], sizes = [1, 32], strides = [1, 1]} : vector<9x32xf32> to vector<1x32xf32>
    %29 = vector.shape_cast %28 : vector<1x32xf32> to vector<32xf32>
    %30 = vector.shape_cast %29 : vector<32xf32> to vector<1x1x1x32xf32>
    %31 = vector.broadcast %30 : vector<1x1x1x32xf32> to vector<2x16x16x32xf32>
    %32 = arith.mulf %27, %31 : vector<2x16x16x32xf32>
    %33 = arith.addf %25, %32 : vector<2x16x16x32xf32>
    %c0_19 = arith.constant 0 : index
    %c0_20 = arith.constant 0 : index
    %c1_21 = arith.constant 1 : index
    %c1_22 = arith.constant 1 : index
    %c0_23 = arith.constant 0 : index
    %34 = vector.load %arg1[%c0_19, %c0_20, %c1_21, %c1_22, %c0_23] : memref<2x1x18x18x32xf32, #tpu.memory_space<vmem>>, vector<2x1x16x16x32xf32>
    %35 = vector.shape_cast %34 : vector<2x1x16x16x32xf32> to vector<2x16x16x32xf32>
    %36 = vector.extract_strided_slice %0 {offsets = [4, 0], sizes = [1, 32], strides = [1, 1]} : vector<9x32xf32> to vector<1x32xf32>
    %37 = vector.shape_cast %36 : vector<1x32xf32> to vector<32xf32>
    %38 = vector.shape_cast %37 : vector<32xf32> to vector<1x1x1x32xf32>
    %39 = vector.broadcast %38 : vector<1x1x1x32xf32> to vector<2x16x16x32xf32>
    %40 = arith.mulf %35, %39 : vector<2x16x16x32xf32>
    %41 = arith.addf %33, %40 : vector<2x16x16x32xf32>
    %c0_24 = arith.constant 0 : index
    %c0_25 = arith.constant 0 : index
    %c1_26 = arith.constant 1 : index
    %c2_27 = arith.constant 2 : index
    %c0_28 = arith.constant 0 : index
    %42 = vector.load %arg1[%c0_24, %c0_25, %c1_26, %c2_27, %c0_28] : memref<2x1x18x18x32xf32, #tpu.memory_space<vmem>>, vector<2x1x16x16x32xf32>
    %43 = vector.shape_cast %42 : vector<2x1x16x16x32xf32> to vector<2x16x16x32xf32>
    %44 = vector.extract_strided_slice %0 {offsets = [5, 0], sizes = [1, 32], strides = [1, 1]} : vector<9x32xf32> to vector<1x32xf32>
    %45 = vector.shape_cast %44 : vector<1x32xf32> to vector<32xf32>
    %46 = vector.shape_cast %45 : vector<32xf32> to vector<1x1x1x32xf32>
    %47 = vector.broadcast %46 : vector<1x1x1x32xf32> to vector<2x16x16x32xf32>
    %48 = arith.mulf %43, %47 : vector<2x16x16x32xf32>
    %49 = arith.addf %41, %48 : vector<2x16x16x32xf32>
    %c0_29 = arith.constant 0 : index
    %c0_30 = arith.constant 0 : index
    %c2_31 = arith.constant 2 : index
    %c0_32 = arith.constant 0 : index
    %c0_33 = arith.constant 0 : index
    %50 = vector.load %arg1[%c0_29, %c0_30, %c2_31, %c0_32, %c0_33] : memref<2x1x18x18x32xf32, #tpu.memory_space<vmem>>, vector<2x1x16x16x32xf32>
    %51 = vector.shape_cast %50 : vector<2x1x16x16x32xf32> to vector<2x16x16x32xf32>
    %52 = vector.extract_strided_slice %0 {offsets = [6, 0], sizes = [1, 32], strides = [1, 1]} : vector<9x32xf32> to vector<1x32xf32>
    %53 = vector.shape_cast %52 : vector<1x32xf32> to vector<32xf32>
    %54 = vector.shape_cast %53 : vector<32xf32> to vector<1x1x1x32xf32>
    %55 = vector.broadcast %54 : vector<1x1x1x32xf32> to vector<2x16x16x32xf32>
    %56 = arith.mulf %51, %55 : vector<2x16x16x32xf32>
    %57 = arith.addf %49, %56 : vector<2x16x16x32xf32>
    %c0_34 = arith.constant 0 : index
    %c0_35 = arith.constant 0 : index
    %c2_36 = arith.constant 2 : index
    %c1_37 = arith.constant 1 : index
    %c0_38 = arith.constant 0 : index
    %58 = vector.load %arg1[%c0_34, %c0_35, %c2_36, %c1_37, %c0_38] : memref<2x1x18x18x32xf32, #tpu.memory_space<vmem>>, vector<2x1x16x16x32xf32>
    %59 = vector.shape_cast %58 : vector<2x1x16x16x32xf32> to vector<2x16x16x32xf32>
    %60 = vector.extract_strided_slice %0 {offsets = [7, 0], sizes = [1, 32], strides = [1, 1]} : vector<9x32xf32> to vector<1x32xf32>
    %61 = vector.shape_cast %60 : vector<1x32xf32> to vector<32xf32>
    %62 = vector.shape_cast %61 : vector<32xf32> to vector<1x1x1x32xf32>
    %63 = vector.broadcast %62 : vector<1x1x1x32xf32> to vector<2x16x16x32xf32>
    %64 = arith.mulf %59, %63 : vector<2x16x16x32xf32>
    %65 = arith.addf %57, %64 : vector<2x16x16x32xf32>
    %c0_39 = arith.constant 0 : index
    %c0_40 = arith.constant 0 : index
    %c2_41 = arith.constant 2 : index
    %c2_42 = arith.constant 2 : index
    %c0_43 = arith.constant 0 : index
    %66 = vector.load %arg1[%c0_39, %c0_40, %c2_41, %c2_42, %c0_43] : memref<2x1x18x18x32xf32, #tpu.memory_space<vmem>>, vector<2x1x16x16x32xf32>
    %67 = vector.shape_cast %66 : vector<2x1x16x16x32xf32> to vector<2x16x16x32xf32>
    %68 = vector.extract_strided_slice %0 {offsets = [8, 0], sizes = [1, 32], strides = [1, 1]} : vector<9x32xf32> to vector<1x32xf32>
    %69 = vector.shape_cast %68 : vector<1x32xf32> to vector<32xf32>
    %70 = vector.shape_cast %69 : vector<32xf32> to vector<1x1x1x32xf32>
    %71 = vector.broadcast %70 : vector<1x1x1x32xf32> to vector<2x16x16x32xf32>
    %72 = arith.mulf %67, %71 : vector<2x16x16x32xf32>
    %73 = arith.addf %65, %72 : vector<2x16x16x32xf32>
    %c0_44 = arith.constant 0 : index
    %c0_45 = arith.constant 0 : index
    %74 = vector.load %arg3[%c0_44, %c0_45] : memref<1x32xf32, #tpu.memory_space<vmem>>, vector<1x32xf32>
    %75 = vector.shape_cast %74 : vector<1x32xf32> to vector<1x1x1x32xf32>
    %76 = vector.broadcast %75 : vector<1x1x1x32xf32> to vector<2x16x16x32xf32>
    %77 = arith.mulf %73, %76 : vector<2x16x16x32xf32>
    %c0_46 = arith.constant 0 : index
    %c0_47 = arith.constant 0 : index
    %78 = vector.load %arg4[%c0_46, %c0_47] : memref<1x32xf32, #tpu.memory_space<vmem>>, vector<1x32xf32>
    %79 = vector.shape_cast %78 : vector<1x32xf32> to vector<1x1x1x32xf32>
    %80 = vector.broadcast %79 : vector<1x1x1x32xf32> to vector<2x16x16x32xf32>
    %81 = arith.addf %77, %80 : vector<2x16x16x32xf32>
    %cst_48 = arith.constant 0.000000e+00 : f32
    %cst_49 = arith.constant 6.000000e+00 : f32
    %82 = vector.broadcast %cst_48 : f32 to vector<2x16x16x32xf32>
    %83 = arith.maximumf %82, %81 : vector<2x16x16x32xf32>
    %84 = vector.broadcast %cst_49 : f32 to vector<2x16x16x32xf32>
    %85 = arith.minimumf %84, %83 : vector<2x16x16x32xf32>
    %86 = vector.shape_cast %85 : vector<2x16x16x32xf32> to vector<512x32xf32>
    %c0_50 = arith.constant 0 : index
    %c0_51 = arith.constant 0 : index
    %87 = vector.load %arg5[%c0_50, %c0_51] : memref<32x64xf32, #tpu.memory_space<vmem>>, vector<32x64xf32>
    %cst_52 = arith.constant dense<0.000000e+00> : vector<512x64xf32>
    %88 = tpu.matmul %86, %87, %cst_52 {dimension_numbers = #tpu.dot_dimension_numbers<[1], [0], [0], [1], [0, 0, 1, 1], [], []>} : vector<512x32xf32>, vector<32x64xf32>, vector<512x64xf32> -> vector<512x64xf32>
    %c0_53 = arith.constant 0 : index
    %c0_54 = arith.constant 0 : index
    %89 = vector.load %arg6[%c0_53, %c0_54] : memref<1x64xf32, #tpu.memory_space<vmem>>, vector<1x64xf32>
    %90 = vector.broadcast %89 : vector<1x64xf32> to vector<512x64xf32>
    %91 = arith.mulf %88, %90 : vector<512x64xf32>
    %c0_55 = arith.constant 0 : index
    %c0_56 = arith.constant 0 : index
    %92 = vector.load %arg7[%c0_55, %c0_56] : memref<1x64xf32, #tpu.memory_space<vmem>>, vector<1x64xf32>
    %93 = vector.broadcast %92 : vector<1x64xf32> to vector<512x64xf32>
    %94 = arith.addf %91, %93 : vector<512x64xf32>
    %95 = vector.shape_cast %94 : vector<512x64xf32> to vector<2x16x16x64xf32>
    %c0_57 = arith.constant 0 : index
    %c0_58 = arith.constant 0 : index
    %c0_59 = arith.constant 0 : index
    %c0_60 = arith.constant 0 : index
    %96 = vector.load %arg8[%c0_57, %c0_58, %c0_59, %c0_60] : memref<2x16x16x64xf32, #tpu.memory_space<vmem>>, vector<2x16x16x64xf32>
    tpu.vector_store %arg8[%c0_57, %c0_58, %c0_59, %c0_60], %95 {strides = array<i32>} : memref<2x16x16x64xf32, #tpu.memory_space<vmem>>, vector<2x16x16x64xf32>,
    return
  }
  func.func @transform_0(%arg0: i32) -> (i32, i32, i32, i32, i32) {
    %c0_i32 = arith.constant 0 : i32
    %c0_i32_0 = arith.constant 0 : i32
    %c0_i32_1 = arith.constant 0 : i32
    %c0_i32_2 = arith.constant 0 : i32
    %c0_i32_3 = arith.constant 0 : i32
    return %arg0, %c0_i32, %c0_i32_0, %c0_i32_1, %c0_i32_2 : i32, i32, i32, i32, i32
  }
  func.func @transform_1(%arg0: i32) -> (i32, i32) {
    %c0_i32 = arith.constant 0 : i32
    %c0_i32_0 = arith.constant 0 : i32
    %c0_i32_1 = arith.constant 0 : i32
    return %c0_i32, %c0_i32_0 : i32, i32
  }
  func.func @transform_2(%arg0: i32) -> (i32, i32) {
    %c0_i32 = arith.constant 0 : i32
    %c0_i32_0 = arith.constant 0 : i32
    %c0_i32_1 = arith.constant 0 : i32
    return %c0_i32, %c0_i32_0 : i32, i32
  }
  func.func @transform_3(%arg0: i32) -> (i32, i32) {
    %c0_i32 = arith.constant 0 : i32
    %c0_i32_0 = arith.constant 0 : i32
    %c0_i32_1 = arith.constant 0 : i32
    return %c0_i32, %c0_i32_0 : i32, i32
  }
  func.func @transform_4(%arg0: i32) -> (i32, i32) {
    %c0_i32 = arith.constant 0 : i32
    %c0_i32_0 = arith.constant 0 : i32
    %c0_i32_1 = arith.constant 0 : i32
    return %c0_i32, %c0_i32_0 : i32, i32
  }
  func.func @transform_5(%arg0: i32) -> (i32, i32) {
    %c0_i32 = arith.constant 0 : i32
    %c0_i32_0 = arith.constant 0 : i32
    %c0_i32_1 = arith.constant 0 : i32
    return %c0_i32, %c0_i32_0 : i32, i32
  }
  func.func @transform_6(%arg0: i32) -> (i32, i32) {
    %c0_i32 = arith.constant 0 : i32
    %c0_i32_0 = arith.constant 0 : i32
    %c0_i32_1 = arith.constant 0 : i32
    return %c0_i32, %c0_i32_0 : i32, i32
  }
  func.func @transform_7(%arg0: i32) -> (i32, i32, i32, i32) {
    %c0_i32 = arith.constant 0 : i32
    %c0_i32_0 = arith.constant 0 : i32
    %c0_i32_1 = arith.constant 0 : i32
    %c0_i32_2 = arith.constant 0 : i32
    return %arg0, %c0_i32, %c0_i32_0, %c0_i32_1 : i32, i32, i32, i32
  }
}

</mosaic_0001>

<llo_original>
// kernel: tpu_custom_call.1
$region0: #{tpu_custom_call.1}
  #allocation0 [shape = 'u32[]', space=smem, size = 0x4, offset = 0x4, fixed_abs, tag = 'smem constant byte address 0x4 - core index']
  #allocation1 [shape = 'u32[144,128]{1,0:T(1,128)}', space=vmem, size = 0x12000, scoped, tag = 'internal scratch']
  %s0 = inlined_call_operand.vmem [shape: f32[4,1,18,18,32], index: 0, kind: input, shape index: {}]
  %s1 = inlined_call_operand.vmem [shape: f32[9,32], index: 1, kind: input, shape index: {}]
  %s2 = inlined_call_operand.vmem [shape: f32[1,32], index: 2, kind: input, shape index: {}]
  %s3 = inlined_call_operand.vmem [shape: f32[1,32], index: 3, kind: input, shape index: {}]
  %s4 = inlined_call_operand.vmem [shape: f32[32,64], index: 4, kind: input, shape index: {}]
  %s5 = inlined_call_operand.vmem [shape: f32[1,64], index: 5, kind: input, shape index: {}]
  %s6 = inlined_call_operand.vmem [shape: f32[1,64], index: 6, kind: input, shape index: {}]
  %s7 = inlined_call_operand.hbm [shape: f32[4,16,16,64], index: 7, kind: output, shape index: {}]
  %s8 = sld [smem:[#allocation0]]
  $region61: #{tpu_custom_call.1} parent=0
    _
  %s10 = ssub.s32 1, %s8
  %s11 = scalar_select 0, %s10, %s8
  $region1: #{tpu_custom_call.1} parent=0
    #allocation2 [shape = 'u8[524288]{0}', space=vmem, size = 0x80000, scoped, tag = 'output window, operand 0']
    #allocation3 [shape = 's32[2]{0}', space=sflag, size = 0x8, scoped, tag = 'scoped memory for tpu_custom_call.1']
    %12 = vsyncpa [#allocation3], 0
    %s13 = scalar_lea.sflag [#allocation3], 1
    %14 = vsyncpa %s13, 0
    loop: start=0, step=1, limit=4
    $region2: #{tpu_custom_call.1} parent=1 // loop_pre_header
      _
    $region3: #{tpu_custom_call.1} parent=1 // loop_header
      %s16 = sphi 0, %s20
      %p17 = scmp.ge.s32.totalorder %s16, 4
      %s26 = sphi 0, %s28
      %s29 = sphi 0, %s26
      %s30 = sphi 0, %s29
      %s46 = sphi 0, %s30
      %s50 = sphi 0, %s50
      %s52 = sphi 0, %s50
      %s53 = sphi 0, %s52
      %s67 = sphi 0, %s53
      %s71 = sphi 0, %s71
      %s73 = sphi 0, %s71
      %s74 = sphi 0, %s73
      %s88 = sphi 0, %s74
      %s92 = sphi 0, %s92
      %s94 = sphi 0, %s92
      %s95 = sphi 0, %s94
      %s109 = sphi 0, %s95
      %s113 = sphi 0, %s113
      %s115 = sphi 0, %s113
      %s116 = sphi 0, %s115
      %s130 = sphi 0, %s116
      %s134 = sphi 0, %s134
      %s136 = sphi 0, %s134
      %s137 = sphi 0, %s136
      %s151 = sphi 0, %s137
      %s155 = sphi 0, %s155
      %s157 = sphi 0, %s155
      %s158 = sphi 0, %s157
      %s172 = sphi 0, %s158
      %s178 = sphi 0, %s180
      %s181 = sphi 0, %s178
      %s182 = sphi 0, %s181
      %s198 = sphi 0, %s182
    $region4: #{tpu_custom_call.1} parent=1 // loop_header_branch
      %19 = sbr.rel (%p17) target = $region8
    $region5: #{tpu_custom_call.1} parent=1 // loop_body
      %s21 = ssub.s32 %s16, 1
      %s22 = ssub.s32 %s16, 2
      %s23 = sadd.s32 %s16, 1
      %s24 = ssub.s32 %s16, %s23
      %p25 = scmp.eq.s32.totalorder %s24, 0
      %s27 = sadd.s32 %s26, 1
      %s28 = scalar_select %p25, %s26, %s27
      %p31 = pneg %p25
      %p32 = scmp.eq.s32.totalorder %s16, 1
      %p33 = por %p31, %p32
      %p34 = scmp.ne.s32.totalorder %s26, %s29
      %p35 = scmp.eq.s32.totalorder %s16, 0
      %p36 = por %p34, %p35
      %p37 = scmp.ne.s32.totalorder %s26, %s29
      %p38 = scmp.eq.s32.totalorder %s21, 1
      %p39 = por %p37, %p38
      %p40 = scmp.ne.s32.totalorder %s29, %s30
      %p41 = scmp.eq.s32.totalorder %s21, 0
      %p42 = por %p40, %p41
      %p43 = scmp.ne.s32.totalorder %s29, %s30
      %p44 = scmp.eq.s32.totalorder %s22, 1
      %p45 = por %p43, %p44
      %p47 = scmp.ne.s32.totalorder %s30, %s46
      %p48 = scmp.eq.s32.totalorder %s22, 0
      %p49 = por %p47, %p48
      %s51 = sadd.s32 %s50, 1
      %p54 = scmp.eq.s32.totalorder %s16, 1
      %p55 = scmp.ne.s32.totalorder %s50, %s52
      %p56 = scmp.eq.s32.totalorder %s16, 0
      %p57 = por %p55, %p56
      %p58 = scmp.ne.s32.totalorder %s50, %s52
      %p59 = scmp.eq.s32.totalorder %s21, 1
      %p60 = por %p58, %p59
      %p61 = scmp.ne.s32.totalorder %s52, %s53
      %p62 = scmp.eq.s32.totalorder %s21, 0
      %p63 = por %p61, %p62
      %p64 = scmp.ne.s32.totalorder %s52, %s53
      %p65 = scmp.eq.s32.totalorder %s22, 1
      %p66 = por %p64, %p65
      %p68 = scmp.ne.s32.totalorder %s53, %s67
      %p69 = scmp.eq.s32.totalorder %s22, 0
      %p70 = por %p68, %p69
      %s72 = sadd.s32 %s71, 1
      %p75 = scmp.eq.s32.totalorder %s16, 1
      %p76 = scmp.ne.s32.totalorder %s71, %s73
      %p77 = scmp.eq.s32.totalorder %s16, 0
      %p78 = por %p76, %p77
      %p79 = scmp.ne.s32.totalorder %s71, %s73
      %p80 = scmp.eq.s32.totalorder %s21, 1
      %p81 = por %p79, %p80
      %p82 = scmp.ne.s32.totalorder %s73, %s74
      %p83 = scmp.eq.s32.totalorder %s21, 0
      %p84 = por %p82, %p83
      %p85 = scmp.ne.s32.totalorder %s73, %s74
      %p86 = scmp.eq.s32.totalorder %s22, 1
      %p87 = por %p85, %p86
      %p89 = scmp.ne.s32.totalorder %s74, %s88
      %p90 = scmp.eq.s32.totalorder %s22, 0
      %p91 = por %p89, %p90
      %s93 = sadd.s32 %s92, 1
      %p96 = scmp.eq.s32.totalorder %s16, 1
      %p97 = scmp.ne.s32.totalorder %s92, %s94
      %p98 = scmp.eq.s32.totalorder %s16, 0
      %p99 = por %p97, %p98
      %p100 = scmp.ne.s32.totalorder %s92, %s94
      %p101 = scmp.eq.s32.totalorder %s21, 1
      %p102 = por %p100, %p101
      %p103 = scmp.ne.s32.totalorder %s94, %s95
      %p104 = scmp.eq.s32.totalorder %s21, 0
      %p105 = por %p103, %p104
      %p106 = scmp.ne.s32.totalorder %s94, %s95
      %p107 = scmp.eq.s32.totalorder %s22, 1
      %p108 = por %p106, %p107
      %p110 = scmp.ne.s32.totalorder %s95, %s109
      %p111 = scmp.eq.s32.totalorder %s22, 0
      %p112 = por %p110, %p111
      %s114 = sadd.s32 %s113, 1
      %p117 = scmp.eq.s32.totalorder %s16, 1
      %p118 = scmp.ne.s32.totalorder %s113, %s115
      %p119 = scmp.eq.s32.totalorder %s16, 0
      %p120 = por %p118, %p119
      %p121 = scmp.ne.s32.totalorder %s113, %s115
      %p122 = scmp.eq.s32.totalorder %s21, 1
      %p123 = por %p121, %p122
      %p124 = scmp.ne.s32.totalorder %s115, %s116
      %p125 = scmp.eq.s32.totalorder %s21, 0
      %p126 = por %p124, %p125
      %p127 = scmp.ne.s32.totalorder %s115, %s116
      %p128 = scmp.eq.s32.totalorder %s22, 1
      %p129 = por %p127, %p128
      %p131 = scmp.ne.s32.totalorder %s116, %s130
      %p132 = scmp.eq.s32.totalorder %s22, 0
      %p133 = por %p131, %p132
      %s135 = sadd.s32 %s134, 1
      %p138 = scmp.eq.s32.totalorder %s16, 1
      %p139 = scmp.ne.s32.totalorder %s134, %s136
      %p140 = scmp.eq.s32.totalorder %s16, 0
      %p141 = por %p139, %p140
      %p142 = scmp.ne.s32.totalorder %s134, %s136
      %p143 = scmp.eq.s32.totalorder %s21, 1
      %p144 = por %p142, %p143
      %p145 = scmp.ne.s32.totalorder %s136, %s137
      %p146 = scmp.eq.s32.totalorder %s21, 0
      %p147 = por %p145, %p146
      %p148 = scmp.ne.s32.totalorder %s136, %s137
      %p149 = scmp.eq.s32.totalorder %s22, 1
      %p150 = por %p148, %p149
      %p152 = scmp.ne.s32.totalorder %s137, %s151
      %p153 = scmp.eq.s32.totalorder %s22, 0
      %p154 = por %p152, %p153
      %s156 = sadd.s32 %s155, 1
      %p159 = scmp.eq.s32.totalorder %s16, 1
      %p160 = scmp.ne.s32.totalorder %s155, %s157
      %p161 = scmp.eq.s32.totalorder %s16, 0
      %p162 = por %p160, %p161
      %p163 = scmp.ne.s32.totalorder %s155, %s157
      %p164 = scmp.eq.s32.totalorder %s21, 1
      %p165 = por %p163, %p164
      %p166 = scmp.ne.s32.totalorder %s157, %s158
      %p167 = scmp.eq.s32.totalorder %s21, 0
      %p168 = por %p166, %p167
      %p169 = scmp.ne.s32.totalorder %s157, %s158
      %p170 = scmp.eq.s32.totalorder %s22, 1
      %p171 = por %p169, %p170
      %p173 = scmp.ne.s32.totalorder %s158, %s172
      %p174 = scmp.eq.s32.totalorder %s22, 0
      %p175 = por %p173, %p174
      %s176 = ssub.s32 %s16, %s23
      %p177 = scmp.eq.s32.totalorder %s176, 0
      %s179 = sadd.s32 %s178, 1
      %s180 = scalar_select %p177, %s178, %s179
      %p183 = pneg %p177
      %p184 = scmp.eq.s32.totalorder %s16, 1
      %p185 = por %p183, %p184
      %p186 = scmp.ne.s32.totalorder %s178, %s181
      %p187 = scmp.eq.s32.totalorder %s16, 0
      %p188 = por %p186, %p187
      %p189 = scmp.ne.s32.totalorder %s178, %s181
      %p190 = scmp.eq.s32.totalorder %s21, 1
      %p191 = por %p189, %p190
      %p192 = scmp.ne.s32.totalorder %s181, %s182
      %p193 = scmp.eq.s32.totalorder %s21, 0
      %p194 = por %p192, %p193
      %p195 = scmp.ne.s32.totalorder %s181, %s182
      %p196 = scmp.eq.s32.totalorder %s22, 1
      %p197 = por %p195, %p196
      %p199 = scmp.ne.s32.totalorder %s182, %s198
      %p200 = scmp.eq.s32.totalorder %s22, 0
      %p201 = por %p199, %p200
      %p202 = scmp.le.s32.totalorder 1, %s16
      %p203 = scmp.lt.s32.totalorder %s16, 3
      %p204 = pnand %p202, %p203
      %p205 = pneg %p204
      // Predicated region
      $region9: #{tpu_custom_call.1} parent=5 // pred_check
        _
      $region10: #{tpu_custom_call.1} parent=5 // pred_check_branch
        %207 = sbr.rel (%p204) target = $region12
      $region11: #{tpu_custom_call.1} parent=5 // pred_region
        %s208 = ssub.s32 %s16, 1
        // Predicated region
        $region13: #{tpu_custom_call.1} parent=11 // pred_check
          %p209 = pneg %p63
        $region14: #{tpu_custom_call.1} parent=11 // pred_check_branch
          %211 = sbr.rel (%p209) target = $region16
        $region15: #{tpu_custom_call.1} parent=11 // pred_region
          _
        $region16: #{tpu_custom_call.1} parent=11 // pred_fallthru
          _
        // Predicated region
        $region17: #{tpu_custom_call.1} parent=11 // pred_check
          %p212 = pneg %p84
        $region18: #{tpu_custom_call.1} parent=11 // pred_check_branch
          %214 = sbr.rel (%p212) target = $region20
        $region19: #{tpu_custom_call.1} parent=11 // pred_region
          _
        $region20: #{tpu_custom_call.1} parent=11 // pred_fallthru
          _
        // Predicated region
        $region21: #{tpu_custom_call.1} parent=11 // pred_check
          %p215 = pneg %p105
        $region22: #{tpu_custom_call.1} parent=11 // pred_check_branch
          %217 = sbr.rel (%p215) target = $region24
        $region23: #{tpu_custom_call.1} parent=11 // pred_region
          _
        $region24: #{tpu_custom_call.1} parent=11 // pred_fallthru
          _
        // Predicated region
        $region25: #{tpu_custom_call.1} parent=11 // pred_check
          %p218 = pneg %p126
        $region26: #{tpu_custom_call.1} parent=11 // pred_check_branch
          %220 = sbr.rel (%p218) target = $region28
        $region27: #{tpu_custom_call.1} parent=11 // pred_region
          _
        $region28: #{tpu_custom_call.1} parent=11 // pred_fallthru
          _
        // Predicated region
        $region29: #{tpu_custom_call.1} parent=11 // pred_check
          %p221 = pneg %p147
        $region30: #{tpu_custom_call.1} parent=11 // pred_check_branch
          %223 = sbr.rel (%p221) target = $region32
        $region31: #{tpu_custom_call.1} parent=11 // pred_region
          _
        $region32: #{tpu_custom_call.1} parent=11 // pred_fallthru
          _
        // Predicated region
        $region33: #{tpu_custom_call.1} parent=11 // pred_check
          %p224 = pneg %p168
        $region34: #{tpu_custom_call.1} parent=11 // pred_check_branch
          %226 = sbr.rel (%p224) target = $region36
        $region35: #{tpu_custom_call.1} parent=11 // pred_region
          _
        $region36: #{tpu_custom_call.1} parent=11 // pred_fallthru
          _
      $region12: #{tpu_custom_call.1} parent=5 // pred_fallthru
        _
      %p227 = scmp.lt.s32.totalorder %s16, 2
      // Predicated region
      $region37: #{tpu_custom_call.1} parent=5 // pred_check
        %p228 = pneg %p227
      $region38: #{tpu_custom_call.1} parent=5 // pred_check_branch
        %230 = sbr.rel (%p228) target = $region40
      $region39: #{tpu_custom_call.1} parent=5 // pred_region
        // Predicated region
        $region41: #{tpu_custom_call.1} parent=39 // pred_check
          %p231 = pneg %p36
        $region42: #{tpu_custom_call.1} parent=39 // pred_check_branch
          %233 = sbr.rel (%p231) target = $region44
        $region43: #{tpu_custom_call.1} parent=39 // pred_region
          %s234 = smul.u32 2, %s16
          %p235 = scmp.lt.s32.totalorder %s234, 3
          %s236 = scalar_select %p235, %s234, 3
          %s237 = smul.addr %s236, 54
          %s238 = smul.addr %s237, 8
          %s239 = scalar_lea.vmem %s0, %s238
          %s240 = smul.u32 2, %s16
        $region44: #{tpu_custom_call.1} parent=39 // pred_fallthru
          _
      $region40: #{tpu_custom_call.1} parent=5 // pred_fallthru
        _
      %p241 = scmp.le.s32.totalorder 1, %s16
      %p242 = scmp.lt.s32.totalorder %s16, 3
      %p243 = pnand %p241, %p242
      %p244 = pneg %p243
      // Predicated region
      $region45: #{tpu_custom_call.1} parent=5 // pred_check
        _
      $region46: #{tpu_custom_call.1} parent=5 // pred_check_branch
        %246 = sbr.rel (%p243) target = $region48
      $region47: #{tpu_custom_call.1} parent=5 // pred_region
        %s247 = ssub.s32 %s16, 1
        %s248 = smul.u32 2, %s21
        %p249 = scmp.lt.s32.totalorder %s248, 3
        %s250 = scalar_select %p249, %s248, 3
        %s251 = smul.addr %s250, 54
        %s252 = smul.addr %s251, 8
        %s253 = scalar_lea.vmem %s0, %s252
        %p254 = pneg %p42
        %p255 = pneg %p39
        %p256 = pneg %p63
        %p257 = pneg %p60
        %p258 = pneg %p84
        %p259 = pneg %p81
        %p260 = pneg %p105
        %p261 = pneg %p102
        %p262 = pneg %p126
        %p263 = pneg %p123
        %p264 = pneg %p147
        %p265 = pneg %p144
        %p266 = pneg %p168
        %p267 = pneg %p165
        %p268 = pneg %p194
        %p269 = pneg %p191
        %s270 = sand.u32 %s181, 1
        %s271 = scalar_lea.sflag [#allocation3], %s270
        %s272 = sand.u32 %s181, 1
        %s273 = smul.addr %s272, 512
        %s274 = scalar_lea.vmem [#allocation2], %s273
        %s275 = smul.u32 2, %s21
        %p276 = scmp.lt.s32.totalorder %s275, 3
        %s277 = scalar_select %p276, %s275, 3
        %s278 = smul.addr %s277, 54
        %s279 = smul.addr %s278, 8
        %s280 = scalar_lea.vmem %s0, %s279
        %s281 = smul.u32 2, %s21
        %s282 = smul.u32 2, %s21
        %v283 = vld [vmem:[%s1] sm:$0xff]
        %v284 = vld [vmem:[%s1 + $0x8] sm:$0x1]
        %v285 = vld [vmem:[%s280] sm:$0xff]
        %v286 = vld [vmem:[%s280 + $0x8] sm:$0xff]
        %v287 = vld [vmem:[%s280 + $0x18] sm:$0xff]
        %v288 = vld [vmem:[%s280 + $0x20] sm:$0xff]
        %v289 = vld [vmem:[%s280 + $0x30] sm:$0xff]
        %v290 = vld [vmem:[%s280 + $0x38] sm:$0xff]
        %v291 = vld [vmem:[%s280 + $0x48] sm:$0xff]
        %v292 = vld [vmem:[%s280 + $0x50] sm:$0xff]
        %v293 = vld [vmem:[%s280 + $0x60] sm:$0xff]
        %v294 = vld [vmem:[%s280 + $0x68] sm:$0xff]
        %v295 = vld [vmem:[%s280 + $0x78] sm:$0xff]
        %v296 = vld [vmem:[%s280 + $0x80] sm:$0xff]
        %v297 = vld [vmem:[%s280 + $0x90] sm:$0xff]
        %v298 = vld [vmem:[%s280 + $0x98] sm:$0xff]
        %v299 = vld [vmem:[%s280 + $0xa8] sm:$0xff]
        %v300 = vld [vmem:[%s280 + $0xb0] sm:$0xff]
        %v301 = vld [vmem:[%s280 + $0xc0] sm:$0xff]
        %v302 = vld [vmem:[%s280 + $0xc8] sm:$0xff]
        %v303 = vld [vmem:[%s280 + $0xd8] sm:$0xff]
        %v304 = vld [vmem:[%s280 + $0xe0] sm:$0xff]
        %v305 = vld [vmem:[%s280 + $0xf0] sm:$0xff]
        %v306 = vld [vmem:[%s280 + $0xf8] sm:$0xff]
        %v307 = vld [vmem:[%s280 + $0x108] sm:$0xff]
        %v308 = vld [vmem:[%s280 + $0x110] sm:$0xff]
        %v309 = vld [vmem:[%s280 + $0x120] sm:$0xff]
        %v310 = vld [vmem:[%s280 + $0x128] sm:$0xff]
        %v311 = vld [vmem:[%s280 + $0x138] sm:$0xff]
        %v312 = vld [vmem:[%s280 + $0x140] sm:$0xff]
        %v313 = vld [vmem:[%s280 + $0x150] sm:$0xff]
        %v314 = vld [vmem:[%s280 + $0x158] sm:$0xff]
        %v315 = vld [vmem:[%s280 + $0x168] sm:$0xff]
        %v316 = vld [vmem:[%s280 + $0x170] sm:$0xff]
        %v317 = vld [vmem:[%s280 + $0x1b0] sm:$0xff]
        %v318 = vld [vmem:[%s280 + $0x1b8] sm:$0xff]
        %v319 = vld [vmem:[%s280 + $0x1c8] sm:$0xff]
        %v320 = vld [vmem:[%s280 + $0x1d0] sm:$0xff]
        %v321 = vld [vmem:[%s280 + $0x1e0] sm:$0xff]
        %v322 = vld [vmem:[%s280 + $0x1e8] sm:$0xff]
        %v323 = vld [vmem:[%s280 + $0x1f8] sm:$0xff]
        %v324 = vld [vmem:[%s280 + $0x200] sm:$0xff]
        %v325 = vld [vmem:[%s280 + $0x210] sm:$0xff]
        %v326 = vld [vmem:[%s280 + $0x218] sm:$0xff]
        %v327 = vld [vmem:[%s280 + $0x228] sm:$0xff]
        %v328 = vld [vmem:[%s280 + $0x230] sm:$0xff]
        %v329 = vld [vmem:[%s280 + $0x240] sm:$0xff]
        %v330 = vld [vmem:[%s280 + $0x248] sm:$0xff]
        %v331 = vld [vmem:[%s280 + $0x258] sm:$0xff]
        %v332 = vld [vmem:[%s280 + $0x260] sm:$0xff]
        %v333 = vld [vmem:[%s280 + $0x270] sm:$0xff]
        %v334 = vld [vmem:[%s280 + $0x278] sm:$0xff]
        %v335 = vld [vmem:[%s280 + $0x288] sm:$0xff]
        %v336 = vld [vmem:[%s280 + $0x290] sm:$0xff]
        %v337 = vld [vmem:[%s280 + $0x2a0] sm:$0xff]
        %v338 = vld [vmem:[%s280 + $0x2a8] sm:$0xff]
        %v339 = vld [vmem:[%s280 + $0x2b8] sm:$0xff]
        %v340 = vld [vmem:[%s280 + $0x2c0] sm:$0xff]
        %v341 = vld [vmem:[%s280 + $0x2d0] sm:$0xff]
        %v342 = vld [vmem:[%s280 + $0x2d8] sm:$0xff]
        %v343 = vld [vmem:[%s280 + $0x2e8] sm:$0xff]
        %v344 = vld [vmem:[%s280 + $0x2f0] sm:$0xff]
        %v345 = vld [vmem:[%s280 + $0x300] sm:$0xff]
        %v346 = vld [vmem:[%s280 + $0x308] sm:$0xff]
        %v347 = vld [vmem:[%s280 + $0x318] sm:$0xff]
        %v348 = vld [vmem:[%s280 + $0x320] sm:$0xff]
        %v349 = vlaneseq
        %v350 = vshrl.u32 %v349, 7
        %v351 = vsub.s32 0, %v350
        %v352 = vrot.slane %v283, %v351
        %v353 = vmul.f32 %v285, %v352
        %v354 = vmul.f32 %v286, %v352
        %v355 = vmul.f32 %v287, %v352
        %v356 = vmul.f32 %v288, %v352
        %v357 = vmul.f32 %v289, %v352
        %v358 = vmul.f32 %v290, %v352
        %v359 = vmul.f32 %v291, %v352
        %v360 = vmul.f32 %v292, %v352
        %v361 = vmul.f32 %v293, %v352
        %v362 = vmul.f32 %v294, %v352
        %v363 = vmul.f32 %v295, %v352
        %v364 = vmul.f32 %v296, %v352
        %v365 = vmul.f32 %v297, %v352
        %v366 = vmul.f32 %v298, %v352
        %v367 = vmul.f32 %v299, %v352
        %v368 = vmul.f32 %v300, %v352
        %v369 = vmul.f32 %v301, %v352
        %v370 = vmul.f32 %v302, %v352
        %v371 = vmul.f32 %v303, %v352
        %v372 = vmul.f32 %v304, %v352
        %v373 = vmul.f32 %v305, %v352
        %v374 = vmul.f32 %v306, %v352
        %v375 = vmul.f32 %v307, %v352
        %v376 = vmul.f32 %v308, %v352
        %v377 = vmul.f32 %v309, %v352
        %v378 = vmul.f32 %v310, %v352
        %v379 = vmul.f32 %v311, %v352
        %v380 = vmul.f32 %v312, %v352
        %v381 = vmul.f32 %v313, %v352
        %v382 = vmul.f32 %v314, %v352
        %v383 = vmul.f32 %v315, %v352
        %v384 = vmul.f32 %v316, %v352
        %v385 = vmul.f32 %v317, %v352
        %v386 = vmul.f32 %v318, %v352
        %v387 = vmul.f32 %v319, %v352
        %v388 = vmul.f32 %v320, %v352
        %v389 = vmul.f32 %v321, %v352
        %v390 = vmul.f32 %v322, %v352
        %v391 = vmul.f32 %v323, %v352
        %v392 = vmul.f32 %v324, %v352
        %v393 = vmul.f32 %v325, %v352
        %v394 = vmul.f32 %v326, %v352
        %v395 = vmul.f32 %v327, %v352
        %v396 = vmul.f32 %v328, %v352
        %v397 = vmul.f32 %v329, %v352
        %v398 = vmul.f32 %v330, %v352
        %v399 = vmul.f32 %v331, %v352
        %v400 = vmul.f32 %v332, %v352
        %v401 = vmul.f32 %v333, %v352
        %v402 = vmul.f32 %v334, %v352
        %v403 = vmul.f32 %v335, %v352
        %v404 = vmul.f32 %v336, %v352
        %v405 = vmul.f32 %v337, %v352
        %v406 = vmul.f32 %v338, %v352
        %v407 = vmul.f32 %v339, %v352
        %v408 = vmul.f32 %v340, %v352
        %v409 = vmul.f32 %v341, %v352
        %v410 = vmul.f32 %v342, %v352
        %v411 = vmul.f32 %v343, %v352
        %v412 = vmul.f32 %v344, %v352
        %v413 = vmul.f32 %v345, %v352
        %v414 = vmul.f32 %v346, %v352
        %v415 = vmul.f32 %v347, %v352
        %v416 = vmul.f32 %v348, %v352
        %v417 = vadd.f32 %v353, 0.0
        %v418 = vadd.f32 %v354, 0.0
        %v419 = vadd.f32 %v355, 0.0
        %v420 = vadd.f32 %v356, 0.0
        %v421 = vadd.f32 %v357, 0.0
        %v422 = vadd.f32 %v358, 0.0
        %v423 = vadd.f32 %v359, 0.0
        %v424 = vadd.f32 %v360, 0.0
        %v425 = vadd.f32 %v361, 0.0
        %v426 = vadd.f32 %v362, 0.0
        %v427 = vadd.f32 %v363, 0.0
        %v428 = vadd.f32 %v364, 0.0
        %v429 = vadd.f32 %v365, 0.0
        %v430 = vadd.f32 %v366, 0.0
        %v431 = vadd.f32 %v367, 0.0
        %v432 = vadd.f32 %v368, 0.0
        %v433 = vadd.f32 %v369, 0.0
        %v434 = vadd.f32 %v370, 0.0
        %v435 = vadd.f32 %v371, 0.0
        %v436 = vadd.f32 %v372, 0.0
        %v437 = vadd.f32 %v373, 0.0
        %v438 = vadd.f32 %v374, 0.0
        %v439 = vadd.f32 %v375, 0.0
        %v440 = vadd.f32 %v376, 0.0
        %v441 = vadd.f32 %v377, 0.0
        %v442 = vadd.f32 %v378, 0.0
        %v443 = vadd.f32 %v379, 0.0
        %v444 = vadd.f32 %v380, 0.0
        %v445 = vadd.f32 %v381, 0.0
        %v446 = vadd.f32 %v382, 0.0
        %v447 = vadd.f32 %v383, 0.0
        %v448 = vadd.f32 %v384, 0.0
        %v449 = vadd.f32 %v385, 0.0
        %v450 = vadd.f32 %v386, 0.0
        %v451 = vadd.f32 %v387, 0.0
        %v452 = vadd.f32 %v388, 0.0
        %v453 = vadd.f32 %v389, 0.0
        %v454 = vadd.f32 %v390, 0.0
        %v455 = vadd.f32 %v391, 0.0
        %v456 = vadd.f32 %v392, 0.0
        %v457 = vadd.f32 %v393, 0.0
        %v458 = vadd.f32 %v394, 0.0
        %v459 = vadd.f32 %v395, 0.0
        %v460 = vadd.f32 %v396, 0.0
        %v461 = vadd.f32 %v397, 0.0
        %v462 = vadd.f32 %v398, 0.0
        %v463 = vadd.f32 %v399, 0.0
        %v464 = vadd.f32 %v400, 0.0
        %v465 = vadd.f32 %v401, 0.0
        %v466 = vadd.f32 %v402, 0.0
        %v467 = vadd.f32 %v403, 0.0
        %v468 = vadd.f32 %v404, 0.0
        %v469 = vadd.f32 %v405, 0.0
        %v470 = vadd.f32 %v406, 0.0
        %v471 = vadd.f32 %v407, 0.0
        %v472 = vadd.f32 %v408, 0.0
        %v473 = vadd.f32 %v409, 0.0
        %v474 = vadd.f32 %v410, 0.0
        %v475 = vadd.f32 %v411, 0.0
        %v476 = vadd.f32 %v412, 0.0
        %v477 = vadd.f32 %v413, 0.0
        %v478 = vadd.f32 %v414, 0.0
        %v479 = vadd.f32 %v415, 0.0
        %v480 = vadd.f32 %v416, 0.0
        %v481 = vld [vmem:[%s280 + $0x1] sm:$0xff]
        %v482 = vld [vmem:[%s280 + $0x9] sm:$0xff]
        %v483 = vld [vmem:[%s280 + $0x19] sm:$0xff]
        %v484 = vld [vmem:[%s280 + $0x21] sm:$0xff]
        %v485 = vld [vmem:[%s280 + $0x31] sm:$0xff]
        %v486 = vld [vmem:[%s280 + $0x39] sm:$0xff]
        %v487 = vld [vmem:[%s280 + $0x49] sm:$0xff]
        %v488 = vld [vmem:[%s280 + $0x51] sm:$0xff]
        %v489 = vld [vmem:[%s280 + $0x61] sm:$0xff]
        %v490 = vld [vmem:[%s280 + $0x69] sm:$0xff]
        %v491 = vld [vmem:[%s280 + $0x79] sm:$0xff]
        %v492 = vld [vmem:[%s280 + $0x81] sm:$0xff]
        %v493 = vld [vmem:[%s280 + $0x91] sm:$0xff]
        %v494 = vld [vmem:[%s280 + $0x99] sm:$0xff]
        %v495 = vld [vmem:[%s280 + $0xa9] sm:$0xff]
        %v496 = vld [vmem:[%s280 + $0xb1] sm:$0xff]
        %v497 = vld [vmem:[%s280 + $0xc1] sm:$0xff]
        %v498 = vld [vmem:[%s280 + $0xc9] sm:$0xff]
        %v499 = vld [vmem:[%s280 + $0xd9] sm:$0xff]
        %v500 = vld [vmem:[%s280 + $0xe1] sm:$0xff]
        %v501 = vld [vmem:[%s280 + $0xf1] sm:$0xff]
        %v502 = vld [vmem:[%s280 + $0xf9] sm:$0xff]
        %v503 = vld [vmem:[%s280 + $0x109] sm:$0xff]
        %v504 = vld [vmem:[%s280 + $0x111] sm:$0xff]
        %v505 = vld [vmem:[%s280 + $0x121] sm:$0xff]
        %v506 = vld [vmem:[%s280 + $0x129] sm:$0xff]
        %v507 = vld [vmem:[%s280 + $0x139] sm:$0xff]
        %v508 = vld [vmem:[%s280 + $0x141] sm:$0xff]
        %v509 = vld [vmem:[%s280 + $0x151] sm:$0xff]
        %v510 = vld [vmem:[%s280 + $0x159] sm:$0xff]
        %v511 = vld [vmem:[%s280 + $0x169] sm:$0xff]
        %v512 = vld [vmem:[%s280 + $0x171] sm:$0xff]
        %v513 = vld [vmem:[%s280 + $0x1b1] sm:$0xff]
        %v514 = vld [vmem:[%s280 + $0x1b9] sm:$0xff]
        %v515 = vld [vmem:[%s280 + $0x1c9] sm:$0xff]
        %v516 = vld [vmem:[%s280 + $0x1d1] sm:$0xff]
        %v517 = vld [vmem:[%s280 + $0x1e1] sm:$0xff]
        %v518 = vld [vmem:[%s280 + $0x1e9] sm:$0xff]
        %v519 = vld [vmem:[%s280 + $0x1f9] sm:$0xff]
        %v520 = vld [vmem:[%s280 + $0x201] sm:$0xff]
        %v521 = vld [vmem:[%s280 + $0x211] sm:$0xff]
        %v522 = vld [vmem:[%s280 + $0x219] sm:$0xff]
        %v523 = vld [vmem:[%s280 + $0x229] sm:$0xff]
        %v524 = vld [vmem:[%s280 + $0x231] sm:$0xff]
        %v525 = vld [vmem:[%s280 + $0x241] sm:$0xff]
        %v526 = vld [vmem:[%s280 + $0x249] sm:$0xff]
        %v527 = vld [vmem:[%s280 + $0x259] sm:$0xff]
        %v528 = vld [vmem:[%s280 + $0x261] sm:$0xff]
        %v529 = vld [vmem:[%s280 + $0x271] sm:$0xff]
        %v530 = vld [vmem:[%s280 + $0x279] sm:$0xff]
        %v531 = vld [vmem:[%s280 + $0x289] sm:$0xff]
        %v532 = vld [vmem:[%s280 + $0x291] sm:$0xff]
        %v533 = vld [vmem:[%s280 + $0x2a1] sm:$0xff]
        %v534 = vld [vmem:[%s280 + $0x2a9] sm:$0xff]
        %v535 = vld [vmem:[%s280 + $0x2b9] sm:$0xff]
        %v536 = vld [vmem:[%s280 + $0x2c1] sm:$0xff]
        %v537 = vld [vmem:[%s280 + $0x2d1] sm:$0xff]
        %v538 = vld [vmem:[%s280 + $0x2d9] sm:$0xff]
        %v539 = vld [vmem:[%s280 + $0x2e9] sm:$0xff]
        %v540 = vld [vmem:[%s280 + $0x2f1] sm:$0xff]
        %v541 = vld [vmem:[%s280 + $0x301] sm:$0xff]
        %v542 = vld [vmem:[%s280 + $0x309] sm:$0xff]
        %v543 = vld [vmem:[%s280 + $0x319] sm:$0xff]
        %v544 = vld [vmem:[%s280 + $0x321] sm:$0xff]
        %v545 = vlaneseq
        %v546 = vshrl.u32 %v545, 7
        %v547 = vsub.s32 1, %v546
        %v548 = vrot.slane %v283, %v547
        %v549 = vmul.f32 %v481, %v548
        %v550 = vmul.f32 %v482, %v548
        %v551 = vmul.f32 %v483, %v548
        %v552 = vmul.f32 %v484, %v548
        %v553 = vmul.f32 %v485, %v548
        %v554 = vmul.f32 %v486, %v548
        %v555 = vmul.f32 %v487, %v548
        %v556 = vmul.f32 %v488, %v548
        %v557 = vmul.f32 %v489, %v548
        %v558 = vmul.f32 %v490, %v548
        %v559 = vmul.f32 %v491, %v548
        %v560 = vmul.f32 %v492, %v548
        %v561 = vmul.f32 %v493, %v548
        %v562 = vmul.f32 %v494, %v548
        %v563 = vmul.f32 %v495, %v548
        %v564 = vmul.f32 %v496, %v548
        %v565 = vmul.f32 %v497, %v548
        %v566 = vmul.f32 %v498, %v548
        %v567 = vmul.f32 %v499, %v548
        %v568 = vmul.f32 %v500, %v548
        %v569 = vmul.f32 %v501, %v548
        %v570 = vmul.f32 %v502, %v548
        %v571 = vmul.f32 %v503, %v548
        %v572 = vmul.f32 %v504, %v548
        %v573 = vmul.f32 %v505, %v548
        %v574 = vmul.f32 %v506, %v548
        %v575 = vmul.f32 %v507, %v548
        %v576 = vmul.f32 %v508, %v548
        %v577 = vmul.f32 %v509, %v548
        %v578 = vmul.f32 %v510, %v548
        %v579 = vmul.f32 %v511, %v548
        %v580 = vmul.f32 %v512, %v548
        %v581 = vmul.f32 %v513, %v548
        %v582 = vmul.f32 %v514, %v548
        %v583 = vmul.f32 %v515, %v548
        %v584 = vmul.f32 %v516, %v548
        %v585 = vmul.f32 %v517, %v548
        %v586 = vmul.f32 %v518, %v548
        %v587 = vmul.f32 %v519, %v548
        %v588 = vmul.f32 %v520, %v548
        %v589 = vmul.f32 %v521, %v548
        %v590 = vmul.f32 %v522, %v548
        %v591 = vmul.f32 %v523, %v548
        %v592 = vmul.f32 %v524, %v548
        %v593 = vmul.f32 %v525, %v548
        %v594 = vmul.f32 %v526, %v548
        %v595 = vmul.f32 %v527, %v548
        %v596 = vmul.f32 %v528, %v548
        %v597 = vmul.f32 %v529, %v548
        %v598 = vmul.f32 %v530, %v548
        %v599 = vmul.f32 %v531, %v548
        %v600 = vmul.f32 %v532, %v548
        %v601 = vmul.f32 %v533, %v548
        %v602 = vmul.f32 %v534, %v548
        %v603 = vmul.f32 %v535, %v548
        %v604 = vmul.f32 %v536, %v548
        %v605 = vmul.f32 %v537, %v548
        %v606 = vmul.f32 %v538, %v548
        %v607 = vmul.f32 %v539, %v548
        %v608 = vmul.f32 %v540, %v548
        %v609 = vmul.f32 %v541, %v548
        %v610 = vmul.f32 %v542, %v548
        %v611 = vmul.f32 %v543, %v548
        %v612 = vmul.f32 %v544, %v548
        %v613 = vadd.f32 %v417, %v549
        %v614 = vadd.f32 %v418, %v550
        %v615 = vadd.f32 %v419, %v551
        %v616 = vadd.f32 %v420, %v552
        %v617 = vadd.f32 %v421, %v553
        %v618 = vadd.f32 %v422, %v554
        %v619 = vadd.f32 %v423, %v555
        %v620 = vadd.f32 %v424, %v556
        %v621 = vadd.f32 %v425, %v557
        %v622 = vadd.f32 %v426, %v558
        %v623 = vadd.f32 %v427, %v559
        %v624 = vadd.f32 %v428, %v560
        %v625 = vadd.f32 %v429, %v561
        %v626 = vadd.f32 %v430, %v562
        %v627 = vadd.f32 %v431, %v563
        %v628 = vadd.f32 %v432, %v564
        %v629 = vadd.f32 %v433, %v565
        %v630 = vadd.f32 %v434, %v566
        %v631 = vadd.f32 %v435, %v567
        %v632 = vadd.f32 %v436, %v568
        %v633 = vadd.f32 %v437, %v569
        %v634 = vadd.f32 %v438, %v570
        %v635 = vadd.f32 %v439, %v571
        %v636 = vadd.f32 %v440, %v572
        %v637 = vadd.f32 %v441, %v573
        %v638 = vadd.f32 %v442, %v574
        %v639 = vadd.f32 %v443, %v575
        %v640 = vadd.f32 %v444, %v576
        %v641 = vadd.f32 %v445, %v577
        %v642 = vadd.f32 %v446, %v578
        %v643 = vadd.f32 %v447, %v579
        %v644 = vadd.f32 %v448, %v580
        %v645 = vadd.f32 %v449, %v581
        %v646 = vadd.f32 %v450, %v582
        %v647 = vadd.f32 %v451, %v583
        %v648 = vadd.f32 %v452, %v584
        %v649 = vadd.f32 %v453, %v585
        %v650 = vadd.f32 %v454, %v586
        %v651 = vadd.f32 %v455, %v587
        %v652 = vadd.f32 %v456, %v588
        %v653 = vadd.f32 %v457, %v589
        %v654 = vadd.f32 %v458, %v590
        %v655 = vadd.f32 %v459, %v591
        %v656 = vadd.f32 %v460, %v592
        %v657 = vadd.f32 %v461, %v593
        %v658 = vadd.f32 %v462, %v594
        %v659 = vadd.f32 %v463, %v595
        %v660 = vadd.f32 %v464, %v596
        %v661 = vadd.f32 %v465, %v597
        %v662 = vadd.f32 %v466, %v598
        %v663 = vadd.f32 %v467, %v599
        %v664 = vadd.f32 %v468, %v600
        %v665 = vadd.f32 %v469, %v601
        %v666 = vadd.f32 %v470, %v602
        %v667 = vadd.f32 %v471, %v603
        %v668 = vadd.f32 %v472, %v604
        %v669 = vadd.f32 %v473, %v605
        %v670 = vadd.f32 %v474, %v606
        %v671 = vadd.f32 %v475, %v607
        %v672 = vadd.f32 %v476, %v608
        %v673 = vadd.f32 %v477, %v609
        %v674 = vadd.f32 %v478, %v610
        %v675 = vadd.f32 %v479, %v611
        %v676 = vadd.f32 %v480, %v612
        %v677 = vld [vmem:[%s280 + $0x2] sm:$0xff]
        %v678 = vld [vmem:[%s280 + $0xa] sm:$0xff]
        %v679 = vld [vmem:[%s280 + $0x1a] sm:$0xff]
        %v680 = vld [vmem:[%s280 + $0x22] sm:$0xff]
        %v681 = vld [vmem:[%s280 + $0x32] sm:$0xff]
        %v682 = vld [vmem:[%s280 + $0x3a] sm:$0xff]
        %v683 = vld [vmem:[%s280 + $0x4a] sm:$0xff]
        %v684 = vld [vmem:[%s280 + $0x52] sm:$0xff]
        %v685 = vld [vmem:[%s280 + $0x62] sm:$0xff]
        %v686 = vld [vmem:[%s280 + $0x6a] sm:$0xff]
        %v687 = vld [vmem:[%s280 + $0x7a] sm:$0xff]
        %v688 = vld [vmem:[%s280 + $0x82] sm:$0xff]
        %v689 = vld [vmem:[%s280 + $0x92] sm:$0xff]
        %v690 = vld [vmem:[%s280 + $0x9a] sm:$0xff]
        %v691 = vld [vmem:[%s280 + $0xaa] sm:$0xff]
        %v692 = vld [vmem:[%s280 + $0xb2] sm:$0xff]
        %v693 = vld [vmem:[%s280 + $0xc2] sm:$0xff]
        %v694 = vld [vmem:[%s280 + $0xca] sm:$0xff]
        %v695 = vld [vmem:[%s280 + $0xda] sm:$0xff]
        %v696 = vld [vmem:[%s280 + $0xe2] sm:$0xff]
        %v697 = vld [vmem:[%s280 + $0xf2] sm:$0xff]
        %v698 = vld [vmem:[%s280 + $0xfa] sm:$0xff]
        %v699 = vld [vmem:[%s280 + $0x10a] sm:$0xff]
        %v700 = vld [vmem:[%s280 + $0x112] sm:$0xff]
        %v701 = vld [vmem:[%s280 + $0x122] sm:$0xff]
        %v702 = vld [vmem:[%s280 + $0x12a] sm:$0xff]
        %v703 = vld [vmem:[%s280 + $0x13a] sm:$0xff]
        %v704 = vld [vmem:[%s280 + $0x142] sm:$0xff]
        %v705 = vld [vmem:[%s280 + $0x152] sm:$0xff]
        %v706 = vld [vmem:[%s280 + $0x15a] sm:$0xff]
        %v707 = vld [vmem:[%s280 + $0x16a] sm:$0xff]
        %v708 = vld [vmem:[%s280 + $0x172] sm:$0xff]
        %v709 = vld [vmem:[%s280 + $0x1b2] sm:$0xff]
        %v710 = vld [vmem:[%s280 + $0x1ba] sm:$0xff]
        %v711 = vld [vmem:[%s280 + $0x1ca] sm:$0xff]
        %v712 = vld [vmem:[%s280 + $0x1d2] sm:$0xff]
        %v713 = vld [vmem:[%s280 + $0x1e2] sm:$0xff]
        %v714 = vld [vmem:[%s280 + $0x1ea] sm:$0xff]
        %v715 = vld [vmem:[%s280 + $0x1fa] sm:$0xff]
        %v716 = vld [vmem:[%s280 + $0x202] sm:$0xff]
        %v717 = vld [vmem:[%s280 + $0x212] sm:$0xff]
        %v718 = vld [vmem:[%s280 + $0x21a] sm:$0xff]
        %v719 = vld [vmem:[%s280 + $0x22a] sm:$0xff]
        %v720 = vld [vmem:[%s280 + $0x232] sm:$0xff]
        %v721 = vld [vmem:[%s280 + $0x242] sm:$0xff]
        %v722 = vld [vmem:[%s280 + $0x24a] sm:$0xff]
        %v723 = vld [vmem:[%s280 + $0x25a] sm:$0xff]
        %v724 = vld [vmem:[%s280 + $0x262] sm:$0xff]
        %v725 = vld [vmem:[%s280 + $0x272] sm:$0xff]
        %v726 = vld [vmem:[%s280 + $0x27a] sm:$0xff]
        %v727 = vld [vmem:[%s280 + $0x28a] sm:$0xff]
        %v728 = vld [vmem:[%s280 + $0x292] sm:$0xff]
        %v729 = vld [vmem:[%s280 + $0x2a2] sm:$0xff]
        %v730 = vld [vmem:[%s280 + $0x2aa] sm:$0xff]
        %v731 = vld [vmem:[%s280 + $0x2ba] sm:$0xff]
        %v732 = vld [vmem:[%s280 + $0x2c2] sm:$0xff]
        %v733 = vld [vmem:[%s280 + $0x2d2] sm:$0xff]
        %v734 = vld [vmem:[%s280 + $0x2da] sm:$0xff]
        %v735 = vld [vmem:[%s280 + $0x2ea] sm:$0xff]
        %v736 = vld [vmem:[%s280 + $0x2f2] sm:$0xff]
        %v737 = vld [vmem:[%s280 + $0x302] sm:$0xff]
        %v738 = vld [vmem:[%s280 + $0x30a] sm:$0xff]
        %v739 = vld [vmem:[%s280 + $0x31a] sm:$0xff]
        %v740 = vld [vmem:[%s280 + $0x322] sm:$0xff]
        %v741 = vlaneseq
        %v742 = vshrl.u32 %v741, 7
        %v743 = vsub.s32 2, %v742
        %v744 = vrot.slane %v283, %v743
        %v745 = vmul.f32 %v677, %v744
        %v746 = vmul.f32 %v678, %v744
        %v747 = vmul.f32 %v679, %v744
        %v748 = vmul.f32 %v680, %v744
        %v749 = vmul.f32 %v681, %v744
        %v750 = vmul.f32 %v682, %v744
        %v751 = vmul.f32 %v683, %v744
        %v752 = vmul.f32 %v684, %v744
        %v753 = vmul.f32 %v685, %v744
        %v754 = vmul.f32 %v686, %v744
        %v755 = vmul.f32 %v687, %v744
        %v756 = vmul.f32 %v688, %v744
        %v757 = vmul.f32 %v689, %v744
        %v758 = vmul.f32 %v690, %v744
        %v759 = vmul.f32 %v691, %v744
        %v760 = vmul.f32 %v692, %v744
        %v761 = vmul.f32 %v693, %v744
        %v762 = vmul.f32 %v694, %v744
        %v763 = vmul.f32 %v695, %v744
        %v764 = vmul.f32 %v696, %v744
        %v765 = vmul.f32 %v697, %v744
        %v766 = vmul.f32 %v698, %v744
        %v767 = vmul.f32 %v699, %v744
        %v768 = vmul.f32 %v700, %v744
        %v769 = vmul.f32 %v701, %v744
        %v770 = vmul.f32 %v702, %v744
        %v771 = vmul.f32 %v703, %v744
        %v772 = vmul.f32 %v704, %v744
        %v773 = vmul.f32 %v705, %v744
        %v774 = vmul.f32 %v706, %v744
        %v775 = vmul.f32 %v707, %v744
        %v776 = vmul.f32 %v708, %v744
        %v777 = vmul.f32 %v709, %v744
        %v778 = vmul.f32 %v710, %v744
        %v779 = vmul.f32 %v711, %v744
        %v780 = vmul.f32 %v712, %v744
        %v781 = vmul.f32 %v713, %v744
        %v782 = vmul.f32 %v714, %v744
        %v783 = vmul.f32 %v715, %v744
        %v784 = vmul.f32 %v716, %v744
        %v785 = vmul.f32 %v717, %v744
        %v786 = vmul.f32 %v718, %v744
        %v787 = vmul.f32 %v719, %v744
        %v788 = vmul.f32 %v720, %v744
        %v789 = vmul.f32 %v721, %v744
        %v790 = vmul.f32 %v722, %v744
        %v791 = vmul.f32 %v723, %v744
        %v792 = vmul.f32 %v724, %v744
        %v793 = vmul.f32 %v725, %v744
        %v794 = vmul.f32 %v726, %v744
        %v795 = vmul.f32 %v727, %v744
        %v796 = vmul.f32 %v728, %v744
        %v797 = vmul.f32 %v729, %v744
        %v798 = vmul.f32 %v730, %v744
        %v799 = vmul.f32 %v731, %v744
        %v800 = vmul.f32 %v732, %v744
        %v801 = vmul.f32 %v733, %v744
        %v802 = vmul.f32 %v734, %v744
        %v803 = vmul.f32 %v735, %v744
        %v804 = vmul.f32 %v736, %v744
        %v805 = vmul.f32 %v737, %v744
        %v806 = vmul.f32 %v738, %v744
        %v807 = vmul.f32 %v739, %v744
        %v808 = vmul.f32 %v740, %v744
        %v809 = vadd.f32 %v613, %v745
        %v810 = vadd.f32 %v614, %v746
        %v811 = vadd.f32 %v615, %v747
        %v812 = vadd.f32 %v616, %v748
        %v813 = vadd.f32 %v617, %v749
        %v814 = vadd.f32 %v618, %v750
        %v815 = vadd.f32 %v619, %v751
        %v816 = vadd.f32 %v620, %v752
        %v817 = vadd.f32 %v621, %v753
        %v818 = vadd.f32 %v622, %v754
        %v819 = vadd.f32 %v623, %v755
        %v820 = vadd.f32 %v624, %v756
        %v821 = vadd.f32 %v625, %v757
        %v822 = vadd.f32 %v626, %v758
        %v823 = vadd.f32 %v627, %v759
        %v824 = vadd.f32 %v628, %v760
        %v825 = vadd.f32 %v629, %v761
        %v826 = vadd.f32 %v630, %v762
        %v827 = vadd.f32 %v631, %v763
        %v828 = vadd.f32 %v632, %v764
        %v829 = vadd.f32 %v633, %v765
        %v830 = vadd.f32 %v634, %v766
        %v831 = vadd.f32 %v635, %v767
        %v832 = vadd.f32 %v636, %v768
        %v833 = vadd.f32 %v637, %v769
        %v834 = vadd.f32 %v638, %v770
        %v835 = vadd.f32 %v639, %v771
        %v836 = vadd.f32 %v640, %v772
        %v837 = vadd.f32 %v641, %v773
        %v838 = vadd.f32 %v642, %v774
        %v839 = vadd.f32 %v643, %v775
        %v840 = vadd.f32 %v644, %v776
        %v841 = vadd.f32 %v645, %v777
        %v842 = vadd.f32 %v646, %v778
        %v843 = vadd.f32 %v647, %v779
        %v844 = vadd.f32 %v648, %v780
        %v845 = vadd.f32 %v649, %v781
        %v846 = vadd.f32 %v650, %v782
        %v847 = vadd.f32 %v651, %v783
        %v848 = vadd.f32 %v652, %v784
        %v849 = vadd.f32 %v653, %v785
        %v850 = vadd.f32 %v654, %v786
        %v851 = vadd.f32 %v655, %v787
        %v852 = vadd.f32 %v656, %v788
        %v853 = vadd.f32 %v657, %v789
        %v854 = vadd.f32 %v658, %v790
        %v855 = vadd.f32 %v659, %v791
        %v856 = vadd.f32 %v660, %v792
        %v857 = vadd.f32 %v661, %v793
        %v858 = vadd.f32 %v662, %v794
        %v859 = vadd.f32 %v663, %v795
        %v860 = vadd.f32 %v664, %v796
        %v861 = vadd.f32 %v665, %v797
        %v862 = vadd.f32 %v666, %v798
        %v863 = vadd.f32 %v667, %v799
        %v864 = vadd.f32 %v668, %v800
        %v865 = vadd.f32 %v669, %v801
        %v866 = vadd.f32 %v670, %v802
        %v867 = vadd.f32 %v671, %v803
        %v868 = vadd.f32 %v672, %v804
        %v869 = vadd.f32 %v673, %v805
        %v870 = vadd.f32 %v674, %v806
        %v871 = vadd.f32 %v675, %v807
        %v872 = vadd.f32 %v676, %v808
        %s873 = scalar_lea.vmem %s280, 24
        %v874 = vld [vmem:[%s873] sm:$0xff]
        %v875 = vld [vmem:[%s873 + $0x8] sm:$0xff]
        %v876 = vld [vmem:[%s873 + $0x18] sm:$0xff]
        %v877 = vld [vmem:[%s873 + $0x20] sm:$0xff]
        %v878 = vld [vmem:[%s873 + $0x30] sm:$0xff]
        %v879 = vld [vmem:[%s873 + $0x38] sm:$0xff]
        %v880 = vld [vmem:[%s873 + $0x48] sm:$0xff]
        %v881 = vld [vmem:[%s873 + $0x50] sm:$0xff]
        %v882 = vld [vmem:[%s873 + $0x60] sm:$0xff]
        %v883 = vld [vmem:[%s873 + $0x68] sm:$0xff]
        %v884 = vld [vmem:[%s873 + $0x78] sm:$0xff]
        %v885 = vld [vmem:[%s873 + $0x80] sm:$0xff]
        %v886 = vld [vmem:[%s873 + $0x90] sm:$0xff]
        %v887 = vld [vmem:[%s873 + $0x98] sm:$0xff]
        %v888 = vld [vmem:[%s873 + $0xa8] sm:$0xff]
        %v889 = vld [vmem:[%s873 + $0xb0] sm:$0xff]
        %v890 = vld [vmem:[%s873 + $0xc0] sm:$0xff]
        %v891 = vld [vmem:[%s873 + $0xc8] sm:$0xff]
        %v892 = vld [vmem:[%s873 + $0xd8] sm:$0xff]
        %v893 = vld [vmem:[%s873 + $0xe0] sm:$0xff]
        %v894 = vld [vmem:[%s873 + $0xf0] sm:$0xff]
        %v895 = vld [vmem:[%s873 + $0xf8] sm:$0xff]
        %v896 = vld [vmem:[%s873 + $0x108] sm:$0xff]
        %v897 = vld [vmem:[%s873 + $0x110] sm:$0xff]
        %v898 = vld [vmem:[%s873 + $0x120] sm:$0xff]
        %v899 = vld [vmem:[%s873 + $0x128] sm:$0xff]
        %v900 = vld [vmem:[%s873 + $0x138] sm:$0xff]
        %v901 = vld [vmem:[%s873 + $0x140] sm:$0xff]
        %v902 = vld [vmem:[%s873 + $0x150] sm:$0xff]
        %v903 = vld [vmem:[%s873 + $0x158] sm:$0xff]
        %v904 = vld [vmem:[%s873 + $0x168] sm:$0xff]
        %v905 = vld [vmem:[%s873 + $0x170] sm:$0xff]
        %v906 = vld [vmem:[%s873 + $0x1b0] sm:$0xff]
        %v907 = vld [vmem:[%s873 + $0x1b8] sm:$0xff]
        %v908 = vld [vmem:[%s873 + $0x1c8] sm:$0xff]
        %v909 = vld [vmem:[%s873 + $0x1d0] sm:$0xff]
        %v910 = vld [vmem:[%s873 + $0x1e0] sm:$0xff]
        %v911 = vld [vmem:[%s873 + $0x1e8] sm:$0xff]
        %v912 = vld [vmem:[%s873 + $0x1f8] sm:$0xff]
        %v913 = vld [vmem:[%s873 + $0x200] sm:$0xff]
        %v914 = vld [vmem:[%s873 + $0x210] sm:$0xff]
        %v915 = vld [vmem:[%s873 + $0x218] sm:$0xff]
        %v916 = vld [vmem:[%s873 + $0x228] sm:$0xff]
        %v917 = vld [vmem:[%s873 + $0x230] sm:$0xff]
        %v918 = vld [vmem:[%s873 + $0x240] sm:$0xff]
        %v919 = vld [vmem:[%s873 + $0x248] sm:$0xff]
        %v920 = vld [vmem:[%s873 + $0x258] sm:$0xff]
        %v921 = vld [vmem:[%s873 + $0x260] sm:$0xff]
        %v922 = vld [vmem:[%s873 + $0x270] sm:$0xff]
        %v923 = vld [vmem:[%s873 + $0x278] sm:$0xff]
        %v924 = vld [vmem:[%s873 + $0x288] sm:$0xff]
        %v925 = vld [vmem:[%s873 + $0x290] sm:$0xff]
        %v926 = vld [vmem:[%s873 + $0x2a0] sm:$0xff]
        %v927 = vld [vmem:[%s873 + $0x2a8] sm:$0xff]
        %v928 = vld [vmem:[%s873 + $0x2b8] sm:$0xff]
        %v929 = vld [vmem:[%s873 + $0x2c0] sm:$0xff]
        %v930 = vld [vmem:[%s873 + $0x2d0] sm:$0xff]
        %v931 = vld [vmem:[%s873 + $0x2d8] sm:$0xff]
        %v932 = vld [vmem:[%s873 + $0x2e8] sm:$0xff]
        %v933 = vld [vmem:[%s873 + $0x2f0] sm:$0xff]
        %v934 = vld [vmem:[%s873 + $0x300] sm:$0xff]
        %v935 = vld [vmem:[%s873 + $0x308] sm:$0xff]
        %v936 = vld [vmem:[%s873 + $0x318] sm:$0xff]
        %v937 = vld [vmem:[%s873 + $0x320] sm:$0xff]
        %v938 = vlaneseq
        %v939 = vshrl.u32 %v938, 7
        %v940 = vsub.s32 3, %v939
        %v941 = vrot.slane %v283, %v940
        %v942 = vmul.f32 %v874, %v941
        %v943 = vmul.f32 %v875, %v941
        %v944 = vmul.f32 %v876, %v941
        %v945 = vmul.f32 %v877, %v941
        %v946 = vmul.f32 %v878, %v941
        %v947 = vmul.f32 %v879, %v941
        %v948 = vmul.f32 %v880, %v941
        %v949 = vmul.f32 %v881, %v941
        %v950 = vmul.f32 %v882, %v941
        %v951 = vmul.f32 %v883, %v941
        %v952 = vmul.f32 %v884, %v941
        %v953 = vmul.f32 %v885, %v941
        %v954 = vmul.f32 %v886, %v941
        %v955 = vmul.f32 %v887, %v941
        %v956 = vmul.f32 %v888, %v941
        %v957 = vmul.f32 %v889, %v941
        %v958 = vmul.f32 %v890, %v941
        %v959 = vmul.f32 %v891, %v941
        %v960 = vmul.f32 %v892, %v941
        %v961 = vmul.f32 %v893, %v941
        %v962 = vmul.f32 %v894, %v941
        %v963 = vmul.f32 %v895, %v941
        %v964 = vmul.f32 %v896, %v941
        %v965 = vmul.f32 %v897, %v941
        %v966 = vmul.f32 %v898, %v941
        %v967 = vmul.f32 %v899, %v941
        %v968 = vmul.f32 %v900, %v941
        %v969 = vmul.f32 %v901, %v941
        %v970 = vmul.f32 %v902, %v941
        %v971 = vmul.f32 %v903, %v941
        %v972 = vmul.f32 %v904, %v941
        %v973 = vmul.f32 %v905, %v941
        %v974 = vmul.f32 %v906, %v941
        %v975 = vmul.f32 %v907, %v941
        %v976 = vmul.f32 %v908, %v941
        %v977 = vmul.f32 %v909, %v941
        %v978 = vmul.f32 %v910, %v941
        %v979 = vmul.f32 %v911, %v941
        %v980 = vmul.f32 %v912, %v941
        %v981 = vmul.f32 %v913, %v941
        %v982 = vmul.f32 %v914, %v941
        %v983 = vmul.f32 %v915, %v941
        %v984 = vmul.f32 %v916, %v941
        %v985 = vmul.f32 %v917, %v941
        %v986 = vmul.f32 %v918, %v941
        %v987 = vmul.f32 %v919, %v941
        %v988 = vmul.f32 %v920, %v941
        %v989 = vmul.f32 %v921, %v941
        %v990 = vmul.f32 %v922, %v941
        %v991 = vmul.f32 %v923, %v941
        %v992 = vmul.f32 %v924, %v941
        %v993 = vmul.f32 %v925, %v941
        %v994 = vmul.f32 %v926, %v941
        %v995 = vmul.f32 %v927, %v941
        %v996 = vmul.f32 %v928, %v941
        %v997 = vmul.f32 %v929, %v941
        %v998 = vmul.f32 %v930, %v941
        %v999 = vmul.f32 %v931, %v941
        %v1000 = vmul.f32 %v932, %v941
        %v1001 = vmul.f32 %v933, %v941
        %v1002 = vmul.f32 %v934, %v941
        %v1003 = vmul.f32 %v935, %v941
        %v1004 = vmul.f32 %v936, %v941
        %v1005 = vmul.f32 %v937, %v941
        %v1006 = vadd.f32 %v809, %v942
        %v1007 = vadd.f32 %v810, %v943
        %v1008 = vadd.f32 %v811, %v944
        %v1009 = vadd.f32 %v812, %v945
        %v1010 = vadd.f32 %v813, %v946
        %v1011 = vadd.f32 %v814, %v947
        %v1012 = vadd.f32 %v815, %v948
        %v1013 = vadd.f32 %v816, %v949
        %v1014 = vadd.f32 %v817, %v950
        %v1015 = vadd.f32 %v818, %v951
        %v1016 = vadd.f32 %v819, %v952
        %v1017 = vadd.f32 %v820, %v953
        %v1018 = vadd.f32 %v821, %v954
        %v1019 = vadd.f32 %v822, %v955
        %v1020 = vadd.f32 %v823, %v956
        %v1021 = vadd.f32 %v824, %v957
        %v1022 = vadd.f32 %v825, %v958
        %v1023 = vadd.f32 %v826, %v959
        %v1024 = vadd.f32 %v827, %v960
        %v1025 = vadd.f32 %v828, %v961
        %v1026 = vadd.f32 %v829, %v962
        %v1027 = vadd.f32 %v830, %v963
        %v1028 = vadd.f32 %v831, %v964
        %v1029 = vadd.f32 %v832, %v965
        %v1030 = vadd.f32 %v833, %v966
        %v1031 = vadd.f32 %v834, %v967
        %v1032 = vadd.f32 %v835, %v968
        %v1033 = vadd.f32 %v836, %v969
        %v1034 = vadd.f32 %v837, %v970
        %v1035 = vadd.f32 %v838, %v971
        %v1036 = vadd.f32 %v839, %v972
        %v1037 = vadd.f32 %v840, %v973
        %v1038 = vadd.f32 %v841, %v974
        %v1039 = vadd.f32 %v842, %v975
        %v1040 = vadd.f32 %v843, %v976
        %v1041 = vadd.f32 %v844, %v977
        %v1042 = vadd.f32 %v845, %v978
        %v1043 = vadd.f32 %v846, %v979
        %v1044 = vadd.f32 %v847, %v980
        %v1045 = vadd.f32 %v848, %v981
        %v1046 = vadd.f32 %v849, %v982
        %v1047 = vadd.f32 %v850, %v983
        %v1048 = vadd.f32 %v851, %v984
        %v1049 = vadd.f32 %v852, %v985
        %v1050 = vadd.f32 %v853, %v986
        %v1051 = vadd.f32 %v854, %v987
        %v1052 = vadd.f32 %v855, %v988
        %v1053 = vadd.f32 %v856, %v989
        %v1054 = vadd.f32 %v857, %v990
        %v1055 = vadd.f32 %v858, %v991
        %v1056 = vadd.f32 %v859, %v992
        %v1057 = vadd.f32 %v860, %v993
        %v1058 = vadd.f32 %v861, %v994
        %v1059 = vadd.f32 %v862, %v995
        %v1060 = vadd.f32 %v863, %v996
        %v1061 = vadd.f32 %v864, %v997
        %v1062 = vadd.f32 %v865, %v998
        %v1063 = vadd.f32 %v866, %v999
        %v1064 = vadd.f32 %v867, %v1000
        %v1065 = vadd.f32 %v868, %v1001
        %v1066 = vadd.f32 %v869, %v1002
        %v1067 = vadd.f32 %v870, %v1003
        %v1068 = vadd.f32 %v871, %v1004
        %v1069 = vadd.f32 %v872, %v1005
        %v1070 = vld [vmem:[%s873 + $0x1] sm:$0xff]
        %v1071 = vld [vmem:[%s873 + $0x9] sm:$0xff]
        %v1072 = vld [vmem:[%s873 + $0x19] sm:$0xff]
        %v1073 = vld [vmem:[%s873 + $0x21] sm:$0xff]
        %v1074 = vld [vmem:[%s873 + $0x31] sm:$0xff]
        %v1075 = vld [vmem:[%s873 + $0x39] sm:$0xff]
        %v1076 = vld [vmem:[%s873 + $0x49] sm:$0xff]
        %v1077 = vld [vmem:[%s873 + $0x51] sm:$0xff]
        %v1078 = vld [vmem:[%s873 + $0x61] sm:$0xff]
        %v1079 = vld [vmem:[%s873 + $0x69] sm:$0xff]
        %v1080 = vld [vmem:[%s873 + $0x79] sm:$0xff]
        %v1081 = vld [vmem:[%s873 + $0x81] sm:$0xff]
        %v1082 = vld [vmem:[%s873 + $0x91] sm:$0xff]
        %v1083 = vld [vmem:[%s873 + $0x99] sm:$0xff]
        %v1084 = vld [vmem:[%s873 + $0xa9] sm:$0xff]
        %v1085 = vld [vmem:[%s873 + $0xb1] sm:$0xff]
        %v1086 = vld [vmem:[%s873 + $0xc1] sm:$0xff]
        %v1087 = vld [vmem:[%s873 + $0xc9] sm:$0xff]
        %v1088 = vld [vmem:[%s873 + $0xd9] sm:$0xff]
        %v1089 = vld [vmem:[%s873 + $0xe1] sm:$0xff]
        %v1090 = vld [vmem:[%s873 + $0xf1] sm:$0xff]
        %v1091 = vld [vmem:[%s873 + $0xf9] sm:$0xff]
        %v1092 = vld [vmem:[%s873 + $0x109] sm:$0xff]
        %v1093 = vld [vmem:[%s873 + $0x111] sm:$0xff]
        %v1094 = vld [vmem:[%s873 + $0x121] sm:$0xff]
        %v1095 = vld [vmem:[%s873 + $0x129] sm:$0xff]
        %v1096 = vld [vmem:[%s873 + $0x139] sm:$0xff]
        %v1097 = vld [vmem:[%s873 + $0x141] sm:$0xff]
        %v1098 = vld [vmem:[%s873 + $0x151] sm:$0xff]
        %v1099 = vld [vmem:[%s873 + $0x159] sm:$0xff]
        %v1100 = vld [vmem:[%s873 + $0x169] sm:$0xff]
        %v1101 = vld [vmem:[%s873 + $0x171] sm:$0xff]
        %v1102 = vld [vmem:[%s873 + $0x1b1] sm:$0xff]
        %v1103 = vld [vmem:[%s873 + $0x1b9] sm:$0xff]
        %v1104 = vld [vmem:[%s873 + $0x1c9] sm:$0xff]
        %v1105 = vld [vmem:[%s873 + $0x1d1] sm:$0xff]
        %v1106 = vld [vmem:[%s873 + $0x1e1] sm:$0xff]
        %v1107 = vld [vmem:[%s873 + $0x1e9] sm:$0xff]
        %v1108 = vld [vmem:[%s873 + $0x1f9] sm:$0xff]
        %v1109 = vld [vmem:[%s873 + $0x201] sm:$0xff]
        %v1110 = vld [vmem:[%s873 + $0x211] sm:$0xff]
        %v1111 = vld [vmem:[%s873 + $0x219] sm:$0xff]
        %v1112 = vld [vmem:[%s873 + $0x229] sm:$0xff]
        %v1113 = vld [vmem:[%s873 + $0x231] sm:$0xff]
        %v1114 = vld [vmem:[%s873 + $0x241] sm:$0xff]
        %v1115 = vld [vmem:[%s873 + $0x249] sm:$0xff]
        %v1116 = vld [vmem:[%s873 + $0x259] sm:$0xff]
        %v1117 = vld [vmem:[%s873 + $0x261] sm:$0xff]
        %v1118 = vld [vmem:[%s873 + $0x271] sm:$0xff]
        %v1119 = vld [vmem:[%s873 + $0x279] sm:$0xff]
        %v1120 = vld [vmem:[%s873 + $0x289] sm:$0xff]
        %v1121 = vld [vmem:[%s873 + $0x291] sm:$0xff]
        %v1122 = vld [vmem:[%s873 + $0x2a1] sm:$0xff]
        %v1123 = vld [vmem:[%s873 + $0x2a9] sm:$0xff]
        %v1124 = vld [vmem:[%s873 + $0x2b9] sm:$0xff]
        %v1125 = vld [vmem:[%s873 + $0x2c1] sm:$0xff]
        %v1126 = vld [vmem:[%s873 + $0x2d1] sm:$0xff]
        %v1127 = vld [vmem:[%s873 + $0x2d9] sm:$0xff]
        %v1128 = vld [vmem:[%s873 + $0x2e9] sm:$0xff]
        %v1129 = vld [vmem:[%s873 + $0x2f1] sm:$0xff]
        %v1130 = vld [vmem:[%s873 + $0x301] sm:$0xff]
        %v1131 = vld [vmem:[%s873 + $0x309] sm:$0xff]
        %v1132 = vld [vmem:[%s873 + $0x319] sm:$0xff]
        %v1133 = vld [vmem:[%s873 + $0x321] sm:$0xff]
        %v1134 = vlaneseq
        %v1135 = vshrl.u32 %v1134, 7
        %v1136 = vsub.s32 4, %v1135
        %v1137 = vrot.slane %v283, %v1136
        %v1138 = vmul.f32 %v1070, %v1137
        %v1139 = vmul.f32 %v1071, %v1137
        %v1140 = vmul.f32 %v1072, %v1137
        %v1141 = vmul.f32 %v1073, %v1137
        %v1142 = vmul.f32 %v1074, %v1137
        %v1143 = vmul.f32 %v1075, %v1137
        %v1144 = vmul.f32 %v1076, %v1137
        %v1145 = vmul.f32 %v1077, %v1137
        %v1146 = vmul.f32 %v1078, %v1137
        %v1147 = vmul.f32 %v1079, %v1137
        %v1148 = vmul.f32 %v1080, %v1137
        %v1149 = vmul.f32 %v1081, %v1137
        %v1150 = vmul.f32 %v1082, %v1137
        %v1151 = vmul.f32 %v1083, %v1137
        %v1152 = vmul.f32 %v1084, %v1137
        %v1153 = vmul.f32 %v1085, %v1137
        %v1154 = vmul.f32 %v1086, %v1137
        %v1155 = vmul.f32 %v1087, %v1137
        %v1156 = vmul.f32 %v1088, %v1137
        %v1157 = vmul.f32 %v1089, %v1137
        %v1158 = vmul.f32 %v1090, %v1137
        %v1159 = vmul.f32 %v1091, %v1137
        %v1160 = vmul.f32 %v1092, %v1137
        %v1161 = vmul.f32 %v1093, %v1137
        %v1162 = vmul.f32 %v1094, %v1137
        %v1163 = vmul.f32 %v1095, %v1137
        %v1164 = vmul.f32 %v1096, %v1137
        %v1165 = vmul.f32 %v1097, %v1137
        %v1166 = vmul.f32 %v1098, %v1137
        %v1167 = vmul.f32 %v1099, %v1137
        %v1168 = vmul.f32 %v1100, %v1137
        %v1169 = vmul.f32 %v1101, %v1137
        %v1170 = vmul.f32 %v1102, %v1137
        %v1171 = vmul.f32 %v1103, %v1137
        %v1172 = vmul.f32 %v1104, %v1137
        %v1173 = vmul.f32 %v1105, %v1137
        %v1174 = vmul.f32 %v1106, %v1137
        %v1175 = vmul.f32 %v1107, %v1137
        %v1176 = vmul.f32 %v1108, %v1137
        %v1177 = vmul.f32 %v1109, %v1137
        %v1178 = vmul.f32 %v1110, %v1137
        %v1179 = vmul.f32 %v1111, %v1137
        %v1180 = vmul.f32 %v1112, %v1137
        %v1181 = vmul.f32 %v1113, %v1137
        %v1182 = vmul.f32 %v1114, %v1137
        %v1183 = vmul.f32 %v1115, %v1137
        %v1184 = vmul.f32 %v1116, %v1137
        %v1185 = vmul.f32 %v1117, %v1137
        %v1186 = vmul.f32 %v1118, %v1137
        %v1187 = vmul.f32 %v1119, %v1137
        %v1188 = vmul.f32 %v1120, %v1137
        %v1189 = vmul.f32 %v1121, %v1137
        %v1190 = vmul.f32 %v1122, %v1137
        %v1191 = vmul.f32 %v1123, %v1137
        %v1192 = vmul.f32 %v1124, %v1137
        %v1193 = vmul.f32 %v1125, %v1137
        %v1194 = vmul.f32 %v1126, %v1137
        %v1195 = vmul.f32 %v1127, %v1137
        %v1196 = vmul.f32 %v1128, %v1137
        %v1197 = vmul.f32 %v1129, %v1137
        %v1198 = vmul.f32 %v1130, %v1137
        %v1199 = vmul.f32 %v1131, %v1137
        %v1200 = vmul.f32 %v1132, %v1137
        %v1201 = vmul.f32 %v1133, %v1137
        %v1202 = vadd.f32 %v1006, %v1138
        %v1203 = vadd.f32 %v1007, %v1139
        %v1204 = vadd.f32 %v1008, %v1140
        %v1205 = vadd.f32 %v1009, %v1141
        %v1206 = vadd.f32 %v1010, %v1142
        %v1207 = vadd.f32 %v1011, %v1143
        %v1208 = vadd.f32 %v1012, %v1144
        %v1209 = vadd.f32 %v1013, %v1145
        %v1210 = vadd.f32 %v1014, %v1146
        %v1211 = vadd.f32 %v1015, %v1147
        %v1212 = vadd.f32 %v1016, %v1148
        %v1213 = vadd.f32 %v1017, %v1149
        %v1214 = vadd.f32 %v1018, %v1150
        %v1215 = vadd.f32 %v1019, %v1151
        %v1216 = vadd.f32 %v1020, %v1152
        %v1217 = vadd.f32 %v1021, %v1153
        %v1218 = vadd.f32 %v1022, %v1154
        %v1219 = vadd.f32 %v1023, %v1155
        %v1220 = vadd.f32 %v1024, %v1156
        %v1221 = vadd.f32 %v1025, %v1157
        %v1222 = vadd.f32 %v1026, %v1158
        %v1223 = vadd.f32 %v1027, %v1159
        %v1224 = vadd.f32 %v1028, %v1160
        %v1225 = vadd.f32 %v1029, %v1161
        %v1226 = vadd.f32 %v1030, %v1162
        %v1227 = vadd.f32 %v1031, %v1163
        %v1228 = vadd.f32 %v1032, %v1164
        %v1229 = vadd.f32 %v1033, %v1165
        %v1230 = vadd.f32 %v1034, %v1166
        %v1231 = vadd.f32 %v1035, %v1167
        %v1232 = vadd.f32 %v1036, %v1168
        %v1233 = vadd.f32 %v1037, %v1169
        %v1234 = vadd.f32 %v1038, %v1170
        %v1235 = vadd.f32 %v1039, %v1171
        %v1236 = vadd.f32 %v1040, %v1172
        %v1237 = vadd.f32 %v1041, %v1173
        %v1238 = vadd.f32 %v1042, %v1174
        %v1239 = vadd.f32 %v1043, %v1175
        %v1240 = vadd.f32 %v1044, %v1176
        %v1241 = vadd.f32 %v1045, %v1177
        %v1242 = vadd.f32 %v1046, %v1178
        %v1243 = vadd.f32 %v1047, %v1179
        %v1244 = vadd.f32 %v1048, %v1180
        %v1245 = vadd.f32 %v1049, %v1181
        %v1246 = vadd.f32 %v1050, %v1182
        %v1247 = vadd.f32 %v1051, %v1183
        %v1248 = vadd.f32 %v1052, %v1184
        %v1249 = vadd.f32 %v1053, %v1185
        %v1250 = vadd.f32 %v1054, %v1186
        %v1251 = vadd.f32 %v1055, %v1187
        %v1252 = vadd.f32 %v1056, %v1188
        %v1253 = vadd.f32 %v1057, %v1189
        %v1254 = vadd.f32 %v1058, %v1190
        %v1255 = vadd.f32 %v1059, %v1191
        %v1256 = vadd.f32 %v1060, %v1192
        %v1257 = vadd.f32 %v1061, %v1193
        %v1258 = vadd.f32 %v1062, %v1194
        %v1259 = vadd.f32 %v1063, %v1195
        %v1260 = vadd.f32 %v1064, %v1196
        %v1261 = vadd.f32 %v1065, %v1197
        %v1262 = vadd.f32 %v1066, %v1198
        %v1263 = vadd.f32 %v1067, %v1199
        %v1264 = vadd.f32 %v1068, %v1200
        %v1265 = vadd.f32 %v1069, %v1201
        %v1266 = vld [vmem:[%s873 + $0x2] sm:$0xff]
        %v1267 = vld [vmem:[%s873 + $0xa] sm:$0xff]
        %v1268 = vld [vmem:[%s873 + $0x1a] sm:$0xff]
        %v1269 = vld [vmem:[%s873 + $0x22] sm:$0xff]
        %v1270 = vld [vmem:[%s873 + $0x32] sm:$0xff]
        %v1271 = vld [vmem:[%s873 + $0x3a] sm:$0xff]
        %v1272 = vld [vmem:[%s873 + $0x4a] sm:$0xff]
        %v1273 = vld [vmem:[%s873 + $0x52] sm:$0xff]
        %v1274 = vld [vmem:[%s873 + $0x62] sm:$0xff]
        %v1275 = vld [vmem:[%s873 + $0x6a] sm:$0xff]
        %v1276 = vld [vmem:[%s873 + $0x7a] sm:$0xff]
        %v1277 = vld [vmem:[%s873 + $0x82] sm:$0xff]
        %v1278 = vld [vmem:[%s873 + $0x92] sm:$0xff]
        %v1279 = vld [vmem:[%s873 + $0x9a] sm:$0xff]
        %v1280 = vld [vmem:[%s873 + $0xaa] sm:$0xff]
        %v1281 = vld [vmem:[%s873 + $0xb2] sm:$0xff]
        %v1282 = vld [vmem:[%s873 + $0xc2] sm:$0xff]
        %v1283 = vld [vmem:[%s873 + $0xca] sm:$0xff]
        %v1284 = vld [vmem:[%s873 + $0xda] sm:$0xff]
        %v1285 = vld [vmem:[%s873 + $0xe2] sm:$0xff]
        %v1286 = vld [vmem:[%s873 + $0xf2] sm:$0xff]
        %v1287 = vld [vmem:[%s873 + $0xfa] sm:$0xff]
        %v1288 = vld [vmem:[%s873 + $0x10a] sm:$0xff]
        %v1289 = vld [vmem:[%s873 + $0x112] sm:$0xff]
        %v1290 = vld [vmem:[%s873 + $0x122] sm:$0xff]
        %v1291 = vld [vmem:[%s873 + $0x12a] sm:$0xff]
        %v1292 = vld [vmem:[%s873 + $0x13a] sm:$0xff]
        %v1293 = vld [vmem:[%s873 + $0x142] sm:$0xff]
        %v1294 = vld [vmem:[%s873 + $0x152] sm:$0xff]
        %v1295 = vld [vmem:[%s873 + $0x15a] sm:$0xff]
        %v1296 = vld [vmem:[%s873 + $0x16a] sm:$0xff]
        %v1297 = vld [vmem:[%s873 + $0x172] sm:$0xff]
        %v1298 = vld [vmem:[%s873 + $0x1b2] sm:$0xff]
        %v1299 = vld [vmem:[%s873 + $0x1ba] sm:$0xff]
        %v1300 = vld [vmem:[%s873 + $0x1ca] sm:$0xff]
        %v1301 = vld [vmem:[%s873 + $0x1d2] sm:$0xff]
        %v1302 = vld [vmem:[%s873 + $0x1e2] sm:$0xff]
        %v1303 = vld [vmem:[%s873 + $0x1ea] sm:$0xff]
        %v1304 = vld [vmem:[%s873 + $0x1fa] sm:$0xff]
        %v1305 = vld [vmem:[%s873 + $0x202] sm:$0xff]
        %v1306 = vld [vmem:[%s873 + $0x212] sm:$0xff]
        %v1307 = vld [vmem:[%s873 + $0x21a] sm:$0xff]
        %v1308 = vld [vmem:[%s873 + $0x22a] sm:$0xff]
        %v1309 = vld [vmem:[%s873 + $0x232] sm:$0xff]
        %v1310 = vld [vmem:[%s873 + $0x242] sm:$0xff]
        %v1311 = vld [vmem:[%s873 + $0x24a] sm:$0xff]
        %v1312 = vld [vmem:[%s873 + $0x25a] sm:$0xff]
        %v1313 = vld [vmem:[%s873 + $0x262] sm:$0xff]
        %v1314 = vld [vmem:[%s873 + $0x272] sm:$0xff]
        %v1315 = vld [vmem:[%s873 + $0x27a] sm:$0xff]
        %v1316 = vld [vmem:[%s873 + $0x28a] sm:$0xff]
        %v1317 = vld [vmem:[%s873 + $0x292] sm:$0xff]
        %v1318 = vld [vmem:[%s873 + $0x2a2] sm:$0xff]
        %v1319 = vld [vmem:[%s873 + $0x2aa] sm:$0xff]
        %v1320 = vld [vmem:[%s873 + $0x2ba] sm:$0xff]
        %v1321 = vld [vmem:[%s873 + $0x2c2] sm:$0xff]
        %v1322 = vld [vmem:[%s873 + $0x2d2] sm:$0xff]
        %v1323 = vld [vmem:[%s873 + $0x2da] sm:$0xff]
        %v1324 = vld [vmem:[%s873 + $0x2ea] sm:$0xff]
        %v1325 = vld [vmem:[%s873 + $0x2f2] sm:$0xff]
        %v1326 = vld [vmem:[%s873 + $0x302] sm:$0xff]
        %v1327 = vld [vmem:[%s873 + $0x30a] sm:$0xff]
        %v1328 = vld [vmem:[%s873 + $0x31a] sm:$0xff]
        %v1329 = vld [vmem:[%s873 + $0x322] sm:$0xff]
        %v1330 = vlaneseq
        %v1331 = vshrl.u32 %v1330, 7
        %v1332 = vsub.s32 5, %v1331
        %v1333 = vrot.slane %v283, %v1332
        %v1334 = vmul.f32 %v1266, %v1333
        %v1335 = vmul.f32 %v1267, %v1333
        %v1336 = vmul.f32 %v1268, %v1333
        %v1337 = vmul.f32 %v1269, %v1333
        %v1338 = vmul.f32 %v1270, %v1333
        %v1339 = vmul.f32 %v1271, %v1333
        %v1340 = vmul.f32 %v1272, %v1333
        %v1341 = vmul.f32 %v1273, %v1333
        %v1342 = vmul.f32 %v1274, %v1333
        %v1343 = vmul.f32 %v1275, %v1333
        %v1344 = vmul.f32 %v1276, %v1333
        %v1345 = vmul.f32 %v1277, %v1333
        %v1346 = vmul.f32 %v1278, %v1333
        %v1347 = vmul.f32 %v1279, %v1333
        %v1348 = vmul.f32 %v1280, %v1333
        %v1349 = vmul.f32 %v1281, %v1333
        %v1350 = vmul.f32 %v1282, %v1333
        %v1351 = vmul.f32 %v1283, %v1333
        %v1352 = vmul.f32 %v1284, %v1333
        %v1353 = vmul.f32 %v1285, %v1333
        %v1354 = vmul.f32 %v1286, %v1333
        %v1355 = vmul.f32 %v1287, %v1333
        %v1356 = vmul.f32 %v1288, %v1333
        %v1357 = vmul.f32 %v1289, %v1333
        %v1358 = vmul.f32 %v1290, %v1333
        %v1359 = vmul.f32 %v1291, %v1333
        %v1360 = vmul.f32 %v1292, %v1333
        %v1361 = vmul.f32 %v1293, %v1333
        %v1362 = vmul.f32 %v1294, %v1333
        %v1363 = vmul.f32 %v1295, %v1333
        %v1364 = vmul.f32 %v1296, %v1333
        %v1365 = vmul.f32 %v1297, %v1333
        %v1366 = vmul.f32 %v1298, %v1333
        %v1367 = vmul.f32 %v1299, %v1333
        %v1368 = vmul.f32 %v1300, %v1333
        %v1369 = vmul.f32 %v1301, %v1333
        %v1370 = vmul.f32 %v1302, %v1333
        %v1371 = vmul.f32 %v1303, %v1333
        %v1372 = vmul.f32 %v1304, %v1333
        %v1373 = vmul.f32 %v1305, %v1333
        %v1374 = vmul.f32 %v1306, %v1333
        %v1375 = vmul.f32 %v1307, %v1333
        %v1376 = vmul.f32 %v1308, %v1333
        %v1377 = vmul.f32 %v1309, %v1333
        %v1378 = vmul.f32 %v1310, %v1333
        %v1379 = vmul.f32 %v1311, %v1333
        %v1380 = vmul.f32 %v1312, %v1333
        %v1381 = vmul.f32 %v1313, %v1333
        %v1382 = vmul.f32 %v1314, %v1333
        %v1383 = vmul.f32 %v1315, %v1333
        %v1384 = vmul.f32 %v1316, %v1333
        %v1385 = vmul.f32 %v1317, %v1333
        %v1386 = vmul.f32 %v1318, %v1333
        %v1387 = vmul.f32 %v1319, %v1333
        %v1388 = vmul.f32 %v1320, %v1333
        %v1389 = vmul.f32 %v1321, %v1333
        %v1390 = vmul.f32 %v1322, %v1333
        %v1391 = vmul.f32 %v1323, %v1333
        %v1392 = vmul.f32 %v1324, %v1333
        %v1393 = vmul.f32 %v1325, %v1333
        %v1394 = vmul.f32 %v1326, %v1333
        %v1395 = vmul.f32 %v1327, %v1333
        %v1396 = vmul.f32 %v1328, %v1333
        %v1397 = vmul.f32 %v1329, %v1333
        %v1398 = vadd.f32 %v1202, %v1334
        %v1399 = vadd.f32 %v1203, %v1335
        %v1400 = vadd.f32 %v1204, %v1336
        %v1401 = vadd.f32 %v1205, %v1337
        %v1402 = vadd.f32 %v1206, %v1338
        %v1403 = vadd.f32 %v1207, %v1339
        %v1404 = vadd.f32 %v1208, %v1340
        %v1405 = vadd.f32 %v1209, %v1341
        %v1406 = vadd.f32 %v1210, %v1342
        %v1407 = vadd.f32 %v1211, %v1343
        %v1408 = vadd.f32 %v1212, %v1344
        %v1409 = vadd.f32 %v1213, %v1345
        %v1410 = vadd.f32 %v1214, %v1346
        %v1411 = vadd.f32 %v1215, %v1347
        %v1412 = vadd.f32 %v1216, %v1348
        %v1413 = vadd.f32 %v1217, %v1349
        %v1414 = vadd.f32 %v1218, %v1350
        %v1415 = vadd.f32 %v1219, %v1351
        %v1416 = vadd.f32 %v1220, %v1352
        %v1417 = vadd.f32 %v1221, %v1353
        %v1418 = vadd.f32 %v1222, %v1354
        %v1419 = vadd.f32 %v1223, %v1355
        %v1420 = vadd.f32 %v1224, %v1356
        %v1421 = vadd.f32 %v1225, %v1357
        %v1422 = vadd.f32 %v1226, %v1358
        %v1423 = vadd.f32 %v1227, %v1359
        %v1424 = vadd.f32 %v1228, %v1360
        %v1425 = vadd.f32 %v1229, %v1361
        %v1426 = vadd.f32 %v1230, %v1362
        %v1427 = vadd.f32 %v1231, %v1363
        %v1428 = vadd.f32 %v1232, %v1364
        %v1429 = vadd.f32 %v1233, %v1365
        %v1430 = vadd.f32 %v1234, %v1366
        %v1431 = vadd.f32 %v1235, %v1367
        %v1432 = vadd.f32 %v1236, %v1368
        %v1433 = vadd.f32 %v1237, %v1369
        %v1434 = vadd.f32 %v1238, %v1370
        %v1435 = vadd.f32 %v1239, %v1371
        %v1436 = vadd.f32 %v1240, %v1372
        %v1437 = vadd.f32 %v1241, %v1373
        %v1438 = vadd.f32 %v1242, %v1374
        %v1439 = vadd.f32 %v1243, %v1375
        %v1440 = vadd.f32 %v1244, %v1376
        %v1441 = vadd.f32 %v1245, %v1377
        %v1442 = vadd.f32 %v1246, %v1378
        %v1443 = vadd.f32 %v1247, %v1379
        %v1444 = vadd.f32 %v1248, %v1380
        %v1445 = vadd.f32 %v1249, %v1381
        %v1446 = vadd.f32 %v1250, %v1382
        %v1447 = vadd.f32 %v1251, %v1383
        %v1448 = vadd.f32 %v1252, %v1384
        %v1449 = vadd.f32 %v1253, %v1385
        %v1450 = vadd.f32 %v1254, %v1386
        %v1451 = vadd.f32 %v1255, %v1387
        %v1452 = vadd.f32 %v1256, %v1388
        %v1453 = vadd.f32 %v1257, %v1389
        %v1454 = vadd.f32 %v1258, %v1390
        %v1455 = vadd.f32 %v1259, %v1391
        %v1456 = vadd.f32 %v1260, %v1392
        %v1457 = vadd.f32 %v1261, %v1393
        %v1458 = vadd.f32 %v1262, %v1394
        %v1459 = vadd.f32 %v1263, %v1395
        %v1460 = vadd.f32 %v1264, %v1396
        %v1461 = vadd.f32 %v1265, %v1397
        %s1462 = scalar_lea.vmem %s280, 48
        %v1463 = vld [vmem:[%s1462] sm:$0xff]
        %v1464 = vld [vmem:[%s1462 + $0x8] sm:$0xff]
        %v1465 = vld [vmem:[%s1462 + $0x18] sm:$0xff]
        %v1466 = vld [vmem:[%s1462 + $0x20] sm:$0xff]
        %v1467 = vld [vmem:[%s1462 + $0x30] sm:$0xff]
        %v1468 = vld [vmem:[%s1462 + $0x38] sm:$0xff]
        %v1469 = vld [vmem:[%s1462 + $0x48] sm:$0xff]
        %v1470 = vld [vmem:[%s1462 + $0x50] sm:$0xff]
        %v1471 = vld [vmem:[%s1462 + $0x60] sm:$0xff]
        %v1472 = vld [vmem:[%s1462 + $0x68] sm:$0xff]
        %v1473 = vld [vmem:[%s1462 + $0x78] sm:$0xff]
        %v1474 = vld [vmem:[%s1462 + $0x80] sm:$0xff]
        %v1475 = vld [vmem:[%s1462 + $0x90] sm:$0xff]
        %v1476 = vld [vmem:[%s1462 + $0x98] sm:$0xff]
        %v1477 = vld [vmem:[%s1462 + $0xa8] sm:$0xff]
        %v1478 = vld [vmem:[%s1462 + $0xb0] sm:$0xff]
        %v1479 = vld [vmem:[%s1462 + $0xc0] sm:$0xff]
        %v1480 = vld [vmem:[%s1462 + $0xc8] sm:$0xff]
        %v1481 = vld [vmem:[%s1462 + $0xd8] sm:$0xff]
        %v1482 = vld [vmem:[%s1462 + $0xe0] sm:$0xff]
        %v1483 = vld [vmem:[%s1462 + $0xf0] sm:$0xff]
        %v1484 = vld [vmem:[%s1462 + $0xf8] sm:$0xff]
        %v1485 = vld [vmem:[%s1462 + $0x108] sm:$0xff]
        %v1486 = vld [vmem:[%s1462 + $0x110] sm:$0xff]
        %v1487 = vld [vmem:[%s1462 + $0x120] sm:$0xff]
        %v1488 = vld [vmem:[%s1462 + $0x128] sm:$0xff]
        %v1489 = vld [vmem:[%s1462 + $0x138] sm:$0xff]
        %v1490 = vld [vmem:[%s1462 + $0x140] sm:$0xff]
        %v1491 = vld [vmem:[%s1462 + $0x150] sm:$0xff]
        %v1492 = vld [vmem:[%s1462 + $0x158] sm:$0xff]
        %v1493 = vld [vmem:[%s1462 + $0x168] sm:$0xff]
        %v1494 = vld [vmem:[%s1462 + $0x170] sm:$0xff]
        %v1495 = vld [vmem:[%s1462 + $0x1b0] sm:$0xff]
        %v1496 = vld [vmem:[%s1462 + $0x1b8] sm:$0xff]
        %v1497 = vld [vmem:[%s1462 + $0x1c8] sm:$0xff]
        %v1498 = vld [vmem:[%s1462 + $0x1d0] sm:$0xff]
        %v1499 = vld [vmem:[%s1462 + $0x1e0] sm:$0xff]
        %v1500 = vld [vmem:[%s1462 + $0x1e8] sm:$0xff]
        %v1501 = vld [vmem:[%s1462 + $0x1f8] sm:$0xff]
        %v1502 = vld [vmem:[%s1462 + $0x200] sm:$0xff]
        %v1503 = vld [vmem:[%s1462 + $0x210] sm:$0xff]
        %v1504 = vld [vmem:[%s1462 + $0x218] sm:$0xff]
        %v1505 = vld [vmem:[%s1462 + $0x228] sm:$0xff]
        %v1506 = vld [vmem:[%s1462 + $0x230] sm:$0xff]
        %v1507 = vld [vmem:[%s1462 + $0x240] sm:$0xff]
        %v1508 = vld [vmem:[%s1462 + $0x248] sm:$0xff]
        %v1509 = vld [vmem:[%s1462 + $0x258] sm:$0xff]
        %v1510 = vld [vmem:[%s1462 + $0x260] sm:$0xff]
        %v1511 = vld [vmem:[%s1462 + $0x270] sm:$0xff]
        %v1512 = vld [vmem:[%s1462 + $0x278] sm:$0xff]
        %v1513 = vld [vmem:[%s1462 + $0x288] sm:$0xff]
        %v1514 = vld [vmem:[%s1462 + $0x290] sm:$0xff]
        %v1515 = vld [vmem:[%s1462 + $0x2a0] sm:$0xff]
        %v1516 = vld [vmem:[%s1462 + $0x2a8] sm:$0xff]
        %v1517 = vld [vmem:[%s1462 + $0x2b8] sm:$0xff]
        %v1518 = vld [vmem:[%s1462 + $0x2c0] sm:$0xff]
        %v1519 = vld [vmem:[%s1462 + $0x2d0] sm:$0xff]
        %v1520 = vld [vmem:[%s1462 + $0x2d8] sm:$0xff]
        %v1521 = vld [vmem:[%s1462 + $0x2e8] sm:$0xff]
        %v1522 = vld [vmem:[%s1462 + $0x2f0] sm:$0xff]
        %v1523 = vld [vmem:[%s1462 + $0x300] sm:$0xff]
        %v1524 = vld [vmem:[%s1462 + $0x308] sm:$0xff]
        %v1525 = vld [vmem:[%s1462 + $0x318] sm:$0xff]
        %v1526 = vld [vmem:[%s1462 + $0x320] sm:$0xff]
        %v1527 = vlaneseq
        %v1528 = vshrl.u32 %v1527, 7
        %v1529 = vsub.s32 6, %v1528
        %v1530 = vrot.slane %v283, %v1529
        %v1531 = vmul.f32 %v1463, %v1530
        %v1532 = vmul.f32 %v1464, %v1530
        %v1533 = vmul.f32 %v1465, %v1530
        %v1534 = vmul.f32 %v1466, %v1530
        %v1535 = vmul.f32 %v1467, %v1530
        %v1536 = vmul.f32 %v1468, %v1530
        %v1537 = vmul.f32 %v1469, %v1530
        %v1538 = vmul.f32 %v1470, %v1530
        %v1539 = vmul.f32 %v1471, %v1530
        %v1540 = vmul.f32 %v1472, %v1530
        %v1541 = vmul.f32 %v1473, %v1530
        %v1542 = vmul.f32 %v1474, %v1530
        %v1543 = vmul.f32 %v1475, %v1530
        %v1544 = vmul.f32 %v1476, %v1530
        %v1545 = vmul.f32 %v1477, %v1530
        %v1546 = vmul.f32 %v1478, %v1530
        %v1547 = vmul.f32 %v1479, %v1530
        %v1548 = vmul.f32 %v1480, %v1530
        %v1549 = vmul.f32 %v1481, %v1530
        %v1550 = vmul.f32 %v1482, %v1530
        %v1551 = vmul.f32 %v1483, %v1530
        %v1552 = vmul.f32 %v1484, %v1530
        %v1553 = vmul.f32 %v1485, %v1530
        %v1554 = vmul.f32 %v1486, %v1530
        %v1555 = vmul.f32 %v1487, %v1530
        %v1556 = vmul.f32 %v1488, %v1530
        %v1557 = vmul.f32 %v1489, %v1530
        %v1558 = vmul.f32 %v1490, %v1530
        %v1559 = vmul.f32 %v1491, %v1530
        %v1560 = vmul.f32 %v1492, %v1530
        %v1561 = vmul.f32 %v1493, %v1530
        %v1562 = vmul.f32 %v1494, %v1530
        %v1563 = vmul.f32 %v1495, %v1530
        %v1564 = vmul.f32 %v1496, %v1530
        %v1565 = vmul.f32 %v1497, %v1530
        %v1566 = vmul.f32 %v1498, %v1530
        %v1567 = vmul.f32 %v1499, %v1530
        %v1568 = vmul.f32 %v1500, %v1530
        %v1569 = vmul.f32 %v1501, %v1530
        %v1570 = vmul.f32 %v1502, %v1530
        %v1571 = vmul.f32 %v1503, %v1530
        %v1572 = vmul.f32 %v1504, %v1530
        %v1573 = vmul.f32 %v1505, %v1530
        %v1574 = vmul.f32 %v1506, %v1530
        %v1575 = vmul.f32 %v1507, %v1530
        %v1576 = vmul.f32 %v1508, %v1530
        %v1577 = vmul.f32 %v1509, %v1530
        %v1578 = vmul.f32 %v1510, %v1530
        %v1579 = vmul.f32 %v1511, %v1530
        %v1580 = vmul.f32 %v1512, %v1530
        %v1581 = vmul.f32 %v1513, %v1530
        %v1582 = vmul.f32 %v1514, %v1530
        %v1583 = vmul.f32 %v1515, %v1530
        %v1584 = vmul.f32 %v1516, %v1530
        %v1585 = vmul.f32 %v1517, %v1530
        %v1586 = vmul.f32 %v1518, %v1530
        %v1587 = vmul.f32 %v1519, %v1530
        %v1588 = vmul.f32 %v1520, %v1530
        %v1589 = vmul.f32 %v1521, %v1530
        %v1590 = vmul.f32 %v1522, %v1530
        %v1591 = vmul.f32 %v1523, %v1530
        %v1592 = vmul.f32 %v1524, %v1530
        %v1593 = vmul.f32 %v1525, %v1530
        %v1594 = vmul.f32 %v1526, %v1530
        %v1595 = vadd.f32 %v1398, %v1531
        %v1596 = vadd.f32 %v1399, %v1532
        %v1597 = vadd.f32 %v1400, %v1533
        %v1598 = vadd.f32 %v1401, %v1534
        %v1599 = vadd.f32 %v1402, %v1535
        %v1600 = vadd.f32 %v1403, %v1536
        %v1601 = vadd.f32 %v1404, %v1537
        %v1602 = vadd.f32 %v1405, %v1538
        %v1603 = vadd.f32 %v1406, %v1539
        %v1604 = vadd.f32 %v1407, %v1540
        %v1605 = vadd.f32 %v1408, %v1541
        %v1606 = vadd.f32 %v1409, %v1542
        %v1607 = vadd.f32 %v1410, %v1543
        %v1608 = vadd.f32 %v1411, %v1544
        %v1609 = vadd.f32 %v1412, %v1545
        %v1610 = vadd.f32 %v1413, %v1546
        %v1611 = vadd.f32 %v1414, %v1547
        %v1612 = vadd.f32 %v1415, %v1548
        %v1613 = vadd.f32 %v1416, %v1549
        %v1614 = vadd.f32 %v1417, %v1550
        %v1615 = vadd.f32 %v1418, %v1551
        %v1616 = vadd.f32 %v1419, %v1552
        %v1617 = vadd.f32 %v1420, %v1553
        %v1618 = vadd.f32 %v1421, %v1554
        %v1619 = vadd.f32 %v1422, %v1555
        %v1620 = vadd.f32 %v1423, %v1556
        %v1621 = vadd.f32 %v1424, %v1557
        %v1622 = vadd.f32 %v1425, %v1558
        %v1623 = vadd.f32 %v1426, %v1559
        %v1624 = vadd.f32 %v1427, %v1560
        %v1625 = vadd.f32 %v1428, %v1561
        %v1626 = vadd.f32 %v1429, %v1562
        %v1627 = vadd.f32 %v1430, %v1563
        %v1628 = vadd.f32 %v1431, %v1564
        %v1629 = vadd.f32 %v1432, %v1565
        %v1630 = vadd.f32 %v1433, %v1566
        %v1631 = vadd.f32 %v1434, %v1567
        %v1632 = vadd.f32 %v1435, %v1568
        %v1633 = vadd.f32 %v1436, %v1569
        %v1634 = vadd.f32 %v1437, %v1570
        %v1635 = vadd.f32 %v1438, %v1571
        %v1636 = vadd.f32 %v1439, %v1572
        %v1637 = vadd.f32 %v1440, %v1573
        %v1638 = vadd.f32 %v1441, %v1574
        %v1639 = vadd.f32 %v1442, %v1575
        %v1640 = vadd.f32 %v1443, %v1576
        %v1641 = vadd.f32 %v1444, %v1577
        %v1642 = vadd.f32 %v1445, %v1578
        %v1643 = vadd.f32 %v1446, %v1579
        %v1644 = vadd.f32 %v1447, %v1580
        %v1645 = vadd.f32 %v1448, %v1581
        %v1646 = vadd.f32 %v1449, %v1582
        %v1647 = vadd.f32 %v1450, %v1583
        %v1648 = vadd.f32 %v1451, %v1584
        %v1649 = vadd.f32 %v1452, %v1585
        %v1650 = vadd.f32 %v1453, %v1586
        %v1651 = vadd.f32 %v1454, %v1587
        %v1652 = vadd.f32 %v1455, %v1588
        %v1653 = vadd.f32 %v1456, %v1589
        %v1654 = vadd.f32 %v1457, %v1590
        %v1655 = vadd.f32 %v1458, %v1591
        %v1656 = vadd.f32 %v1459, %v1592
        %v1657 = vadd.f32 %v1460, %v1593
        %v1658 = vadd.f32 %v1461, %v1594
        %v1659 = vld [vmem:[%s1462 + $0x1] sm:$0xff]
        %v1660 = vld [vmem:[%s1462 + $0x9] sm:$0xff]
        %v1661 = vld [vmem:[%s1462 + $0x19] sm:$0xff]
        %v1662 = vld [vmem:[%s1462 + $0x21] sm:$0xff]
        %v1663 = vld [vmem:[%s1462 + $0x31] sm:$0xff]
        %v1664 = vld [vmem:[%s1462 + $0x39] sm:$0xff]
        %v1665 = vld [vmem:[%s1462 + $0x49] sm:$0xff]
        %v1666 = vld [vmem:[%s1462 + $0x51] sm:$0xff]
        %v1667 = vld [vmem:[%s1462 + $0x61] sm:$0xff]
        %v1668 = vld [vmem:[%s1462 + $0x69] sm:$0xff]
        %v1669 = vld [vmem:[%s1462 + $0x79] sm:$0xff]
        %v1670 = vld [vmem:[%s1462 + $0x81] sm:$0xff]
        %v1671 = vld [vmem:[%s1462 + $0x91] sm:$0xff]
        %v1672 = vld [vmem:[%s1462 + $0x99] sm:$0xff]
        %v1673 = vld [vmem:[%s1462 + $0xa9] sm:$0xff]
        %v1674 = vld [vmem:[%s1462 + $0xb1] sm:$0xff]
        %v1675 = vld [vmem:[%s1462 + $0xc1] sm:$0xff]
        %v1676 = vld [vmem:[%s1462 + $0xc9] sm:$0xff]
        %v1677 = vld [vmem:[%s1462 + $0xd9] sm:$0xff]
        %v1678 = vld [vmem:[%s1462 + $0xe1] sm:$0xff]
        %v1679 = vld [vmem:[%s1462 + $0xf1] sm:$0xff]
        %v1680 = vld [vmem:[%s1462 + $0xf9] sm:$0xff]
        %v1681 = vld [vmem:[%s1462 + $0x109] sm:$0xff]
        %v1682 = vld [vmem:[%s1462 + $0x111] sm:$0xff]
        %v1683 = vld [vmem:[%s1462 + $0x121] sm:$0xff]
        %v1684 = vld [vmem:[%s1462 + $0x129] sm:$0xff]
        %v1685 = vld [vmem:[%s1462 + $0x139] sm:$0xff]
        %v1686 = vld [vmem:[%s1462 + $0x141] sm:$0xff]
        %v1687 = vld [vmem:[%s1462 + $0x151] sm:$0xff]
        %v1688 = vld [vmem:[%s1462 + $0x159] sm:$0xff]
        %v1689 = vld [vmem:[%s1462 + $0x169] sm:$0xff]
        %v1690 = vld [vmem:[%s1462 + $0x171] sm:$0xff]
        %v1691 = vld [vmem:[%s1462 + $0x1b1] sm:$0xff]
        %v1692 = vld [vmem:[%s1462 + $0x1b9] sm:$0xff]
        %v1693 = vld [vmem:[%s1462 + $0x1c9] sm:$0xff]
        %v1694 = vld [vmem:[%s1462 + $0x1d1] sm:$0xff]
        %v1695 = vld [vmem:[%s1462 + $0x1e1] sm:$0xff]
        %v1696 = vld [vmem:[%s1462 + $0x1e9] sm:$0xff]
        %v1697 = vld [vmem:[%s1462 + $0x1f9] sm:$0xff]
        %v1698 = vld [vmem:[%s1462 + $0x201] sm:$0xff]
        %v1699 = vld [vmem:[%s1462 + $0x211] sm:$0xff]
        %v1700 = vld [vmem:[%s1462 + $0x219] sm:$0xff]
        %v1701 = vld [vmem:[%s1462 + $0x229] sm:$0xff]
        %v1702 = vld [vmem:[%s1462 + $0x231] sm:$0xff]
        %v1703 = vld [vmem:[%s1462 + $0x241] sm:$0xff]
        %v1704 = vld [vmem:[%s1462 + $0x249] sm:$0xff]
        %v1705 = vld [vmem:[%s1462 + $0x259] sm:$0xff]
        %v1706 = vld [vmem:[%s1462 + $0x261] sm:$0xff]
        %v1707 = vld [vmem:[%s1462 + $0x271] sm:$0xff]
        %v1708 = vld [vmem:[%s1462 + $0x279] sm:$0xff]
        %v1709 = vld [vmem:[%s1462 + $0x289] sm:$0xff]
        %v1710 = vld [vmem:[%s1462 + $0x291] sm:$0xff]
        %v1711 = vld [vmem:[%s1462 + $0x2a1] sm:$0xff]
        %v1712 = vld [vmem:[%s1462 + $0x2a9] sm:$0xff]
        %v1713 = vld [vmem:[%s1462 + $0x2b9] sm:$0xff]
        %v1714 = vld [vmem:[%s1462 + $0x2c1] sm:$0xff]
        %v1715 = vld [vmem:[%s1462 + $0x2d1] sm:$0xff]
        %v1716 = vld [vmem:[%s1462 + $0x2d9] sm:$0xff]
        %v1717 = vld [vmem:[%s1462 + $0x2e9] sm:$0xff]
        %v1718 = vld [vmem:[%s1462 + $0x2f1] sm:$0xff]
        %v1719 = vld [vmem:[%s1462 + $0x301] sm:$0xff]
        %v1720 = vld [vmem:[%s1462 + $0x309] sm:$0xff]
        %v1721 = vld [vmem:[%s1462 + $0x319] sm:$0xff]
        %v1722 = vld [vmem:[%s1462 + $0x321] sm:$0xff]
        %v1723 = vlaneseq
        %v1724 = vshrl.u32 %v1723, 7
        %v1725 = vsub.s32 7, %v1724
        %v1726 = vrot.slane %v283, %v1725
        %v1727 = vmul.f32 %v1659, %v1726
        %v1728 = vmul.f32 %v1660, %v1726
        %v1729 = vmul.f32 %v1661, %v1726
        %v1730 = vmul.f32 %v1662, %v1726
        %v1731 = vmul.f32 %v1663, %v1726
        %v1732 = vmul.f32 %v1664, %v1726
        %v1733 = vmul.f32 %v1665, %v1726
        %v1734 = vmul.f32 %v1666, %v1726
        %v1735 = vmul.f32 %v1667, %v1726
        %v1736 = vmul.f32 %v1668, %v1726
        %v1737 = vmul.f32 %v1669, %v1726
        %v1738 = vmul.f32 %v1670, %v1726
        %v1739 = vmul.f32 %v1671, %v1726
        %v1740 = vmul.f32 %v1672, %v1726
        %v1741 = vmul.f32 %v1673, %v1726
        %v1742 = vmul.f32 %v1674, %v1726
        %v1743 = vmul.f32 %v1675, %v1726
        %v1744 = vmul.f32 %v1676, %v1726
        %v1745 = vmul.f32 %v1677, %v1726
        %v1746 = vmul.f32 %v1678, %v1726
        %v1747 = vmul.f32 %v1679, %v1726
        %v1748 = vmul.f32 %v1680, %v1726
        %v1749 = vmul.f32 %v1681, %v1726
        %v1750 = vmul.f32 %v1682, %v1726
        %v1751 = vmul.f32 %v1683, %v1726
        %v1752 = vmul.f32 %v1684, %v1726
        %v1753 = vmul.f32 %v1685, %v1726
        %v1754 = vmul.f32 %v1686, %v1726
        %v1755 = vmul.f32 %v1687, %v1726
        %v1756 = vmul.f32 %v1688, %v1726
        %v1757 = vmul.f32 %v1689, %v1726
        %v1758 = vmul.f32 %v1690, %v1726
        %v1759 = vmul.f32 %v1691, %v1726
        %v1760 = vmul.f32 %v1692, %v1726
        %v1761 = vmul.f32 %v1693, %v1726
        %v1762 = vmul.f32 %v1694, %v1726
        %v1763 = vmul.f32 %v1695, %v1726
        %v1764 = vmul.f32 %v1696, %v1726
        %v1765 = vmul.f32 %v1697, %v1726
        %v1766 = vmul.f32 %v1698, %v1726
        %v1767 = vmul.f32 %v1699, %v1726
        %v1768 = vmul.f32 %v1700, %v1726
        %v1769 = vmul.f32 %v1701, %v1726
        %v1770 = vmul.f32 %v1702, %v1726
        %v1771 = vmul.f32 %v1703, %v1726
        %v1772 = vmul.f32 %v1704, %v1726
        %v1773 = vmul.f32 %v1705, %v1726
        %v1774 = vmul.f32 %v1706, %v1726
        %v1775 = vmul.f32 %v1707, %v1726
        %v1776 = vmul.f32 %v1708, %v1726
        %v1777 = vmul.f32 %v1709, %v1726
        %v1778 = vmul.f32 %v1710, %v1726
        %v1779 = vmul.f32 %v1711, %v1726
        %v1780 = vmul.f32 %v1712, %v1726
        %v1781 = vmul.f32 %v1713, %v1726
        %v1782 = vmul.f32 %v1714, %v1726
        %v1783 = vmul.f32 %v1715, %v1726
        %v1784 = vmul.f32 %v1716, %v1726
        %v1785 = vmul.f32 %v1717, %v1726
        %v1786 = vmul.f32 %v1718, %v1726
        %v1787 = vmul.f32 %v1719, %v1726
        %v1788 = vmul.f32 %v1720, %v1726
        %v1789 = vmul.f32 %v1721, %v1726
        %v1790 = vmul.f32 %v1722, %v1726
        %v1791 = vadd.f32 %v1595, %v1727
        %v1792 = vadd.f32 %v1596, %v1728
        %v1793 = vadd.f32 %v1597, %v1729
        %v1794 = vadd.f32 %v1598, %v1730
        %v1795 = vadd.f32 %v1599, %v1731
        %v1796 = vadd.f32 %v1600, %v1732
        %v1797 = vadd.f32 %v1601, %v1733
        %v1798 = vadd.f32 %v1602, %v1734
        %v1799 = vadd.f32 %v1603, %v1735
        %v1800 = vadd.f32 %v1604, %v1736
        %v1801 = vadd.f32 %v1605, %v1737
        %v1802 = vadd.f32 %v1606, %v1738
        %v1803 = vadd.f32 %v1607, %v1739
        %v1804 = vadd.f32 %v1608, %v1740
        %v1805 = vadd.f32 %v1609, %v1741
        %v1806 = vadd.f32 %v1610, %v1742
        %v1807 = vadd.f32 %v1611, %v1743
        %v1808 = vadd.f32 %v1612, %v1744
        %v1809 = vadd.f32 %v1613, %v1745
        %v1810 = vadd.f32 %v1614, %v1746
        %v1811 = vadd.f32 %v1615, %v1747
        %v1812 = vadd.f32 %v1616, %v1748
        %v1813 = vadd.f32 %v1617, %v1749
        %v1814 = vadd.f32 %v1618, %v1750
        %v1815 = vadd.f32 %v1619, %v1751
        %v1816 = vadd.f32 %v1620, %v1752
        %v1817 = vadd.f32 %v1621, %v1753
        %v1818 = vadd.f32 %v1622, %v1754
        %v1819 = vadd.f32 %v1623, %v1755
        %v1820 = vadd.f32 %v1624, %v1756
        %v1821 = vadd.f32 %v1625, %v1757
        %v1822 = vadd.f32 %v1626, %v1758
        %v1823 = vadd.f32 %v1627, %v1759
        %v1824 = vadd.f32 %v1628, %v1760
        %v1825 = vadd.f32 %v1629, %v1761
        %v1826 = vadd.f32 %v1630, %v1762
        %v1827 = vadd.f32 %v1631, %v1763
        %v1828 = vadd.f32 %v1632, %v1764
        %v1829 = vadd.f32 %v1633, %v1765
        %v1830 = vadd.f32 %v1634, %v1766
        %v1831 = vadd.f32 %v1635, %v1767
        %v1832 = vadd.f32 %v1636, %v1768
        %v1833 = vadd.f32 %v1637, %v1769
        %v1834 = vadd.f32 %v1638, %v1770
        %v1835 = vadd.f32 %v1639, %v1771
        %v1836 = vadd.f32 %v1640, %v1772
        %v1837 = vadd.f32 %v1641, %v1773
        %v1838 = vadd.f32 %v1642, %v1774
        %v1839 = vadd.f32 %v1643, %v1775
        %v1840 = vadd.f32 %v1644, %v1776
        %v1841 = vadd.f32 %v1645, %v1777
        %v1842 = vadd.f32 %v1646, %v1778
        %v1843 = vadd.f32 %v1647, %v1779
        %v1844 = vadd.f32 %v1648, %v1780
        %v1845 = vadd.f32 %v1649, %v1781
        %v1846 = vadd.f32 %v1650, %v1782
        %v1847 = vadd.f32 %v1651, %v1783
        %v1848 = vadd.f32 %v1652, %v1784
        %v1849 = vadd.f32 %v1653, %v1785
        %v1850 = vadd.f32 %v1654, %v1786
        %v1851 = vadd.f32 %v1655, %v1787
        %v1852 = vadd.f32 %v1656, %v1788
        %v1853 = vadd.f32 %v1657, %v1789
        %v1854 = vadd.f32 %v1658, %v1790
        %v1855 = vld [vmem:[%s1462 + $0x2] sm:$0xff]
        %v1856 = vld [vmem:[%s1462 + $0xa] sm:$0xff]
        %v1857 = vld [vmem:[%s1462 + $0x1a] sm:$0xff]
        %v1858 = vld [vmem:[%s1462 + $0x22] sm:$0xff]
        %v1859 = vld [vmem:[%s1462 + $0x32] sm:$0xff]
        %v1860 = vld [vmem:[%s1462 + $0x3a] sm:$0xff]
        %v1861 = vld [vmem:[%s1462 + $0x4a] sm:$0xff]
        %v1862 = vld [vmem:[%s1462 + $0x52] sm:$0xff]
        %v1863 = vld [vmem:[%s1462 + $0x62] sm:$0xff]
        %v1864 = vld [vmem:[%s1462 + $0x6a] sm:$0xff]
        %v1865 = vld [vmem:[%s1462 + $0x7a] sm:$0xff]
        %v1866 = vld [vmem:[%s1462 + $0x82] sm:$0xff]
        %v1867 = vld [vmem:[%s1462 + $0x92] sm:$0xff]
        %v1868 = vld [vmem:[%s1462 + $0x9a] sm:$0xff]
        %v1869 = vld [vmem:[%s1462 + $0xaa] sm:$0xff]
        %v1870 = vld [vmem:[%s1462 + $0xb2] sm:$0xff]
        %v1871 = vld [vmem:[%s1462 + $0xc2] sm:$0xff]
        %v1872 = vld [vmem:[%s1462 + $0xca] sm:$0xff]
        %v1873 = vld [vmem:[%s1462 + $0xda] sm:$0xff]
        %v1874 = vld [vmem:[%s1462 + $0xe2] sm:$0xff]
        %v1875 = vld [vmem:[%s1462 + $0xf2] sm:$0xff]
        %v1876 = vld [vmem:[%s1462 + $0xfa] sm:$0xff]
        %v1877 = vld [vmem:[%s1462 + $0x10a] sm:$0xff]
        %v1878 = vld [vmem:[%s1462 + $0x112] sm:$0xff]
        %v1879 = vld [vmem:[%s1462 + $0x122] sm:$0xff]
        %v1880 = vld [vmem:[%s1462 + $0x12a] sm:$0xff]
        %v1881 = vld [vmem:[%s1462 + $0x13a] sm:$0xff]
        %v1882 = vld [vmem:[%s1462 + $0x142] sm:$0xff]
        %v1883 = vld [vmem:[%s1462 + $0x152] sm:$0xff]
        %v1884 = vld [vmem:[%s1462 + $0x15a] sm:$0xff]
        %v1885 = vld [vmem:[%s1462 + $0x16a] sm:$0xff]
        %v1886 = vld [vmem:[%s1462 + $0x172] sm:$0xff]
        %v1887 = vld [vmem:[%s1462 + $0x1b2] sm:$0xff]
        %v1888 = vld [vmem:[%s1462 + $0x1ba] sm:$0xff]
        %v1889 = vld [vmem:[%s1462 + $0x1ca] sm:$0xff]
        %v1890 = vld [vmem:[%s1462 + $0x1d2] sm:$0xff]
        %v1891 = vld [vmem:[%s1462 + $0x1e2] sm:$0xff]
        %v1892 = vld [vmem:[%s1462 + $0x1ea] sm:$0xff]
        %v1893 = vld [vmem:[%s1462 + $0x1fa] sm:$0xff]
        %v1894 = vld [vmem:[%s1462 + $0x202] sm:$0xff]
        %v1895 = vld [vmem:[%s1462 + $0x212] sm:$0xff]
        %v1896 = vld [vmem:[%s1462 + $0x21a] sm:$0xff]
        %v1897 = vld [vmem:[%s1462 + $0x22a] sm:$0xff]
        %v1898 = vld [vmem:[%s1462 + $0x232] sm:$0xff]
        %v1899 = vld [vmem:[%s1462 + $0x242] sm:$0xff]
        %v1900 = vld [vmem:[%s1462 + $0x24a] sm:$0xff]
        %v1901 = vld [vmem:[%s1462 + $0x25a] sm:$0xff]
        %v1902 = vld [vmem:[%s1462 + $0x262] sm:$0xff]
        %v1903 = vld [vmem:[%s1462 + $0x272] sm:$0xff]
        %v1904 = vld [vmem:[%s1462 + $0x27a] sm:$0xff]
        %v1905 = vld [vmem:[%s1462 + $0x28a] sm:$0xff]
        %v1906 = vld [vmem:[%s1462 + $0x292] sm:$0xff]
        %v1907 = vld [vmem:[%s1462 + $0x2a2] sm:$0xff]
        %v1908 = vld [vmem:[%s1462 + $0x2aa] sm:$0xff]
        %v1909 = vld [vmem:[%s1462 + $0x2ba] sm:$0xff]
        %v1910 = vld [vmem:[%s1462 + $0x2c2] sm:$0xff]
        %v1911 = vld [vmem:[%s1462 + $0x2d2] sm:$0xff]
        %v1912 = vld [vmem:[%s1462 + $0x2da] sm:$0xff]
        %v1913 = vld [vmem:[%s1462 + $0x2ea] sm:$0xff]
        %v1914 = vld [vmem:[%s1462 + $0x2f2] sm:$0xff]
        %v1915 = vld [vmem:[%s1462 + $0x302] sm:$0xff]
        %v1916 = vld [vmem:[%s1462 + $0x30a] sm:$0xff]
        %v1917 = vld [vmem:[%s1462 + $0x31a] sm:$0xff]
        %v1918 = vld [vmem:[%s1462 + $0x322] sm:$0xff]
        %v1919 = vlaneseq
        %v1920 = vshrl.u32 %v1919, 7
        %v1921 = vsub.s32 0, %v1920
        %v1922 = vrot.slane %v284, %v1921
        %v1923 = vmul.f32 %v1855, %v1922
        %v1924 = vmul.f32 %v1856, %v1922
        %v1925 = vmul.f32 %v1857, %v1922
        %v1926 = vmul.f32 %v1858, %v1922
        %v1927 = vmul.f32 %v1859, %v1922
        %v1928 = vmul.f32 %v1860, %v1922
        %v1929 = vmul.f32 %v1861, %v1922
        %v1930 = vmul.f32 %v1862, %v1922
        %v1931 = vmul.f32 %v1863, %v1922
        %v1932 = vmul.f32 %v1864, %v1922
        %v1933 = vmul.f32 %v1865, %v1922
        %v1934 = vmul.f32 %v1866, %v1922
        %v1935 = vmul.f32 %v1867, %v1922
        %v1936 = vmul.f32 %v1868, %v1922
        %v1937 = vmul.f32 %v1869, %v1922
        %v1938 = vmul.f32 %v1870, %v1922
        %v1939 = vmul.f32 %v1871, %v1922
        %v1940 = vmul.f32 %v1872, %v1922
        %v1941 = vmul.f32 %v1873, %v1922
        %v1942 = vmul.f32 %v1874, %v1922
        %v1943 = vmul.f32 %v1875, %v1922
        %v1944 = vmul.f32 %v1876, %v1922
        %v1945 = vmul.f32 %v1877, %v1922
        %v1946 = vmul.f32 %v1878, %v1922
        %v1947 = vmul.f32 %v1879, %v1922
        %v1948 = vmul.f32 %v1880, %v1922
        %v1949 = vmul.f32 %v1881, %v1922
        %v1950 = vmul.f32 %v1882, %v1922
        %v1951 = vmul.f32 %v1883, %v1922
        %v1952 = vmul.f32 %v1884, %v1922
        %v1953 = vmul.f32 %v1885, %v1922
        %v1954 = vmul.f32 %v1886, %v1922
        %v1955 = vmul.f32 %v1887, %v1922
        %v1956 = vmul.f32 %v1888, %v1922
        %v1957 = vmul.f32 %v1889, %v1922
        %v1958 = vmul.f32 %v1890, %v1922
        %v1959 = vmul.f32 %v1891, %v1922
        %v1960 = vmul.f32 %v1892, %v1922
        %v1961 = vmul.f32 %v1893, %v1922
        %v1962 = vmul.f32 %v1894, %v1922
        %v1963 = vmul.f32 %v1895, %v1922
        %v1964 = vmul.f32 %v1896, %v1922
        %v1965 = vmul.f32 %v1897, %v1922
        %v1966 = vmul.f32 %v1898, %v1922
        %v1967 = vmul.f32 %v1899, %v1922
        %v1968 = vmul.f32 %v1900, %v1922
        %v1969 = vmul.f32 %v1901, %v1922
        %v1970 = vmul.f32 %v1902, %v1922
        %v1971 = vmul.f32 %v1903, %v1922
        %v1972 = vmul.f32 %v1904, %v1922
        %v1973 = vmul.f32 %v1905, %v1922
        %v1974 = vmul.f32 %v1906, %v1922
        %v1975 = vmul.f32 %v1907, %v1922
        %v1976 = vmul.f32 %v1908, %v1922
        %v1977 = vmul.f32 %v1909, %v1922
        %v1978 = vmul.f32 %v1910, %v1922
        %v1979 = vmul.f32 %v1911, %v1922
        %v1980 = vmul.f32 %v1912, %v1922
        %v1981 = vmul.f32 %v1913, %v1922
        %v1982 = vmul.f32 %v1914, %v1922
        %v1983 = vmul.f32 %v1915, %v1922
        %v1984 = vmul.f32 %v1916, %v1922
        %v1985 = vmul.f32 %v1917, %v1922
        %v1986 = vmul.f32 %v1918, %v1922
        %v1987 = vadd.f32 %v1791, %v1923
        %v1988 = vadd.f32 %v1792, %v1924
        %v1989 = vadd.f32 %v1793, %v1925
        %v1990 = vadd.f32 %v1794, %v1926
        %v1991 = vadd.f32 %v1795, %v1927
        %v1992 = vadd.f32 %v1796, %v1928
        %v1993 = vadd.f32 %v1797, %v1929
        %v1994 = vadd.f32 %v1798, %v1930
        %v1995 = vadd.f32 %v1799, %v1931
        %v1996 = vadd.f32 %v1800, %v1932
        %v1997 = vadd.f32 %v1801, %v1933
        %v1998 = vadd.f32 %v1802, %v1934
        %v1999 = vadd.f32 %v1803, %v1935
        %v2000 = vadd.f32 %v1804, %v1936
        %v2001 = vadd.f32 %v1805, %v1937
        %v2002 = vadd.f32 %v1806, %v1938
        %v2003 = vadd.f32 %v1807, %v1939
        %v2004 = vadd.f32 %v1808, %v1940
        %v2005 = vadd.f32 %v1809, %v1941
        %v2006 = vadd.f32 %v1810, %v1942
        %v2007 = vadd.f32 %v1811, %v1943
        %v2008 = vadd.f32 %v1812, %v1944
        %v2009 = vadd.f32 %v1813, %v1945
        %v2010 = vadd.f32 %v1814, %v1946
        %v2011 = vadd.f32 %v1815, %v1947
        %v2012 = vadd.f32 %v1816, %v1948
        %v2013 = vadd.f32 %v1817, %v1949
        %v2014 = vadd.f32 %v1818, %v1950
        %v2015 = vadd.f32 %v1819, %v1951
        %v2016 = vadd.f32 %v1820, %v1952
        %v2017 = vadd.f32 %v1821, %v1953
        %v2018 = vadd.f32 %v1822, %v1954
        %v2019 = vadd.f32 %v1823, %v1955
        %v2020 = vadd.f32 %v1824, %v1956
        %v2021 = vadd.f32 %v1825, %v1957
        %v2022 = vadd.f32 %v1826, %v1958
        %v2023 = vadd.f32 %v1827, %v1959
        %v2024 = vadd.f32 %v1828, %v1960
        %v2025 = vadd.f32 %v1829, %v1961
        %v2026 = vadd.f32 %v1830, %v1962
        %v2027 = vadd.f32 %v1831, %v1963
        %v2028 = vadd.f32 %v1832, %v1964
        %v2029 = vadd.f32 %v1833, %v1965
        %v2030 = vadd.f32 %v1834, %v1966
        %v2031 = vadd.f32 %v1835, %v1967
        %v2032 = vadd.f32 %v1836, %v1968
        %v2033 = vadd.f32 %v1837, %v1969
        %v2034 = vadd.f32 %v1838, %v1970
        %v2035 = vadd.f32 %v1839, %v1971
        %v2036 = vadd.f32 %v1840, %v1972
        %v2037 = vadd.f32 %v1841, %v1973
        %v2038 = vadd.f32 %v1842, %v1974
        %v2039 = vadd.f32 %v1843, %v1975
        %v2040 = vadd.f32 %v1844, %v1976
        %v2041 = vadd.f32 %v1845, %v1977
        %v2042 = vadd.f32 %v1846, %v1978
        %v2043 = vadd.f32 %v1847, %v1979
        %v2044 = vadd.f32 %v1848, %v1980
        %v2045 = vadd.f32 %v1849, %v1981
        %v2046 = vadd.f32 %v1850, %v1982
        %v2047 = vadd.f32 %v1851, %v1983
        %v2048 = vadd.f32 %v1852, %v1984
        %v2049 = vadd.f32 %v1853, %v1985
        %v2050 = vadd.f32 %v1854, %v1986
        %v2051 = vld [vmem:[%s2] sm:$0x1]
        %v2053 = vlaneseq
        %v2054 = vshrl.u32 %v2053, 7
        %v2055 = vsub.s32 0, %v2054
        %v2056 = vrot.slane %v2051, %v2055
        %v2058 = vmul.f32 %v1987, %v2056
        %v2059 = vmul.f32 %v1988, %v2056
        %v2060 = vmul.f32 %v1989, %v2056
        %v2061 = vmul.f32 %v1990, %v2056
        %v2062 = vmul.f32 %v1991, %v2056
        %v2063 = vmul.f32 %v1992, %v2056
        %v2064 = vmul.f32 %v1993, %v2056
        %v2065 = vmul.f32 %v1994, %v2056
        %v2066 = vmul.f32 %v1995, %v2056
        %v2067 = vmul.f32 %v1996, %v2056
        %v2068 = vmul.f32 %v1997, %v2056
        %v2069 = vmul.f32 %v1998, %v2056
        %v2070 = vmul.f32 %v1999, %v2056
        %v2071 = vmul.f32 %v2000, %v2056
        %v2072 = vmul.f32 %v2001, %v2056
        %v2073 = vmul.f32 %v2002, %v2056
        %v2074 = vmul.f32 %v2003, %v2056
        %v2075 = vmul.f32 %v2004, %v2056
        %v2076 = vmul.f32 %v2005, %v2056
        %v2077 = vmul.f32 %v2006, %v2056
        %v2078 = vmul.f32 %v2007, %v2056
        %v2079 = vmul.f32 %v2008, %v2056
        %v2080 = vmul.f32 %v2009, %v2056
        %v2081 = vmul.f32 %v2010, %v2056
        %v2082 = vmul.f32 %v2011, %v2056
        %v2083 = vmul.f32 %v2012, %v2056
        %v2084 = vmul.f32 %v2013, %v2056
        %v2085 = vmul.f32 %v2014, %v2056
        %v2086 = vmul.f32 %v2015, %v2056
        %v2087 = vmul.f32 %v2016, %v2056
        %v2088 = vmul.f32 %v2017, %v2056
        %v2089 = vmul.f32 %v2018, %v2056
        %v2090 = vmul.f32 %v2019, %v2056
        %v2091 = vmul.f32 %v2020, %v2056
        %v2092 = vmul.f32 %v2021, %v2056
        %v2093 = vmul.f32 %v2022, %v2056
        %v2094 = vmul.f32 %v2023, %v2056
        %v2095 = vmul.f32 %v2024, %v2056
        %v2096 = vmul.f32 %v2025, %v2056
        %v2097 = vmul.f32 %v2026, %v2056
        %v2098 = vmul.f32 %v2027, %v2056
        %v2099 = vmul.f32 %v2028, %v2056
        %v2100 = vmul.f32 %v2029, %v2056
        %v2101 = vmul.f32 %v2030, %v2056
        %v2102 = vmul.f32 %v2031, %v2056
        %v2103 = vmul.f32 %v2032, %v2056
        %v2104 = vmul.f32 %v2033, %v2056
        %v2105 = vmul.f32 %v2034, %v2056
        %v2106 = vmul.f32 %v2035, %v2056
        %v2107 = vmul.f32 %v2036, %v2056
        %v2108 = vmul.f32 %v2037, %v2056
        %v2109 = vmul.f32 %v2038, %v2056
        %v2110 = vmul.f32 %v2039, %v2056
        %v2111 = vmul.f32 %v2040, %v2056
        %v2112 = vmul.f32 %v2041, %v2056
        %v2113 = vmul.f32 %v2042, %v2056
        %v2114 = vmul.f32 %v2043, %v2056
        %v2115 = vmul.f32 %v2044, %v2056
        %v2116 = vmul.f32 %v2045, %v2056
        %v2117 = vmul.f32 %v2046, %v2056
        %v2118 = vmul.f32 %v2047, %v2056
        %v2119 = vmul.f32 %v2048, %v2056
        %v2120 = vmul.f32 %v2049, %v2056
        %v2121 = vmul.f32 %v2050, %v2056
        %v2122 = vld [vmem:[%s3] sm:$0x1]
        %v2124 = vlaneseq
        %v2125 = vshrl.u32 %v2124, 7
        %v2126 = vsub.s32 0, %v2125
        %v2127 = vrot.slane %v2122, %v2126
        %v2129 = vadd.f32 %v2058, %v2127
        %v2130 = vadd.f32 %v2059, %v2127
        %v2131 = vadd.f32 %v2060, %v2127
        %v2132 = vadd.f32 %v2061, %v2127
        %v2133 = vadd.f32 %v2062, %v2127
        %v2134 = vadd.f32 %v2063, %v2127
        %v2135 = vadd.f32 %v2064, %v2127
        %v2136 = vadd.f32 %v2065, %v2127
        %v2137 = vadd.f32 %v2066, %v2127
        %v2138 = vadd.f32 %v2067, %v2127
        %v2139 = vadd.f32 %v2068, %v2127
        %v2140 = vadd.f32 %v2069, %v2127
        %v2141 = vadd.f32 %v2070, %v2127
        %v2142 = vadd.f32 %v2071, %v2127
        %v2143 = vadd.f32 %v2072, %v2127
        %v2144 = vadd.f32 %v2073, %v2127
        %v2145 = vadd.f32 %v2074, %v2127
        %v2146 = vadd.f32 %v2075, %v2127
        %v2147 = vadd.f32 %v2076, %v2127
        %v2148 = vadd.f32 %v2077, %v2127
        %v2149 = vadd.f32 %v2078, %v2127
        %v2150 = vadd.f32 %v2079, %v2127
        %v2151 = vadd.f32 %v2080, %v2127
        %v2152 = vadd.f32 %v2081, %v2127
        %v2153 = vadd.f32 %v2082, %v2127
        %v2154 = vadd.f32 %v2083, %v2127
        %v2155 = vadd.f32 %v2084, %v2127
        %v2156 = vadd.f32 %v2085, %v2127
        %v2157 = vadd.f32 %v2086, %v2127
        %v2158 = vadd.f32 %v2087, %v2127
        %v2159 = vadd.f32 %v2088, %v2127
        %v2160 = vadd.f32 %v2089, %v2127
        %v2161 = vadd.f32 %v2090, %v2127
        %v2162 = vadd.f32 %v2091, %v2127
        %v2163 = vadd.f32 %v2092, %v2127
        %v2164 = vadd.f32 %v2093, %v2127
        %v2165 = vadd.f32 %v2094, %v2127
        %v2166 = vadd.f32 %v2095, %v2127
        %v2167 = vadd.f32 %v2096, %v2127
        %v2168 = vadd.f32 %v2097, %v2127
        %v2169 = vadd.f32 %v2098, %v2127
        %v2170 = vadd.f32 %v2099, %v2127
        %v2171 = vadd.f32 %v2100, %v2127
        %v2172 = vadd.f32 %v2101, %v2127
        %v2173 = vadd.f32 %v2102, %v2127
        %v2174 = vadd.f32 %v2103, %v2127
        %v2175 = vadd.f32 %v2104, %v2127
        %v2176 = vadd.f32 %v2105, %v2127
        %v2177 = vadd.f32 %v2106, %v2127
        %v2178 = vadd.f32 %v2107, %v2127
        %v2179 = vadd.f32 %v2108, %v2127
        %v2180 = vadd.f32 %v2109, %v2127
        %v2181 = vadd.f32 %v2110, %v2127
        %v2182 = vadd.f32 %v2111, %v2127
        %v2183 = vadd.f32 %v2112, %v2127
        %v2184 = vadd.f32 %v2113, %v2127
        %v2185 = vadd.f32 %v2114, %v2127
        %v2186 = vadd.f32 %v2115, %v2127
        %v2187 = vadd.f32 %v2116, %v2127
        %v2188 = vadd.f32 %v2117, %v2127
        %v2189 = vadd.f32 %v2118, %v2127
        %v2190 = vadd.f32 %v2119, %v2127
        %v2191 = vadd.f32 %v2120, %v2127
        %v2192 = vadd.f32 %v2121, %v2127
        %v2193 = vmax.f32 %v2129, 0.0
        %v2194 = vmax.f32 %v2130, 0.0
        %v2195 = vmax.f32 %v2131, 0.0
        %v2196 = vmax.f32 %v2132, 0.0
        %v2197 = vmax.f32 %v2133, 0.0
        %v2198 = vmax.f32 %v2134, 0.0
        %v2199 = vmax.f32 %v2135, 0.0
        %v2200 = vmax.f32 %v2136, 0.0
        %v2201 = vmax.f32 %v2137, 0.0
        %v2202 = vmax.f32 %v2138, 0.0
        %v2203 = vmax.f32 %v2139, 0.0
        %v2204 = vmax.f32 %v2140, 0.0
        %v2205 = vmax.f32 %v2141, 0.0
        %v2206 = vmax.f32 %v2142, 0.0
        %v2207 = vmax.f32 %v2143, 0.0
        %v2208 = vmax.f32 %v2144, 0.0
        %v2209 = vmax.f32 %v2145, 0.0
        %v2210 = vmax.f32 %v2146, 0.0
        %v2211 = vmax.f32 %v2147, 0.0
        %v2212 = vmax.f32 %v2148, 0.0
        %v2213 = vmax.f32 %v2149, 0.0
        %v2214 = vmax.f32 %v2150, 0.0
        %v2215 = vmax.f32 %v2151, 0.0
        %v2216 = vmax.f32 %v2152, 0.0
        %v2217 = vmax.f32 %v2153, 0.0
        %v2218 = vmax.f32 %v2154, 0.0
        %v2219 = vmax.f32 %v2155, 0.0
        %v2220 = vmax.f32 %v2156, 0.0
        %v2221 = vmax.f32 %v2157, 0.0
        %v2222 = vmax.f32 %v2158, 0.0
        %v2223 = vmax.f32 %v2159, 0.0
        %v2224 = vmax.f32 %v2160, 0.0
        %v2225 = vmax.f32 %v2161, 0.0
        %v2226 = vmax.f32 %v2162, 0.0
        %v2227 = vmax.f32 %v2163, 0.0
        %v2228 = vmax.f32 %v2164, 0.0
        %v2229 = vmax.f32 %v2165, 0.0
        %v2230 = vmax.f32 %v2166, 0.0
        %v2231 = vmax.f32 %v2167, 0.0
        %v2232 = vmax.f32 %v2168, 0.0
        %v2233 = vmax.f32 %v2169, 0.0
        %v2234 = vmax.f32 %v2170, 0.0
        %v2235 = vmax.f32 %v2171, 0.0
        %v2236 = vmax.f32 %v2172, 0.0
        %v2237 = vmax.f32 %v2173, 0.0
        %v2238 = vmax.f32 %v2174, 0.0
        %v2239 = vmax.f32 %v2175, 0.0
        %v2240 = vmax.f32 %v2176, 0.0
        %v2241 = vmax.f32 %v2177, 0.0
        %v2242 = vmax.f32 %v2178, 0.0
        %v2243 = vmax.f32 %v2179, 0.0
        %v2244 = vmax.f32 %v2180, 0.0
        %v2245 = vmax.f32 %v2181, 0.0
        %v2246 = vmax.f32 %v2182, 0.0
        %v2247 = vmax.f32 %v2183, 0.0
        %v2248 = vmax.f32 %v2184, 0.0
        %v2249 = vmax.f32 %v2185, 0.0
        %v2250 = vmax.f32 %v2186, 0.0
        %v2251 = vmax.f32 %v2187, 0.0
        %v2252 = vmax.f32 %v2188, 0.0
        %v2253 = vmax.f32 %v2189, 0.0
        %v2254 = vmax.f32 %v2190, 0.0
        %v2255 = vmax.f32 %v2191, 0.0
        %v2256 = vmax.f32 %v2192, 0.0
        %v2257 = vmin.f32 %v2193, 6.0
        %v2258 = vmin.f32 %v2194, 6.0
        %v2259 = vmin.f32 %v2195, 6.0
        %v2260 = vmin.f32 %v2196, 6.0
        %v2261 = vmin.f32 %v2197, 6.0
        %v2262 = vmin.f32 %v2198, 6.0
        %v2263 = vmin.f32 %v2199, 6.0
        %v2264 = vmin.f32 %v2200, 6.0
        %v2265 = vmin.f32 %v2201, 6.0
        %v2266 = vmin.f32 %v2202, 6.0
        %v2267 = vmin.f32 %v2203, 6.0
        %v2268 = vmin.f32 %v2204, 6.0
        %v2269 = vmin.f32 %v2205, 6.0
        %v2270 = vmin.f32 %v2206, 6.0
        %v2271 = vmin.f32 %v2207, 6.0
        %v2272 = vmin.f32 %v2208, 6.0
        %v2273 = vmin.f32 %v2209, 6.0
        %v2274 = vmin.f32 %v2210, 6.0
        %v2275 = vmin.f32 %v2211, 6.0
        %v2276 = vmin.f32 %v2212, 6.0
        %v2277 = vmin.f32 %v2213, 6.0
        %v2278 = vmin.f32 %v2214, 6.0
        %v2279 = vmin.f32 %v2215, 6.0
        %v2280 = vmin.f32 %v2216, 6.0
        %v2281 = vmin.f32 %v2217, 6.0
        %v2282 = vmin.f32 %v2218, 6.0
        %v2283 = vmin.f32 %v2219, 6.0
        %v2284 = vmin.f32 %v2220, 6.0
        %v2285 = vmin.f32 %v2221, 6.0
        %v2286 = vmin.f32 %v2222, 6.0
        %v2287 = vmin.f32 %v2223, 6.0
        %v2288 = vmin.f32 %v2224, 6.0
        %v2289 = vmin.f32 %v2225, 6.0
        %v2290 = vmin.f32 %v2226, 6.0
        %v2291 = vmin.f32 %v2227, 6.0
        %v2292 = vmin.f32 %v2228, 6.0
        %v2293 = vmin.f32 %v2229, 6.0
        %v2294 = vmin.f32 %v2230, 6.0
        %v2295 = vmin.f32 %v2231, 6.0
        %v2296 = vmin.f32 %v2232, 6.0
        %v2297 = vmin.f32 %v2233, 6.0
        %v2298 = vmin.f32 %v2234, 6.0
        %v2299 = vmin.f32 %v2235, 6.0
        %v2300 = vmin.f32 %v2236, 6.0
        %v2301 = vmin.f32 %v2237, 6.0
        %v2302 = vmin.f32 %v2238, 6.0
        %v2303 = vmin.f32 %v2239, 6.0
        %v2304 = vmin.f32 %v2240, 6.0
        %v2305 = vmin.f32 %v2241, 6.0
        %v2306 = vmin.f32 %v2242, 6.0
        %v2307 = vmin.f32 %v2243, 6.0
        %v2308 = vmin.f32 %v2244, 6.0
        %v2309 = vmin.f32 %v2245, 6.0
        %v2310 = vmin.f32 %v2246, 6.0
        %v2311 = vmin.f32 %v2247, 6.0
        %v2312 = vmin.f32 %v2248, 6.0
        %v2313 = vmin.f32 %v2249, 6.0
        %v2314 = vmin.f32 %v2250, 6.0
        %v2315 = vmin.f32 %v2251, 6.0
        %v2316 = vmin.f32 %v2252, 6.0
        %v2317 = vmin.f32 %v2253, 6.0
        %v2318 = vmin.f32 %v2254, 6.0
        %v2319 = vmin.f32 %v2255, 6.0
        %v2320 = vmin.f32 %v2256, 6.0
        %v2321 = vld [vmem:[%s4] sm:$0xff]
        %v2322 = vld [vmem:[%s4 + $0x8] sm:$0xff]
        %v2323 = vld [vmem:[%s4 + $0x10] sm:$0xff]
        %v2324 = vld [vmem:[%s4 + $0x18] sm:$0xff]
        %vm2325 = vcmask 261120
        %v2327 = vsel %vm2325, %v2257, 0
        %v2330 = vsel %vm2325, %v2258, 0
        %v2333 = vsel %vm2325, %v2259, 0
        %v2336 = vsel %vm2325, %v2260, 0
        %v2339 = vsel %vm2325, %v2261, 0
        %v2342 = vsel %vm2325, %v2262, 0
        %v2345 = vsel %vm2325, %v2263, 0
        %v2348 = vsel %vm2325, %v2264, 0
        %v2351 = vsel %vm2325, %v2265, 0
        %v2354 = vsel %vm2325, %v2266, 0
        %v2357 = vsel %vm2325, %v2267, 0
        %v2360 = vsel %vm2325, %v2268, 0
        %v2363 = vsel %vm2325, %v2269, 0
        %v2366 = vsel %vm2325, %v2270, 0
        %v2369 = vsel %vm2325, %v2271, 0
        %v2372 = vsel %vm2325, %v2272, 0
        %v2375 = vsel %vm2325, %v2273, 0
        %v2378 = vsel %vm2325, %v2274, 0
        %v2381 = vsel %vm2325, %v2275, 0
        %v2384 = vsel %vm2325, %v2276, 0
        %v2387 = vsel %vm2325, %v2277, 0
        %v2390 = vsel %vm2325, %v2278, 0
        %v2393 = vsel %vm2325, %v2279, 0
        %v2396 = vsel %vm2325, %v2280, 0
        %v2399 = vsel %vm2325, %v2281, 0
        %v2402 = vsel %vm2325, %v2282, 0
        %v2405 = vsel %vm2325, %v2283, 0
        %v2408 = vsel %vm2325, %v2284, 0
        %v2411 = vsel %vm2325, %v2285, 0
        %v2414 = vsel %vm2325, %v2286, 0
        %v2417 = vsel %vm2325, %v2287, 0
        %v2420 = vsel %vm2325, %v2288, 0
        %v2423 = vsel %vm2325, %v2289, 0
        %v2426 = vsel %vm2325, %v2290, 0
        %v2429 = vsel %vm2325, %v2291, 0
        %v2432 = vsel %vm2325, %v2292, 0
        %v2435 = vsel %vm2325, %v2293, 0
        %v2438 = vsel %vm2325, %v2294, 0
        %v2441 = vsel %vm2325, %v2295, 0
        %v2444 = vsel %vm2325, %v2296, 0
        %v2447 = vsel %vm2325, %v2297, 0
        %v2450 = vsel %vm2325, %v2298, 0
        %v2453 = vsel %vm2325, %v2299, 0
        %v2456 = vsel %vm2325, %v2300, 0
        %v2459 = vsel %vm2325, %v2301, 0
        %v2462 = vsel %vm2325, %v2302, 0
        %v2465 = vsel %vm2325, %v2303, 0
        %v2468 = vsel %vm2325, %v2304, 0
        %v2471 = vsel %vm2325, %v2305, 0
        %v2474 = vsel %vm2325, %v2306, 0
        %v2477 = vsel %vm2325, %v2307, 0
        %v2480 = vsel %vm2325, %v2308, 0
        %v2483 = vsel %vm2325, %v2309, 0
        %v2486 = vsel %vm2325, %v2310, 0
        %v2489 = vsel %vm2325, %v2311, 0
        %v2492 = vsel %vm2325, %v2312, 0
        %v2495 = vsel %vm2325, %v2313, 0
        %v2498 = vsel %vm2325, %v2314, 0
        %v2501 = vsel %vm2325, %v2315, 0
        %v2504 = vsel %vm2325, %v2316, 0
        %v2507 = vsel %vm2325, %v2317, 0
        %v2510 = vsel %vm2325, %v2318, 0
        %v2513 = vsel %vm2325, %v2319, 0
        %v2516 = vsel %vm2325, %v2320, 0
        %2518 = vmatprep.subr.mxu0 0.0
        %2519 = vmatpush1.msra.mxu0 %v2321
        %2520 = vmatprep.subr.mxu0 0.0
        %2521 = vmatpush1.msra.mxu0 %v2322
        %2522 = vmatprep.subr.mxu0 0.0
        %2523 = vmatpush1.msra.mxu0 %v2323
        %2524 = vmatprep.subr.mxu0 0.0
        %2525 = vmatpush1.msra.mxu0 %v2324
        %2526 = vmatprep.subr.mxu0 0.0
        %2527 = vmatpush1.msra.mxu0 0.0
        %2528 = vmatprep.subr.mxu0 0.0
        %2529 = vmatpush1.msra.mxu0 0.0
        %2530 = vmatprep.subr.mxu0 0.0
        %2531 = vmatpush1.msra.mxu0 0.0
        %2532 = vmatprep.subr.mxu0 0.0
        %2533 = vmatpush1.msra.mxu0 0.0
        %2534 = vmatprep.subr.mxu0 0.0
        %2535 = vmatpush1.msra.mxu0 0.0
        %2536 = vmatprep.subr.mxu0 0.0
        %2537 = vmatpush1.msra.mxu0 0.0
        %2538 = vmatprep.subr.mxu0 0.0
        %2539 = vmatpush1.msra.mxu0 0.0
        %2540 = vmatprep.subr.mxu0 0.0
        %2541 = vmatpush1.msra.mxu0 0.0
        %2542 = vmatprep.subr.mxu0 0.0
        %2543 = vmatpush1.msra.mxu0 0.0
        %2544 = vmatprep.subr.mxu0 0.0
        %2545 = vmatpush1.msra.mxu0 0.0
        %2546 = vmatprep.subr.mxu0 0.0
        %2547 = vmatpush1.msra.mxu0 0.0
        %2548 = vmatprep.subr.mxu0 0.0
        %2549 = vmatpush1.msra.mxu0 0.0
        %2550 = vmatprep.subr.mxu0 0.0
        %2551 = vmatpush1.msra.mxu0 0.0
        %2552 = vmatprep.subr.mxu0 0.0
        %2553 = vmatpush1.msra.mxu0 0.0
        %2554 = vmatprep.subr.mxu0 0.0
        %2555 = vmatpush1.msra.mxu0 0.0
        %2556 = vmatprep.subr.mxu0 0.0
        %2557 = vmatpush1.msra.mxu0 0.0
        %2558 = vmatprep.subr.mxu0 0.0
        %2559 = vmatpush1.msra.mxu0 0.0
        %2560 = vmatprep.subr.mxu0 0.0
        %2561 = vmatpush1.msra.mxu0 0.0
        %2562 = vmatprep.subr.mxu0 0.0
        %2563 = vmatpush1.msra.mxu0 0.0
        %2564 = vmatprep.subr.mxu0 0.0
        %2565 = vmatpush1.msra.mxu0 0.0
        %2566 = vmatprep.subr.mxu0 0.0
        %2567 = vmatpush1.msra.mxu0 0.0
        %2568 = vmatprep.subr.mxu0 0.0
        %2569 = vmatpush1.msra.mxu0 0.0
        %2570 = vmatprep.subr.mxu0 0.0
        %2571 = vmatpush1.msra.mxu0 0.0
        %2572 = vmatprep.subr.mxu0 0.0
        %2573 = vmatpush1.msra.mxu0 0.0
        %2574 = vmatprep.subr.mxu0 0.0
        %2575 = vmatpush1.msra.mxu0 0.0
        %2576 = vmatprep.subr.mxu0 0.0
        %2577 = vmatpush1.msra.mxu0 0.0
        %2578 = vmatprep.subr.mxu0 0.0
        %2579 = vmatpush1.msra.mxu0 0.0
        %2580 = vmatprep.subr.mxu0 0.0
        %2581 = vmatpush1.msra.mxu0 0.0
        %2582 = vmatprep.mubr.f32.mxu0 0.0
        %2583 = vmatmul.mubr.f32.gmra.mrb[0].mxu0 %v2327
        %v2584 = vpop.f32.mrb[0].mxu0
        %v2585 = vadd.f32 0.0, %v2584
        %v2586 = vpop.f32.mrb[0].mxu0
        %2587 = vmatprep.mubr.f32.mxu0 0.0
        %2588 = vmatmul.mubr.f32.gmra.mrb[0].mxu0 %v2330
        %v2589 = vpop.f32.mrb[0].mxu0
        %v2590 = vadd.f32 0.0, %v2589
        %v2591 = vpop.f32.mrb[0].mxu0
        %2592 = vmatprep.mubr.f32.mxu0 0.0
        %2593 = vmatmul.mubr.f32.gmra.mrb[0].mxu0 %v2333
        %v2594 = vpop.f32.mrb[0].mxu0
        %v2595 = vadd.f32 0.0, %v2594
        %v2596 = vpop.f32.mrb[0].mxu0
        %2597 = vmatprep.mubr.f32.mxu0 0.0
        %2598 = vmatmul.mubr.f32.gmra.mrb[0].mxu0 %v2336
        %v2599 = vpop.f32.mrb[0].mxu0
        %v2600 = vadd.f32 0.0, %v2599
        %v2601 = vpop.f32.mrb[0].mxu0
        %2602 = vmatprep.mubr.f32.mxu0 0.0
        %2603 = vmatmul.mubr.f32.gmra.mrb[0].mxu0 %v2339
        %v2604 = vpop.f32.mrb[0].mxu0
        %v2605 = vadd.f32 0.0, %v2604
        %v2606 = vpop.f32.mrb[0].mxu0
        %2607 = vmatprep.mubr.f32.mxu0 0.0
        %2608 = vmatmul.mubr.f32.gmra.mrb[0].mxu0 %v2342
        %v2609 = vpop.f32.mrb[0].mxu0
        %v2610 = vadd.f32 0.0, %v2609
        %v2611 = vpop.f32.mrb[0].mxu0
        %2612 = vmatprep.mubr.f32.mxu0 0.0
        %2613 = vmatmul.mubr.f32.gmra.mrb[0].mxu0 %v2345
        %v2614 = vpop.f32.mrb[0].mxu0
        %v2615 = vadd.f32 0.0, %v2614
        %v2616 = vpop.f32.mrb[0].mxu0
        %2617 = vmatprep.mubr.f32.mxu0 0.0
        %2618 = vmatmul.mubr.f32.gmra.mrb[0].mxu0 %v2348
        %v2619 = vpop.f32.mrb[0].mxu0
        %v2620 = vadd.f32 0.0, %v2619
        %v2621 = vpop.f32.mrb[0].mxu0
        %2622 = vmatprep.mubr.f32.mxu0 0.0
        %2623 = vmatmul.mubr.f32.gmra.mrb[0].mxu0 %v2351
        %v2624 = vpop.f32.mrb[0].mxu0
        %v2625 = vadd.f32 0.0, %v2624
        %v2626 = vpop.f32.mrb[0].mxu0
        %2627 = vmatprep.mubr.f32.mxu0 0.0
        %2628 = vmatmul.mubr.f32.gmra.mrb[0].mxu0 %v2354
        %v2629 = vpop.f32.mrb[0].mxu0
        %v2630 = vadd.f32 0.0, %v2629
        %v2631 = vpop.f32.mrb[0].mxu0
        %2632 = vmatprep.mubr.f32.mxu0 0.0
        %2633 = vmatmul.mubr.f32.gmra.mrb[0].mxu0 %v2357
        %v2634 = vpop.f32.mrb[0].mxu0
        %v2635 = vadd.f32 0.0, %v2634
        %v2636 = vpop.f32.mrb[0].mxu0
        %2637 = vmatprep.mubr.f32.mxu0 0.0
        %2638 = vmatmul.mubr.f32.gmra.mrb[0].mxu0 %v2360
        %v2639 = vpop.f32.mrb[0].mxu0
        %v2640 = vadd.f32 0.0, %v2639
        %v2641 = vpop.f32.mrb[0].mxu0
        %2642 = vmatprep.mubr.f32.mxu0 0.0
        %2643 = vmatmul.mubr.f32.gmra.mrb[0].mxu0 %v2363
        %v2644 = vpop.f32.mrb[0].mxu0
        %v2645 = vadd.f32 0.0, %v2644
        %v2646 = vpop.f32.mrb[0].mxu0
        %2647 = vmatprep.mubr.f32.mxu0 0.0
        %2648 = vmatmul.mubr.f32.gmra.mrb[0].mxu0 %v2366
        %v2649 = vpop.f32.mrb[0].mxu0
        %v2650 = vadd.f32 0.0, %v2649
        %v2651 = vpop.f32.mrb[0].mxu0
        %2652 = vmatprep.mubr.f32.mxu0 0.0
        %2653 = vmatmul.mubr.f32.gmra.mrb[0].mxu0 %v2369
        %v2654 = vpop.f32.mrb[0].mxu0
        %v2655 = vadd.f32 0.0, %v2654
        %v2656 = vpop.f32.mrb[0].mxu0
        %2657 = vmatprep.mubr.f32.mxu0 0.0
        %2658 = vmatmul.mubr.f32.gmra.mrb[0].mxu0 %v2372
        %v2659 = vpop.f32.mrb[0].mxu0
        %v2660 = vadd.f32 0.0, %v2659
        %v2661 = vpop.f32.mrb[0].mxu0
        %2662 = vmatprep.mubr.f32.mxu0 0.0
        %2663 = vmatmul.mubr.f32.gmra.mrb[0].mxu0 %v2375
        %v2664 = vpop.f32.mrb[0].mxu0
        %v2665 = vadd.f32 0.0, %v2664
        %v2666 = vpop.f32.mrb[0].mxu0
        %2667 = vmatprep.mubr.f32.mxu0 0.0
        %2668 = vmatmul.mubr.f32.gmra.mrb[0].mxu0 %v2378
        %v2669 = vpop.f32.mrb[0].mxu0
        %v2670 = vadd.f32 0.0, %v2669
        %v2671 = vpop.f32.mrb[0].mxu0
        %2672 = vmatprep.mubr.f32.mxu0 0.0
        %2673 = vmatmul.mubr.f32.gmra.mrb[0].mxu0 %v2381
        %v2674 = vpop.f32.mrb[0].mxu0
        %v2675 = vadd.f32 0.0, %v2674
        %v2676 = vpop.f32.mrb[0].mxu0
        %2677 = vmatprep.mubr.f32.mxu0 0.0
        %2678 = vmatmul.mubr.f32.gmra.mrb[0].mxu0 %v2384
        %v2679 = vpop.f32.mrb[0].mxu0
        %v2680 = vadd.f32 0.0, %v2679
        %v2681 = vpop.f32.mrb[0].mxu0
        %2682 = vmatprep.mubr.f32.mxu0 0.0
        %2683 = vmatmul.mubr.f32.gmra.mrb[0].mxu0 %v2387
        %v2684 = vpop.f32.mrb[0].mxu0
        %v2685 = vadd.f32 0.0, %v2684
        %v2686 = vpop.f32.mrb[0].mxu0
        %2687 = vmatprep.mubr.f32.mxu0 0.0
        %2688 = vmatmul.mubr.f32.gmra.mrb[0].mxu0 %v2390
        %v2689 = vpop.f32.mrb[0].mxu0
        %v2690 = vadd.f32 0.0, %v2689
        %v2691 = vpop.f32.mrb[0].mxu0
        %2692 = vmatprep.mubr.f32.mxu0 0.0
        %2693 = vmatmul.mubr.f32.gmra.mrb[0].mxu0 %v2393
        %v2694 = vpop.f32.mrb[0].mxu0
        %v2695 = vadd.f32 0.0, %v2694
        %v2696 = vpop.f32.mrb[0].mxu0
        %2697 = vmatprep.mubr.f32.mxu0 0.0
        %2698 = vmatmul.mubr.f32.gmra.mrb[0].mxu0 %v2396
        %v2699 = vpop.f32.mrb[0].mxu0
        %v2700 = vadd.f32 0.0, %v2699
        %v2701 = vpop.f32.mrb[0].mxu0
        %2702 = vmatprep.mubr.f32.mxu0 0.0
        %2703 = vmatmul.mubr.f32.gmra.mrb[0].mxu0 %v2399
        %v2704 = vpop.f32.mrb[0].mxu0
        %v2705 = vadd.f32 0.0, %v2704
        %v2706 = vpop.f32.mrb[0].mxu0
        %2707 = vmatprep.mubr.f32.mxu0 0.0
        %2708 = vmatmul.mubr.f32.gmra.mrb[0].mxu0 %v2402
        %v2709 = vpop.f32.mrb[0].mxu0
        %v2710 = vadd.f32 0.0, %v2709
        %v2711 = vpop.f32.mrb[0].mxu0
        %2712 = vmatprep.mubr.f32.mxu0 0.0
        %2713 = vmatmul.mubr.f32.gmra.mrb[0].mxu0 %v2405
        %v2714 = vpop.f32.mrb[0].mxu0
        %v2715 = vadd.f32 0.0, %v2714
        %v2716 = vpop.f32.mrb[0].mxu0
        %2717 = vmatprep.mubr.f32.mxu0 0.0
        %2718 = vmatmul.mubr.f32.gmra.mrb[0].mxu0 %v2408
        %v2719 = vpop.f32.mrb[0].mxu0
        %v2720 = vadd.f32 0.0, %v2719
        %v2721 = vpop.f32.mrb[0].mxu0
        %2722 = vmatprep.mubr.f32.mxu0 0.0
        %2723 = vmatmul.mubr.f32.gmra.mrb[0].mxu0 %v2411
        %v2724 = vpop.f32.mrb[0].mxu0
        %v2725 = vadd.f32 0.0, %v2724
        %v2726 = vpop.f32.mrb[0].mxu0
        %2727 = vmatprep.mubr.f32.mxu0 0.0
        %2728 = vmatmul.mubr.f32.gmra.mrb[0].mxu0 %v2414
        %v2729 = vpop.f32.mrb[0].mxu0
        %v2730 = vadd.f32 0.0, %v2729
        %v2731 = vpop.f32.mrb[0].mxu0
        %2732 = vmatprep.mubr.f32.mxu0 0.0
        %2733 = vmatmul.mubr.f32.gmra.mrb[0].mxu0 %v2417
        %v2734 = vpop.f32.mrb[0].mxu0
        %v2735 = vadd.f32 0.0, %v2734
        %v2736 = vpop.f32.mrb[0].mxu0
        %2737 = vmatprep.mubr.f32.mxu0 0.0
        %2738 = vmatmul.mubr.f32.gmra.mrb[0].mxu0 %v2420
        %v2739 = vpop.f32.mrb[0].mxu0
        %v2740 = vadd.f32 0.0, %v2739
        %v2741 = vpop.f32.mrb[0].mxu0
        %2742 = vmatprep.mubr.f32.mxu0 0.0
        %2743 = vmatmul.mubr.f32.gmra.mrb[0].mxu0 %v2423
        %v2744 = vpop.f32.mrb[0].mxu0
        %v2745 = vadd.f32 0.0, %v2744
        %v2746 = vpop.f32.mrb[0].mxu0
        %2747 = vmatprep.mubr.f32.mxu0 0.0
        %2748 = vmatmul.mubr.f32.gmra.mrb[0].mxu0 %v2426
        %v2749 = vpop.f32.mrb[0].mxu0
        %v2750 = vadd.f32 0.0, %v2749
        %v2751 = vpop.f32.mrb[0].mxu0
        %2752 = vmatprep.mubr.f32.mxu0 0.0
        %2753 = vmatmul.mubr.f32.gmra.mrb[0].mxu0 %v2429
        %v2754 = vpop.f32.mrb[0].mxu0
        %v2755 = vadd.f32 0.0, %v2754
        %v2756 = vpop.f32.mrb[0].mxu0
        %2757 = vmatprep.mubr.f32.mxu0 0.0
        %2758 = vmatmul.mubr.f32.gmra.mrb[0].mxu0 %v2432
        %v2759 = vpop.f32.mrb[0].mxu0
        %v2760 = vadd.f32 0.0, %v2759
        %v2761 = vpop.f32.mrb[0].mxu0
        %2762 = vmatprep.mubr.f32.mxu0 0.0
        %2763 = vmatmul.mubr.f32.gmra.mrb[0].mxu0 %v2435
        %v2764 = vpop.f32.mrb[0].mxu0
        %v2765 = vadd.f32 0.0, %v2764
        %v2766 = vpop.f32.mrb[0].mxu0
        %2767 = vmatprep.mubr.f32.mxu0 0.0
        %2768 = vmatmul.mubr.f32.gmra.mrb[0].mxu0 %v2438
        %v2769 = vpop.f32.mrb[0].mxu0
        %v2770 = vadd.f32 0.0, %v2769
        %v2771 = vpop.f32.mrb[0].mxu0
        %2772 = vmatprep.mubr.f32.mxu0 0.0
        %2773 = vmatmul.mubr.f32.gmra.mrb[0].mxu0 %v2441
        %v2774 = vpop.f32.mrb[0].mxu0
        %v2775 = vadd.f32 0.0, %v2774
        %v2776 = vpop.f32.mrb[0].mxu0
        %2777 = vmatprep.mubr.f32.mxu0 0.0
        %2778 = vmatmul.mubr.f32.gmra.mrb[0].mxu0 %v2444
        %v2779 = vpop.f32.mrb[0].mxu0
        %v2780 = vadd.f32 0.0, %v2779
        %v2781 = vpop.f32.mrb[0].mxu0
        %2782 = vmatprep.mubr.f32.mxu0 0.0
        %2783 = vmatmul.mubr.f32.gmra.mrb[0].mxu0 %v2447
        %v2784 = vpop.f32.mrb[0].mxu0
        %v2785 = vadd.f32 0.0, %v2784
        %v2786 = vpop.f32.mrb[0].mxu0
        %2787 = vmatprep.mubr.f32.mxu0 0.0
        %2788 = vmatmul.mubr.f32.gmra.mrb[0].mxu0 %v2450
        %v2789 = vpop.f32.mrb[0].mxu0
        %v2790 = vadd.f32 0.0, %v2789
        %v2791 = vpop.f32.mrb[0].mxu0
        %2792 = vmatprep.mubr.f32.mxu0 0.0
        %2793 = vmatmul.mubr.f32.gmra.mrb[0].mxu0 %v2453
        %v2794 = vpop.f32.mrb[0].mxu0
        %v2795 = vadd.f32 0.0, %v2794
        %v2796 = vpop.f32.mrb[0].mxu0
        %2797 = vmatprep.mubr.f32.mxu0 0.0
        %2798 = vmatmul.mubr.f32.gmra.mrb[0].mxu0 %v2456
        %v2799 = vpop.f32.mrb[0].mxu0
        %v2800 = vadd.f32 0.0, %v2799
        %v2801 = vpop.f32.mrb[0].mxu0
        %2802 = vmatprep.mubr.f32.mxu0 0.0
        %2803 = vmatmul.mubr.f32.gmra.mrb[0].mxu0 %v2459
        %v2804 = vpop.f32.mrb[0].mxu0
        %v2805 = vadd.f32 0.0, %v2804
        %v2806 = vpop.f32.mrb[0].mxu0
        %2807 = vmatprep.mubr.f32.mxu0 0.0
        %2808 = vmatmul.mubr.f32.gmra.mrb[0].mxu0 %v2462
        %v2809 = vpop.f32.mrb[0].mxu0
        %v2810 = vadd.f32 0.0, %v2809
        %v2811 = vpop.f32.mrb[0].mxu0
        %2812 = vmatprep.mubr.f32.mxu0 0.0
        %2813 = vmatmul.mubr.f32.gmra.mrb[0].mxu0 %v2465
        %v2814 = vpop.f32.mrb[0].mxu0
        %v2815 = vadd.f32 0.0, %v2814
        %v2816 = vpop.f32.mrb[0].mxu0
        %2817 = vmatprep.mubr.f32.mxu0 0.0
        %2818 = vmatmul.mubr.f32.gmra.mrb[0].mxu0 %v2468
        %v2819 = vpop.f32.mrb[0].mxu0
        %v2820 = vadd.f32 0.0, %v2819
        %v2821 = vpop.f32.mrb[0].mxu0
        %2822 = vmatprep.mubr.f32.mxu0 0.0
        %2823 = vmatmul.mubr.f32.gmra.mrb[0].mxu0 %v2471
        %v2824 = vpop.f32.mrb[0].mxu0
        %v2825 = vadd.f32 0.0, %v2824
        %v2826 = vpop.f32.mrb[0].mxu0
        %2827 = vmatprep.mubr.f32.mxu0 0.0
        %2828 = vmatmul.mubr.f32.gmra.mrb[0].mxu0 %v2474
        %v2829 = vpop.f32.mrb[0].mxu0
        %v2830 = vadd.f32 0.0, %v2829
        %v2831 = vpop.f32.mrb[0].mxu0
        %2832 = vmatprep.mubr.f32.mxu0 0.0
        %2833 = vmatmul.mubr.f32.gmra.mrb[0].mxu0 %v2477
        %v2834 = vpop.f32.mrb[0].mxu0
        %v2835 = vadd.f32 0.0, %v2834
        %v2836 = vpop.f32.mrb[0].mxu0
        %2837 = vmatprep.mubr.f32.mxu0 0.0
        %2838 = vmatmul.mubr.f32.gmra.mrb[0].mxu0 %v2480
        %v2839 = vpop.f32.mrb[0].mxu0
        %v2840 = vadd.f32 0.0, %v2839
        %v2841 = vpop.f32.mrb[0].mxu0
        %2842 = vmatprep.mubr.f32.mxu0 0.0
        %2843 = vmatmul.mubr.f32.gmra.mrb[0].mxu0 %v2483
        %v2844 = vpop.f32.mrb[0].mxu0
        %v2845 = vadd.f32 0.0, %v2844
        %v2846 = vpop.f32.mrb[0].mxu0
        %2847 = vmatprep.mubr.f32.mxu0 0.0
        %2848 = vmatmul.mubr.f32.gmra.mrb[0].mxu0 %v2486
        %v2849 = vpop.f32.mrb[0].mxu0
        %v2850 = vadd.f32 0.0, %v2849
        %v2851 = vpop.f32.mrb[0].mxu0
        %2852 = vmatprep.mubr.f32.mxu0 0.0
        %2853 = vmatmul.mubr.f32.gmra.mrb[0].mxu0 %v2489
        %v2854 = vpop.f32.mrb[0].mxu0
        %v2855 = vadd.f32 0.0, %v2854
        %v2856 = vpop.f32.mrb[0].mxu0
        %2857 = vmatprep.mubr.f32.mxu0 0.0
        %2858 = vmatmul.mubr.f32.gmra.mrb[0].mxu0 %v2492
        %v2859 = vpop.f32.mrb[0].mxu0
        %v2860 = vadd.f32 0.0, %v2859
        %v2861 = vpop.f32.mrb[0].mxu0
        %2862 = vmatprep.mubr.f32.mxu0 0.0
        %2863 = vmatmul.mubr.f32.gmra.mrb[0].mxu0 %v2495
        %v2864 = vpop.f32.mrb[0].mxu0
        %v2865 = vadd.f32 0.0, %v2864
        %v2866 = vpop.f32.mrb[0].mxu0
        %2867 = vmatprep.mubr.f32.mxu0 0.0
        %2868 = vmatmul.mubr.f32.gmra.mrb[0].mxu0 %v2498
        %v2869 = vpop.f32.mrb[0].mxu0
        %v2870 = vadd.f32 0.0, %v2869
        %v2871 = vpop.f32.mrb[0].mxu0
        %2872 = vmatprep.mubr.f32.mxu0 0.0
        %2873 = vmatmul.mubr.f32.gmra.mrb[0].mxu0 %v2501
        %v2874 = vpop.f32.mrb[0].mxu0
        %v2875 = vadd.f32 0.0, %v2874
        %v2876 = vpop.f32.mrb[0].mxu0
        %2877 = vmatprep.mubr.f32.mxu0 0.0
        %2878 = vmatmul.mubr.f32.gmra.mrb[0].mxu0 %v2504
        %v2879 = vpop.f32.mrb[0].mxu0
        %v2880 = vadd.f32 0.0, %v2879
        %v2881 = vpop.f32.mrb[0].mxu0
        %2882 = vmatprep.mubr.f32.mxu0 0.0
        %2883 = vmatmul.mubr.f32.gmra.mrb[0].mxu0 %v2507
        %v2884 = vpop.f32.mrb[0].mxu0
        %v2885 = vadd.f32 0.0, %v2884
        %v2886 = vpop.f32.mrb[0].mxu0
        %2887 = vmatprep.mubr.f32.mxu0 0.0
        %2888 = vmatmul.mubr.f32.gmra.mrb[0].mxu0 %v2510
        %v2889 = vpop.f32.mrb[0].mxu0
        %v2890 = vadd.f32 0.0, %v2889
        %v2891 = vpop.f32.mrb[0].mxu0
        %2892 = vmatprep.mubr.f32.mxu0 0.0
        %2893 = vmatmul.mubr.f32.gmra.mrb[0].mxu0 %v2513
        %v2894 = vpop.f32.mrb[0].mxu0
        %v2895 = vadd.f32 0.0, %v2894
        %v2896 = vpop.f32.mrb[0].mxu0
        %2897 = vmatprep.mubr.f32.mxu0 0.0
        %2898 = vmatmul.mubr.f32.gmra.mrb[0].mxu0 %v2516
        %v2899 = vpop.f32.mrb[0].mxu0
        %v2900 = vadd.f32 0.0, %v2899
        %v2901 = vpop.f32.mrb[0].mxu0
        %2902 = vdwg.mxu0
        %v2903 = vld [vmem:[%s5] sm:$0x1]
        %v2905 = vlaneseq
        %v2906 = vshrl.u32 %v2905, 7
        %v2907 = vsub.s32 0, %v2906
        %v2908 = vrot.slane %v2903, %v2907
        %v2910 = vmul.f32 %v2585, %v2908
        %v2911 = vmul.f32 %v2590, %v2908
        %v2912 = vmul.f32 %v2595, %v2908
        %v2913 = vmul.f32 %v2600, %v2908
        %v2914 = vmul.f32 %v2605, %v2908
        %v2915 = vmul.f32 %v2610, %v2908
        %v2916 = vmul.f32 %v2615, %v2908
        %v2917 = vmul.f32 %v2620, %v2908
        %v2918 = vmul.f32 %v2625, %v2908
        %v2919 = vmul.f32 %v2630, %v2908
        %v2920 = vmul.f32 %v2635, %v2908
        %v2921 = vmul.f32 %v2640, %v2908
        %v2922 = vmul.f32 %v2645, %v2908
        %v2923 = vmul.f32 %v2650, %v2908
        %v2924 = vmul.f32 %v2655, %v2908
        %v2925 = vmul.f32 %v2660, %v2908
        %v2926 = vmul.f32 %v2665, %v2908
        %v2927 = vmul.f32 %v2670, %v2908
        %v2928 = vmul.f32 %v2675, %v2908
        %v2929 = vmul.f32 %v2680, %v2908
        %v2930 = vmul.f32 %v2685, %v2908
        %v2931 = vmul.f32 %v2690, %v2908
        %v2932 = vmul.f32 %v2695, %v2908
        %v2933 = vmul.f32 %v2700, %v2908
        %v2934 = vmul.f32 %v2705, %v2908
        %v2935 = vmul.f32 %v2710, %v2908
        %v2936 = vmul.f32 %v2715, %v2908
        %v2937 = vmul.f32 %v2720, %v2908
        %v2938 = vmul.f32 %v2725, %v2908
        %v2939 = vmul.f32 %v2730, %v2908
        %v2940 = vmul.f32 %v2735, %v2908
        %v2941 = vmul.f32 %v2740, %v2908
        %v2942 = vmul.f32 %v2745, %v2908
        %v2943 = vmul.f32 %v2750, %v2908
        %v2944 = vmul.f32 %v2755, %v2908
        %v2945 = vmul.f32 %v2760, %v2908
        %v2946 = vmul.f32 %v2765, %v2908
        %v2947 = vmul.f32 %v2770, %v2908
        %v2948 = vmul.f32 %v2775, %v2908
        %v2949 = vmul.f32 %v2780, %v2908
        %v2950 = vmul.f32 %v2785, %v2908
        %v2951 = vmul.f32 %v2790, %v2908
        %v2952 = vmul.f32 %v2795, %v2908
        %v2953 = vmul.f32 %v2800, %v2908
        %v2954 = vmul.f32 %v2805, %v2908
        %v2955 = vmul.f32 %v2810, %v2908
        %v2956 = vmul.f32 %v2815, %v2908
        %v2957 = vmul.f32 %v2820, %v2908
        %v2958 = vmul.f32 %v2825, %v2908
        %v2959 = vmul.f32 %v2830, %v2908
        %v2960 = vmul.f32 %v2835, %v2908
        %v2961 = vmul.f32 %v2840, %v2908
        %v2962 = vmul.f32 %v2845, %v2908
        %v2963 = vmul.f32 %v2850, %v2908
        %v2964 = vmul.f32 %v2855, %v2908
        %v2965 = vmul.f32 %v2860, %v2908
        %v2966 = vmul.f32 %v2865, %v2908
        %v2967 = vmul.f32 %v2870, %v2908
        %v2968 = vmul.f32 %v2875, %v2908
        %v2969 = vmul.f32 %v2880, %v2908
        %v2970 = vmul.f32 %v2885, %v2908
        %v2971 = vmul.f32 %v2890, %v2908
        %v2972 = vmul.f32 %v2895, %v2908
        %v2973 = vmul.f32 %v2900, %v2908
        %v2974 = vld [vmem:[%s6] sm:$0x1]
        %v2976 = vlaneseq
        %v2977 = vshrl.u32 %v2976, 7
        %v2978 = vsub.s32 0, %v2977
        %v2979 = vrot.slane %v2974, %v2978
        %v2981 = vadd.f32 %v2910, %v2979
        %v2982 = vadd.f32 %v2911, %v2979
        %v2983 = vadd.f32 %v2912, %v2979
        %v2984 = vadd.f32 %v2913, %v2979
        %v2985 = vadd.f32 %v2914, %v2979
        %v2986 = vadd.f32 %v2915, %v2979
        %v2987 = vadd.f32 %v2916, %v2979
        %v2988 = vadd.f32 %v2917, %v2979
        %v2989 = vadd.f32 %v2918, %v2979
        %v2990 = vadd.f32 %v2919, %v2979
        %v2991 = vadd.f32 %v2920, %v2979
        %v2992 = vadd.f32 %v2921, %v2979
        %v2993 = vadd.f32 %v2922, %v2979
        %v2994 = vadd.f32 %v2923, %v2979
        %v2995 = vadd.f32 %v2924, %v2979
        %v2996 = vadd.f32 %v2925, %v2979
        %v2997 = vadd.f32 %v2926, %v2979
        %v2998 = vadd.f32 %v2927, %v2979
        %v2999 = vadd.f32 %v2928, %v2979
        %v3000 = vadd.f32 %v2929, %v2979
        %v3001 = vadd.f32 %v2930, %v2979
        %v3002 = vadd.f32 %v2931, %v2979
        %v3003 = vadd.f32 %v2932, %v2979
        %v3004 = vadd.f32 %v2933, %v2979
        %v3005 = vadd.f32 %v2934, %v2979
        %v3006 = vadd.f32 %v2935, %v2979
        %v3007 = vadd.f32 %v2936, %v2979
        %v3008 = vadd.f32 %v2937, %v2979
        %v3009 = vadd.f32 %v2938, %v2979
        %v3010 = vadd.f32 %v2939, %v2979
        %v3011 = vadd.f32 %v2940, %v2979
        %v3012 = vadd.f32 %v2941, %v2979
        %v3013 = vadd.f32 %v2942, %v2979
        %v3014 = vadd.f32 %v2943, %v2979
        %v3015 = vadd.f32 %v2944, %v2979
        %v3016 = vadd.f32 %v2945, %v2979
        %v3017 = vadd.f32 %v2946, %v2979
        %v3018 = vadd.f32 %v2947, %v2979
        %v3019 = vadd.f32 %v2948, %v2979
        %v3020 = vadd.f32 %v2949, %v2979
        %v3021 = vadd.f32 %v2950, %v2979
        %v3022 = vadd.f32 %v2951, %v2979
        %v3023 = vadd.f32 %v2952, %v2979
        %v3024 = vadd.f32 %v2953, %v2979
        %v3025 = vadd.f32 %v2954, %v2979
        %v3026 = vadd.f32 %v2955, %v2979
        %v3027 = vadd.f32 %v2956, %v2979
        %v3028 = vadd.f32 %v2957, %v2979
        %v3029 = vadd.f32 %v2958, %v2979
        %v3030 = vadd.f32 %v2959, %v2979
        %v3031 = vadd.f32 %v2960, %v2979
        %v3032 = vadd.f32 %v2961, %v2979
        %v3033 = vadd.f32 %v2962, %v2979
        %v3034 = vadd.f32 %v2963, %v2979
        %v3035 = vadd.f32 %v2964, %v2979
        %v3036 = vadd.f32 %v2965, %v2979
        %v3037 = vadd.f32 %v2966, %v2979
        %v3038 = vadd.f32 %v2967, %v2979
        %v3039 = vadd.f32 %v2968, %v2979
        %v3040 = vadd.f32 %v2969, %v2979
        %v3041 = vadd.f32 %v2970, %v2979
        %v3042 = vadd.f32 %v2971, %v2979
        %v3043 = vadd.f32 %v2972, %v2979
        %v3044 = vadd.f32 %v2973, %v2979
        %vm3045 = vcmask 523264
        %3046 = vst.msk [vmem:[%s274] sm:$0xff] %vm3045, %v2981
        %3047 = vst.msk [vmem:[%s274 + $0x8] sm:$0xff] %vm3045, %v2982
        %3048 = vst.msk [vmem:[%s274 + $0x10] sm:$0xff] %vm3045, %v2983
        %3049 = vst.msk [vmem:[%s274 + $0x18] sm:$0xff] %vm3045, %v2984
        %3050 = vst.msk [vmem:[%s274 + $0x20] sm:$0xff] %vm3045, %v2985
        %3051 = vst.msk [vmem:[%s274 + $0x28] sm:$0xff] %vm3045, %v2986
        %3052 = vst.msk [vmem:[%s274 + $0x30] sm:$0xff] %vm3045, %v2987
        %3053 = vst.msk [vmem:[%s274 + $0x38] sm:$0xff] %vm3045, %v2988
        %3054 = vst.msk [vmem:[%s274 + $0x40] sm:$0xff] %vm3045, %v2989
        %3055 = vst.msk [vmem:[%s274 + $0x48] sm:$0xff] %vm3045, %v2990
        %3056 = vst.msk [vmem:[%s274 + $0x50] sm:$0xff] %vm3045, %v2991
        %3057 = vst.msk [vmem:[%s274 + $0x58] sm:$0xff] %vm3045, %v2992
        %3058 = vst.msk [vmem:[%s274 + $0x60] sm:$0xff] %vm3045, %v2993
        %3059 = vst.msk [vmem:[%s274 + $0x68] sm:$0xff] %vm3045, %v2994
        %3060 = vst.msk [vmem:[%s274 + $0x70] sm:$0xff] %vm3045, %v2995
        %3061 = vst.msk [vmem:[%s274 + $0x78] sm:$0xff] %vm3045, %v2996
        %3062 = vst.msk [vmem:[%s274 + $0x80] sm:$0xff] %vm3045, %v2997
        %3063 = vst.msk [vmem:[%s274 + $0x88] sm:$0xff] %vm3045, %v2998
        %3064 = vst.msk [vmem:[%s274 + $0x90] sm:$0xff] %vm3045, %v2999
        %3065 = vst.msk [vmem:[%s274 + $0x98] sm:$0xff] %vm3045, %v3000
        %3066 = vst.msk [vmem:[%s274 + $0xa0] sm:$0xff] %vm3045, %v3001
        %3067 = vst.msk [vmem:[%s274 + $0xa8] sm:$0xff] %vm3045, %v3002
        %3068 = vst.msk [vmem:[%s274 + $0xb0] sm:$0xff] %vm3045, %v3003
        %3069 = vst.msk [vmem:[%s274 + $0xb8] sm:$0xff] %vm3045, %v3004
        %3070 = vst.msk [vmem:[%s274 + $0xc0] sm:$0xff] %vm3045, %v3005
        %3071 = vst.msk [vmem:[%s274 + $0xc8] sm:$0xff] %vm3045, %v3006
        %3072 = vst.msk [vmem:[%s274 + $0xd0] sm:$0xff] %vm3045, %v3007
        %3073 = vst.msk [vmem:[%s274 + $0xd8] sm:$0xff] %vm3045, %v3008
        %3074 = vst.msk [vmem:[%s274 + $0xe0] sm:$0xff] %vm3045, %v3009
        %3075 = vst.msk [vmem:[%s274 + $0xe8] sm:$0xff] %vm3045, %v3010
        %3076 = vst.msk [vmem:[%s274 + $0xf0] sm:$0xff] %vm3045, %v3011
        %3077 = vst.msk [vmem:[%s274 + $0xf8] sm:$0xff] %vm3045, %v3012
        %3078 = vst.msk [vmem:[%s274 + $0x100] sm:$0xff] %vm3045, %v3013
        %3079 = vst.msk [vmem:[%s274 + $0x108] sm:$0xff] %vm3045, %v3014
        %3080 = vst.msk [vmem:[%s274 + $0x110] sm:$0xff] %vm3045, %v3015
        %3081 = vst.msk [vmem:[%s274 + $0x118] sm:$0xff] %vm3045, %v3016
        %3082 = vst.msk [vmem:[%s274 + $0x120] sm:$0xff] %vm3045, %v3017
        %3083 = vst.msk [vmem:[%s274 + $0x128] sm:$0xff] %vm3045, %v3018
        %3084 = vst.msk [vmem:[%s274 + $0x130] sm:$0xff] %vm3045, %v3019
        %3085 = vst.msk [vmem:[%s274 + $0x138] sm:$0xff] %vm3045, %v3020
        %3086 = vst.msk [vmem:[%s274 + $0x140] sm:$0xff] %vm3045, %v3021
        %3087 = vst.msk [vmem:[%s274 + $0x148] sm:$0xff] %vm3045, %v3022
        %3088 = vst.msk [vmem:[%s274 + $0x150] sm:$0xff] %vm3045, %v3023
        %3089 = vst.msk [vmem:[%s274 + $0x158] sm:$0xff] %vm3045, %v3024
        %3090 = vst.msk [vmem:[%s274 + $0x160] sm:$0xff] %vm3045, %v3025
        %3091 = vst.msk [vmem:[%s274 + $0x168] sm:$0xff] %vm3045, %v3026
        %3092 = vst.msk [vmem:[%s274 + $0x170] sm:$0xff] %vm3045, %v3027
        %3093 = vst.msk [vmem:[%s274 + $0x178] sm:$0xff] %vm3045, %v3028
        %3094 = vst.msk [vmem:[%s274 + $0x180] sm:$0xff] %vm3045, %v3029
        %3095 = vst.msk [vmem:[%s274 + $0x188] sm:$0xff] %vm3045, %v3030
        %3096 = vst.msk [vmem:[%s274 + $0x190] sm:$0xff] %vm3045, %v3031
        %3097 = vst.msk [vmem:[%s274 + $0x198] sm:$0xff] %vm3045, %v3032
        %3098 = vst.msk [vmem:[%s274 + $0x1a0] sm:$0xff] %vm3045, %v3033
        %3099 = vst.msk [vmem:[%s274 + $0x1a8] sm:$0xff] %vm3045, %v3034
        %3100 = vst.msk [vmem:[%s274 + $0x1b0] sm:$0xff] %vm3045, %v3035
        %3101 = vst.msk [vmem:[%s274 + $0x1b8] sm:$0xff] %vm3045, %v3036
        %3102 = vst.msk [vmem:[%s274 + $0x1c0] sm:$0xff] %vm3045, %v3037
        %3103 = vst.msk [vmem:[%s274 + $0x1c8] sm:$0xff] %vm3045, %v3038
        %3104 = vst.msk [vmem:[%s274 + $0x1d0] sm:$0xff] %vm3045, %v3039
        %3105 = vst.msk [vmem:[%s274 + $0x1d8] sm:$0xff] %vm3045, %v3040
        %3106 = vst.msk [vmem:[%s274 + $0x1e0] sm:$0xff] %vm3045, %v3041
        %3107 = vst.msk [vmem:[%s274 + $0x1e8] sm:$0xff] %vm3045, %v3042
        %3108 = vst.msk [vmem:[%s274 + $0x1f0] sm:$0xff] %vm3045, %v3043
        %3109 = vst.msk [vmem:[%s274 + $0x1f8] sm:$0xff] %vm3045, %v3044
        %s3110 = sand.u32 %s181, 1
        %s3111 = scalar_lea.sflag [#allocation3], %s3110
        %s3112 = sand.u32 %s181, 1
        %s3113 = smul.addr %s3112, 512
        %s3114 = scalar_lea.vmem [#allocation2], %s3113
        // Predicated region
        $region49: #{tpu_custom_call.1} parent=47 // pred_check
          %p3115 = pneg %p191
        $region50: #{tpu_custom_call.1} parent=47 // pred_check_branch
          %3117 = sbr.rel (%p3115) target = $region52
        $region51: #{tpu_custom_call.1} parent=47 // pred_region
          %s3118 = smul.u32 2, %s21
          %s3120 = ssub.s32 8192, 8192
          %3121 = vsyncadd %s3111, %s3120
          %s3122 = smul.addr %s3118, 32
          %s3123 = smul.addr %s3122, 128
          %s3124 = scalar_lea.hbm %s7, %s3123
          %s3125 = sshll.u32 %s3114, 4
          %s3126 = int_to_ptr.vmem [resolvable:$true] %s3125
          %3131 = dma.vmem_to_hbm [thread:$0]  %s3126, 8192, %s3124, %s3111, 128, 128, 8
        $region52: #{tpu_custom_call.1} parent=47 // pred_fallthru
          _
      $region48: #{tpu_custom_call.1} parent=5 // pred_fallthru
        _
      %p3132 = scmp.le.s32.totalorder 2, %s16
      // Predicated region
      $region53: #{tpu_custom_call.1} parent=5 // pred_check
        %p3133 = pneg %p3132
      $region54: #{tpu_custom_call.1} parent=5 // pred_check_branch
        %3135 = sbr.rel (%p3133) target = $region56
      $region55: #{tpu_custom_call.1} parent=5 // pred_region
        %s3136 = ssub.s32 %s16, 2
        // Predicated region
        $region57: #{tpu_custom_call.1} parent=55 // pred_check
          %p3137 = pneg %p197
        $region58: #{tpu_custom_call.1} parent=55 // pred_check_branch
          %3139 = sbr.rel (%p3137) target = $region60
        $region59: #{tpu_custom_call.1} parent=55 // pred_region
          %s3140 = sand.u32 %s182, 1
          %s3141 = scalar_lea.sflag [#allocation3], %s3140
          %s3142 = sand.u32 %s182, 1
          %s3143 = smul.addr %s3142, 512
          %s3144 = scalar_lea.vmem [#allocation2], %s3143
          %3145 = dma.done %s3141, 8192
        $region60: #{tpu_custom_call.1} parent=55 // pred_fallthru
          _
      $region56: #{tpu_custom_call.1} parent=5 // pred_fallthru
        _
    $region6: #{tpu_custom_call.1} parent=1 // loop_footer
      %s20 = sadd.s32 1, %s16
    $region7: #{tpu_custom_call.1} parent=1 // loop_footer_branch
      %15 = sbr.rel target = $region3
    $region8: #{tpu_custom_call.1} parent=1 // loop_exit
      _
    %3146 = vsyncpa [#allocation3], 1
    %s3147 = scalar_lea.sflag [#allocation3], 1
    %3148 = vsyncpa %s3147, 1

</llo_original>
